<compile_context>
chip_gen: v7x
topology: tpu7x:2x2x1
jax: 0.10.0
libtpu: 0.0.40
codegen_flags: <defaults>
</compile_context>

<pallas_src>
import math

import jax
import jax.numpy as jnp
import numpy as np
from jax.experimental import pallas as pl
from jax.experimental.pallas import tpu as pltpu

NHEAD = 4
FFN = 512
LN_EPS = 1e-5
NEG_INF = -1e30


# ---------------- pure-JAX reference (independent implementation) -------------

def _layer_norm(x, w, b):
    mu = jnp.mean(x, axis=-1, keepdims=True)
    var = jnp.mean((x - mu) ** 2, axis=-1, keepdims=True)
    return (x - mu) * jax.lax.rsqrt(var + LN_EPS) * w + b


def _mha(x_q, x_kv, w_qkv, b_qkv, w_o, b_o):
    """Reference multi-head attention (per-head loop, exact softmax)."""
    d = x_q.shape[-1]
    hd = d // NHEAD
    q = x_q @ w_qkv[:, 0 * d:1 * d] + b_qkv[:, 0 * d:1 * d]
    k = x_kv @ w_qkv[:, 1 * d:2 * d] + b_qkv[:, 1 * d:2 * d]
    v = x_kv @ w_qkv[:, 2 * d:3 * d] + b_qkv[:, 2 * d:3 * d]
    scale = 1.0 / math.sqrt(hd)
    acc = jnp.zeros((x_q.shape[0], w_o.shape[1]), jnp.float32)
    for h in range(NHEAD):
        lo, hi = h * hd, (h + 1) * hd
        s = jnp.dot(q[:, lo:hi] * scale, k[:, lo:hi].T,
                    preferred_element_type=jnp.float32)
        s = s - jnp.max(s, axis=-1, keepdims=True)
        e = jnp.exp(s)
        p = e / jnp.sum(e, axis=-1, keepdims=True)
        oh = jnp.dot(p, v[:, lo:hi], preferred_element_type=jnp.float32)
        acc = acc + jnp.dot(oh, w_o[lo:hi, :], preferred_element_type=jnp.float32)
    return acc + b_o


def _forward_one(src, tgt, pe_s, pe_t, p):
    """Reference forward for a single batch element (dropout = identity)."""
    in_sz = src.shape[-1]
    out_sz = tgt.shape[-1]
    # PyTorch scales by sqrt of the ORIGINAL last dim (src/tgt size is read
    # before the reassignment completes).
    x = (src @ p['w_ee'] + p['b_ee']) * math.sqrt(float(in_sz)) + pe_s
    y = (tgt @ p['w_de'] + p['b_de']) * math.sqrt(float(out_sz)) + pe_t

    sa = _mha(x, x, p['e_qkv_w'], p['e_qkv_b'], p['e_ow'], p['e_ob'])
    x = _layer_norm(x + sa, p['e_n1w'], p['e_n1b'])
    ff = jnp.maximum(x @ p['e_f1w'] + p['e_f1b'], 0.0) @ p['e_f2w'] + p['e_f2b']
    x = _layer_norm(x + ff, p['e_n2w'], p['e_n2b'])
    mem = _layer_norm(x, p['e_fnw'], p['e_fnb'])

    sa = _mha(y, y, p['d_qkv_w'], p['d_qkv_b'], p['d_sow'], p['d_sob'])
    y = _layer_norm(y + sa, p['d_n1w'], p['d_n1b'])
    ca = _mha(y, mem, p['c_qkv_w'], p['c_qkv_b'], p['c_ow'], p['c_ob'])
    y = _layer_norm(y + ca, p['d_n2w'], p['d_n2b'])
    ff = jnp.maximum(y @ p['d_f1w'] + p['d_f1b'], 0.0) @ p['d_f2w'] + p['d_f2b']
    y = _layer_norm(y + ff, p['d_n3w'], p['d_n3b'])
    y = _layer_norm(y, p['d_fnw'], p['d_fnb'])

    return y @ p['w_fc'] + p['b_fc']


# --------------------------- parameter packing ---------------------------------

def _round_up(x, m):
    return (x + m - 1) // m * m


def pack_params(params):
    """Pack the 44 parameter tensors into 3 lane/sublane-aligned slabs.

    w_h : (H, Wcols)  weights contracted against a hidden-dim activation,
          concatenated along columns, each segment padded to a multiple of 128
          so every in-kernel slice starts on a lane-tile boundary.
    w_in: (Rrows, H)  weights whose output dim is H, concatenated along rows,
          each segment padded to a multiple of 8 sublanes.
    vecs: (n_vec, FFN) every bias / LayerNorm vector, one per row.
    """
    H = params['e_ow'].shape[0]
    flat = dict(params)

    # split fused qkv projections so each logical weight is its own segment
    for pre, src_w, src_b in (('e', 'e_qkv_w', 'e_qkv_b'),
                              ('d', 'd_qkv_w', 'd_qkv_b'),
                              ('c', 'c_qkv_w', 'c_qkv_b')):
        w = flat.pop(src_w)
        b = flat.pop(src_b)
        for j, s in enumerate('qkv'):
            flat[f'{pre}_{s}w'] = w[:, j * H:(j + 1) * H]
            flat[f'{pre}_{s}b'] = b[:, j * H:(j + 1) * H]
    flat['d_ow'] = flat.pop('d_sow')
    flat['d_ob'] = flat.pop('d_sob')

    wh_names = ['e_qw', 'e_kw', 'e_vw', 'e_ow', 'e_f1w',
                'd_qw', 'd_kw', 'd_vw', 'd_ow', 'd_f1w',
                'c_qw', 'c_kw', 'c_vw', 'c_ow', 'w_fc']
    wh_layout, segs, off = {}, [], 0
    for n in wh_names:
        w = flat[n]
        c = w.shape[1]
        cp = _round_up(c, 128)
        wh_layout[n] = (off, c)
        segs.append(jnp.pad(w, ((0, 0), (0, cp - c))))
        off += cp
    w_h = jnp.concatenate(segs, axis=1)

    win_names = ['w_ee', 'w_de', 'e_f2w', 'd_f2w']
    win_layout, segs, off = {}, [], 0
    for n in win_names:
        w = flat[n]
        r = w.shape[0]
        rp = _round_up(r, 8)
        win_layout[n] = (off, r)
        segs.append(jnp.pad(w, ((0, rp - r), (0, 0))))
        off += rp
    w_in = jnp.concatenate(segs, axis=0)

    vec_names = ['b_ee', 'b_de',
                 'e_qb', 'e_kb', 'e_vb', 'e_ob', 'e_f1b', 'e_f2b',
                 'e_n1w', 'e_n1b', 'e_n2w', 'e_n2b', 'e_fnw', 'e_fnb',
                 'd_qb', 'd_kb', 'd_vb', 'd_ob', 'd_f1b', 'd_f2b',
                 'd_n1w', 'd_n1b', 'd_n2w', 'd_n2b', 'd_n3w', 'd_n3b',
                 'd_fnw', 'd_fnb',
                 'c_qb', 'c_kb', 'c_vb', 'c_ob',
                 'b_fc']
    vec_layout, rows = {}, []
    for i, n in enumerate(vec_names):
        v = flat[n].reshape(1, -1)
        vec_layout[n] = (i, v.shape[1])
        rows.append(jnp.pad(v, ((0, 0), (0, FFN - v.shape[1]))))
    vecs = jnp.concatenate(rows, axis=0)

    return (w_h, w_in, vecs), (wh_layout, win_layout, vec_layout)


# ------------------------------- Pallas kernel --------------------------------

def _build_kernel(B, S, T, in_size, out_size, H, layouts):
    wh_l, win_l, vec_l = layouts
    head_dim = H // NHEAD
    scale = 1.0 / math.sqrt(head_dim)
    sqrt_in = math.sqrt(float(in_size))
    sqrt_out = math.sqrt(float(out_size))

    def kernel(src_ref, tgt_ref, pes_ref, pet_ref, hmask_ref,
               menc_ref, mdec_ref, mcross_ref,
               wh_ref, win_ref, vec_ref, out_ref):

        def wh(name):                       # (H, cols) weight slice, 128-aligned
            off, c = wh_l[name]
            return wh_ref[:, off:off + c]

        def win(name):                      # (rows, H) weight slice, 8-aligned
            off, r = win_l[name]
            return win_ref[off:off + r, :]

        def vec(name):                      # (1, c) bias / LN vector
            i, c = vec_l[name]
            return vec_ref[i:i + 1, 0:c]

        def layer_norm(x, wn, bn):
            mu = jnp.mean(x, axis=-1, keepdims=True)
            var = jnp.mean(jnp.square(x - mu), axis=-1, keepdims=True)
            return (x - mu) * jax.lax.rsqrt(var + LN_EPS) * vec(wn) + vec(bn)

        # head-column mask (NHEAD, 1, H): 1.0 on head h's columns, else 0.0
        hmask = hmask_ref[...]
        hmask_scaled = hmask * scale

        def mha(xq, xkv, prefix, batch_mask):
            # xq: (Mq, H) batch-flattened queries, xkv: (Mk, H).
            # Heads are a leading einsum batch dim built by column-masking the
            # projected q / v, so every contraction stays full H-wide on the
            # MXU (no per-head slices, no relayouts).  The additive
            # block-diagonal `batch_mask` keeps rows from attending across
            # batch examples.
            Mk = xkv.shape[0]
            q = jnp.dot(xq, wh(prefix + '_qw'),
                        preferred_element_type=jnp.float32) + vec(prefix + '_qb')
            k = jnp.dot(xkv, wh(prefix + '_kw'),
                        preferred_element_type=jnp.float32) + vec(prefix + '_kb')
            v = jnp.dot(xkv, wh(prefix + '_vw'),
                        preferred_element_type=jnp.float32) + vec(prefix + '_vb')

            q_h = q[None, :, :] * hmask_scaled                      # (NH, Mq, H)
            k_h = jnp.broadcast_to(k[None, :, :], (NHEAD, Mk, H))   # (NH, Mk, H)
            s = jnp.einsum('hqd,hkd->hqk', q_h, k_h,
                           preferred_element_type=jnp.float32)      # (NH, Mq, Mk)
            s = s + batch_mask                                      # block-diag mask

            s = s - jnp.max(s, axis=-1, keepdims=True)
            e = jnp.exp(s)
            p = e * pl.reciprocal(jnp.sum(e, axis=-1, keepdims=True), approx=True)

            v_h = v[None, :, :] * hmask                             # (NH, Mk, H)
            o = jnp.einsum('hqk,hkd->hqd', p, v_h,
                           preferred_element_type=jnp.float32)      # (NH, Mq, H)
            o = jnp.sum(o, axis=0)                                  # (Mq, H) = concat heads
            return jnp.dot(o, wh(prefix + '_ow'),
                           preferred_element_type=jnp.float32) + vec(prefix + '_ob')

        # ---- embeddings + positional encoding (dropout == identity, eval) ----
        x = (jnp.dot(src_ref[...], win('w_ee'),
                     preferred_element_type=jnp.float32) + vec('b_ee')) * sqrt_in
        x = x + pes_ref[...]                                        # (B*S, H)
        y = (jnp.dot(tgt_ref[...], win('w_de'),
                     preferred_element_type=jnp.float32) + vec('b_de')) * sqrt_out
        y = y + pet_ref[...]                                        # (B*T, H)

        # ---- encoder layer (post-norm) + encoder final LayerNorm ----
        x = layer_norm(x + mha(x, x, 'e', menc_ref[...]), 'e_n1w', 'e_n1b')
        h = jnp.maximum(jnp.dot(x, wh('e_f1w'),
                                preferred_element_type=jnp.float32)
                        + vec('e_f1b'), 0.0)
        ff = jnp.dot(h, win('e_f2w'),
                     preferred_element_type=jnp.float32) + vec('e_f2b')
        x = layer_norm(x + ff, 'e_n2w', 'e_n2b')
        mem = layer_norm(x, 'e_fnw', 'e_fnb')

        # ---- decoder layer (post-norm) + decoder final LayerNorm ----
        # NOTE: the reference module never passes tgt_mask to nn.Transformer,
        # so decoder self-attention is intentionally NOT causal.
        y = layer_norm(y + mha(y, y, 'd', mdec_ref[...]), 'd_n1w', 'd_n1b')
        y = layer_norm(y + mha(y, mem, 'c', mcross_ref[...]), 'd_n2w', 'd_n2b')
        h = jnp.maximum(jnp.dot(y, wh('d_f1w'),
                                preferred_element_type=jnp.float32)
                        + vec('d_f1b'), 0.0)
        ff = jnp.dot(h, win('d_f2w'),
                     preferred_element_type=jnp.float32) + vec('d_f2b')
        y = layer_norm(y + ff, 'd_n3w', 'd_n3b')
        y = layer_norm(y, 'd_fnw', 'd_fnb')

        out = jnp.dot(y, wh('w_fc'),
                      preferred_element_type=jnp.float32) + vec('b_fc')
        out_ref[...] = out.astype(out_ref.dtype)

    return kernel


def _block_diag_mask(batch, n_q, n_k):
    qb = np.repeat(np.arange(batch), n_q)[:, None]
    kb = np.repeat(np.arange(batch), n_k)[None, :]
    return np.where(qb == kb, 0.0, NEG_INF).astype(np.float32)


def _head_mask(hidden):
    hd = hidden // NHEAD
    m = np.zeros((NHEAD, 1, hidden), np.float32)
    for h in range(NHEAD):
        m[h, 0, h * hd:(h + 1) * hd] = 1.0
    return m


def transformer_forward(src, tgt_hist, pe, packed, layouts):
    B, S, in_size = src.shape
    _, T, out_size = tgt_hist.shape
    w_h, w_in, vecs = packed
    H = w_h.shape[0]

    # batch-flattened, lane-contiguous views (metadata reshapes in XLA)
    src2 = src.reshape(B * S, in_size)
    tgt2 = tgt_hist.reshape(B * T, out_size)
    pe_s = jnp.tile(pe[:S], (B, 1))                       # (B*S, H)
    pe_t = jnp.tile(pe[:T], (B, 1))                       # (B*T, H)

    hmask = jnp.asarray(_head_mask(H))
    m_enc = jnp.asarray(_block_diag_mask(B, S, S))
    m_dec = jnp.asarray(_block_diag_mask(B, T, T))
    m_cross = jnp.asarray(_block_diag_mask(B, T, S))

    kernel = _build_kernel(B, S, T, in_size, out_size, H, layouts)
    vmem = pl.BlockSpec(memory_space=pltpu.MemorySpace.VMEM)

    out2 = pl.pallas_call(
        kernel,
        out_shape=jax.ShapeDtypeStruct((B * T, out_size), jnp.float32),
        in_specs=[vmem] * 11,
        out_specs=vmem,
    )(src2, tgt2, pe_s, pe_t, hmask, m_enc, m_dec, m_cross, w_h, w_in, vecs)

    return out2.reshape(B, T, out_size)


# --------------------------- parameter construction ---------------------------

def make_positional_encoding(d_model, max_len=64):
    position = np.arange(max_len, dtype=np.float32)[:, None]
    div_term = np.exp(np.arange(0, d_model, 2, dtype=np.float32)
                      * (-math.log(10000.0) / d_model))
    pe = np.zeros((max_len, d_model), np.float32)
    pe[:, 0::2] = np.sin(position * div_term)
    pe[:, 1::2] = np.cos(position * div_term)
    return jnp.asarray(pe)


def init_params(key, input_size, output_size, hidden):
    keys = iter(jax.random.split(key, 64))

    def w(shape, scale=0.1):
        return jax.random.normal(next(keys), shape, jnp.float32) * scale

    def zeros(shape):
        return jnp.zeros(shape, jnp.float32)

    def ones(shape):
        return jnp.ones(shape, jnp.float32)

    H = hidden
    p = {
        'w_ee': w((input_size, H)),  'b_ee': w((1, H), 0.02),
        'w_de': w((output_size, H)), 'b_de': w((1, H), 0.02),

        'e_qkv_w': w((H, 3 * H)), 'e_qkv_b': w((1, 3 * H), 0.02),
        'e_ow': w((H, H)),        'e_ob': w((1, H), 0.02),
        'e_f1w': w((H, FFN)),     'e_f1b': w((1, FFN), 0.02),
        'e_f2w': w((FFN, H)),     'e_f2b': w((1, H), 0.02),
        'e_n1w': ones((1, H)), 'e_n1b': zeros((1, H)),
        'e_n2w': ones((1, H)), 'e_n2b': zeros((1, H)),
        'e_fnw': ones((1, H)), 'e_fnb': zeros((1, H)),

        'd_qkv_w': w((H, 3 * H)), 'd_qkv_b': w((1, 3 * H), 0.02),
        'd_sow': w((H, H)),       'd_sob': w((1, H), 0.02),
        'c_qkv_w': w((H, 3 * H)), 'c_qkv_b': w((1, 3 * H), 0.02),
        'c_ow': w((H, H)),        'c_ob': w((1, H), 0.02),
        'd_f1w': w((H, FFN)),     'd_f1b': w((1, FFN), 0.02),
        'd_f2w': w((FFN, H)),     'd_f2b': w((1, H), 0.02),
        'd_n1w': ones((1, H)), 'd_n1b': zeros((1, H)),
        'd_n2w': ones((1, H)), 'd_n2b': zeros((1, H)),
        'd_n3w': ones((1, H)), 'd_n3b': zeros((1, H)),
        'd_fnw': ones((1, H)), 'd_fnb': zeros((1, H)),

        'w_fc': w((H, output_size)), 'b_fc': w((1, output_size), 0.02),
    }
    return p


# ------------------------------------ main -------------------------------------

if __name__ == "__main__":
    B, S, T = 2, 10, 8
    INPUT_SIZE, OUTPUT_SIZE, HIDDEN_SIZE = 6, 4, 32

    key = jax.random.PRNGKey(0)
    k_src, k_tgt, k_param = jax.random.split(key, 3)
    src = jax.random.normal(k_src, (B, S, INPUT_SIZE), jnp.float32)
    tgt_hist = jax.random.normal(k_tgt, (B, T, OUTPUT_SIZE), jnp.float32)
    params = init_params(k_param, INPUT_SIZE, OUTPUT_SIZE, HIDDEN_SIZE)
    pe = make_positional_encoding(HIDDEN_SIZE, max_len=64)

    packed, layouts = pack_params(params)
    out = transformer_forward(src, tgt_hist, pe, packed, layouts)
    out = jax.block_until_ready(out)
    assert out.shape == (B, T, OUTPUT_SIZE)

    # independent pure-JAX reference (per-batch, per-head loop, exact softmax)
    ref = jnp.stack([_forward_one(src[b], tgt_hist[b], pe[:S], pe[:T], params)
                     for b in range(B)])
    # tolerance is loosened vs. exact f32 because the kernel normalises the
    # softmax with the EUP approximate reciprocal (pl.reciprocal(approx=True))
    np.testing.assert_allclose(np.asarray(out), np.asarray(ref),
                               rtol=2e-2, atol=2e-2)

    print("KERNEL_OK")
</pallas_src>

<mosaic_0001>
module attributes {stable_mosaic.version = 11 : i64} {
  func.func @kernel(%arg0: memref<20x6xf32, #tpu.memory_space<vmem>>, %arg1: memref<16x4xf32, #tpu.memory_space<vmem>>, %arg2: memref<20x32xf32, #tpu.memory_space<vmem>>, %arg3: memref<16x32xf32, #tpu.memory_space<vmem>>, %arg4: memref<4x1x32xf32, #tpu.memory_space<vmem>>, %arg5: memref<20x20xf32, #tpu.memory_space<vmem>>, %arg6: memref<16x16xf32, #tpu.memory_space<vmem>>, %arg7: memref<16x20xf32, #tpu.memory_space<vmem>>, %arg8: memref<32x2688xf32, #tpu.memory_space<vmem>>, %arg9: memref<1040x32xf32, #tpu.memory_space<vmem>>, %arg10: memref<33x512xf32, #tpu.memory_space<vmem>>, %arg11: memref<16x4xf32, #tpu.memory_space<vmem>>) attributes {dimension_semantics = [], scalar_prefetch = 0 : i64, scratch_operands = 0 : i64, tpu.core_type = #tpu.core_type<tc>} {
    %c0 = arith.constant 0 : index
    %c0_0 = arith.constant 0 : index
    %c0_1 = arith.constant 0 : index
    %0 = vector.load %arg4[%c0, %c0_0, %c0_1] : memref<4x1x32xf32, #tpu.memory_space<vmem>>, vector<4x1x32xf32>
    %cst = arith.constant 0.353553385 : f32
    %1 = vector.broadcast %cst : f32 to vector<4x1x32xf32>
    %2 = arith.mulf %0, %1 : vector<4x1x32xf32>
    %c0_2 = arith.constant 0 : index
    %c0_3 = arith.constant 0 : index
    %3 = vector.load %arg0[%c0_2, %c0_3] : memref<20x6xf32, #tpu.memory_space<vmem>>, vector<20x6xf32>
    %c0_4 = arith.constant 0 : index
    %c0_5 = arith.constant 0 : index
    %4 = vector.load %arg9[%c0_4, %c0_5] : memref<1040x32xf32, #tpu.memory_space<vmem>>, vector<6x32xf32>
    %cst_6 = arith.constant dense<0.000000e+00> : vector<20x32xf32>
    %5 = tpu.matmul %3, %4, %cst_6 {dimension_numbers = #tpu.dot_dimension_numbers<[1], [0], [0], [1], [0, 0, 1, 1], [], []>} : vector<20x6xf32>, vector<6x32xf32>, vector<20x32xf32> -> vector<20x32xf32>
    %c0_7 = arith.constant 0 : index
    %c0_8 = arith.constant 0 : index
    %6 = vector.load %arg10[%c0_7, %c0_8] : memref<33x512xf32, #tpu.memory_space<vmem>>, vector<1x32xf32>
    %7 = vector.broadcast %6 : vector<1x32xf32> to vector<20x32xf32>
    %8 = arith.addf %5, %7 : vector<20x32xf32>
    %cst_9 = arith.constant 2.44948983 : f32
    %9 = vector.broadcast %cst_9 : f32 to vector<20x32xf32>
    %10 = arith.mulf %8, %9 : vector<20x32xf32>
    %c0_10 = arith.constant 0 : index
    %c0_11 = arith.constant 0 : index
    %11 = vector.load %arg2[%c0_10, %c0_11] : memref<20x32xf32, #tpu.memory_space<vmem>>, vector<20x32xf32>
    %12 = arith.addf %10, %11 : vector<20x32xf32>
    %c0_12 = arith.constant 0 : index
    %c0_13 = arith.constant 0 : index
    %13 = vector.load %arg1[%c0_12, %c0_13] : memref<16x4xf32, #tpu.memory_space<vmem>>, vector<16x4xf32>
    %c8 = arith.constant 8 : index
    %c0_14 = arith.constant 0 : index
    %14 = vector.load %arg9[%c8, %c0_14] : memref<1040x32xf32, #tpu.memory_space<vmem>>, vector<4x32xf32>
    %cst_15 = arith.constant dense<0.000000e+00> : vector<16x32xf32>
    %15 = tpu.matmul %13, %14, %cst_15 {dimension_numbers = #tpu.dot_dimension_numbers<[1], [0], [0], [1], [0, 0, 1, 1], [], []>} : vector<16x4xf32>, vector<4x32xf32>, vector<16x32xf32> -> vector<16x32xf32>
    %c1 = arith.constant 1 : index
    %c0_16 = arith.constant 0 : index
    %16 = vector.load %arg10[%c1, %c0_16] : memref<33x512xf32, #tpu.memory_space<vmem>>, vector<1x32xf32>
    %17 = vector.broadcast %16 : vector<1x32xf32> to vector<16x32xf32>
    %18 = arith.addf %15, %17 : vector<16x32xf32>
    %cst_17 = arith.constant 2.000000e+00 : f32
    %19 = vector.broadcast %cst_17 : f32 to vector<16x32xf32>
    %20 = arith.mulf %18, %19 : vector<16x32xf32>
    %c0_18 = arith.constant 0 : index
    %c0_19 = arith.constant 0 : index
    %21 = vector.load %arg3[%c0_18, %c0_19] : memref<16x32xf32, #tpu.memory_space<vmem>>, vector<16x32xf32>
    %22 = arith.addf %20, %21 : vector<16x32xf32>
    %c0_20 = arith.constant 0 : index
    %c0_21 = arith.constant 0 : index
    %23 = vector.load %arg5[%c0_20, %c0_21] : memref<20x20xf32, #tpu.memory_space<vmem>>, vector<20x20xf32>
    %c0_22 = arith.constant 0 : index
    %c0_23 = arith.constant 0 : index
    %24 = vector.load %arg8[%c0_22, %c0_23] : memref<32x2688xf32, #tpu.memory_space<vmem>>, vector<32x32xf32>
    %cst_24 = arith.constant dense<0.000000e+00> : vector<20x32xf32>
    %25 = tpu.matmul %12, %24, %cst_24 {dimension_numbers = #tpu.dot_dimension_numbers<[1], [0], [0], [1], [0, 0, 1, 1], [], []>} : vector<20x32xf32>, vector<32x32xf32>, vector<20x32xf32> -> vector<20x32xf32>
    %c2 = arith.constant 2 : index
    %c0_25 = arith.constant 0 : index
    %26 = vector.load %arg10[%c2, %c0_25] : memref<33x512xf32, #tpu.memory_space<vmem>>, vector<1x32xf32>
    %27 = vector.broadcast %26 : vector<1x32xf32> to vector<20x32xf32>
    %28 = arith.addf %25, %27 : vector<20x32xf32>
    %c0_26 = arith.constant 0 : index
    %c128 = arith.constant 128 : index
    %29 = vector.load %arg8[%c0_26, %c128] : memref<32x2688xf32, #tpu.memory_space<vmem>>, vector<32x32xf32>
    %cst_27 = arith.constant dense<0.000000e+00> : vector<20x32xf32>
    %30 = tpu.matmul %12, %29, %cst_27 {dimension_numbers = #tpu.dot_dimension_numbers<[1], [0], [0], [1], [0, 0, 1, 1], [], []>} : vector<20x32xf32>, vector<32x32xf32>, vector<20x32xf32> -> vector<20x32xf32>
    %c3 = arith.constant 3 : index
    %c0_28 = arith.constant 0 : index
    %31 = vector.load %arg10[%c3, %c0_28] : memref<33x512xf32, #tpu.memory_space<vmem>>, vector<1x32xf32>
    %32 = vector.broadcast %31 : vector<1x32xf32> to vector<20x32xf32>
    %33 = arith.addf %30, %32 : vector<20x32xf32>
    %c0_29 = arith.constant 0 : index
    %c256 = arith.constant 256 : index
    %34 = vector.load %arg8[%c0_29, %c256] : memref<32x2688xf32, #tpu.memory_space<vmem>>, vector<32x32xf32>
    %cst_30 = arith.constant dense<0.000000e+00> : vector<20x32xf32>
    %35 = tpu.matmul %12, %34, %cst_30 {dimension_numbers = #tpu.dot_dimension_numbers<[1], [0], [0], [1], [0, 0, 1, 1], [], []>} : vector<20x32xf32>, vector<32x32xf32>, vector<20x32xf32> -> vector<20x32xf32>
    %c4 = arith.constant 4 : index
    %c0_31 = arith.constant 0 : index
    %36 = vector.load %arg10[%c4, %c0_31] : memref<33x512xf32, #tpu.memory_space<vmem>>, vector<1x32xf32>
    %37 = vector.broadcast %36 : vector<1x32xf32> to vector<20x32xf32>
    %38 = arith.addf %35, %37 : vector<20x32xf32>
    %39 = vector.shape_cast %28 : vector<20x32xf32> to vector<1x20x32xf32>
    %40 = vector.broadcast %39 : vector<1x20x32xf32> to vector<4x20x32xf32>
    %41 = vector.broadcast %2 : vector<4x1x32xf32> to vector<4x20x32xf32>
    %42 = arith.mulf %40, %41 : vector<4x20x32xf32>
    %43 = vector.shape_cast %33 : vector<20x32xf32> to vector<1x20x32xf32>
    %44 = vector.shape_cast %43 : vector<1x20x32xf32> to vector<1x20x32xf32>
    %45 = vector.broadcast %44 : vector<1x20x32xf32> to vector<4x20x32xf32>
    "tpu.trace_start"() <{level = 10 : i32, message = "hqd,hkd->hqk"}> : () -> ()
    %cst_32 = arith.constant dense<0.000000e+00> : vector<4x20x20xf32>
    %46 = tpu.matmul %42, %45, %cst_32 {dimension_numbers = #tpu.dot_dimension_numbers<[2], [2], [1], [1], [0, 0, 0, 1, 1, 1], [0], [0]>} : vector<4x20x32xf32>, vector<4x20x32xf32>, vector<4x20x20xf32> -> vector<4x20x20xf32>
    "tpu.trace_stop"() : () -> ()
    %47 = vector.shape_cast %23 : vector<20x20xf32> to vector<1x20x20xf32>
    %48 = vector.broadcast %47 : vector<1x20x20xf32> to vector<4x20x20xf32>
    %49 = arith.addf %46, %48 : vector<4x20x20xf32>
    %cst_33 = arith.constant dense<0xFF800000> : vector<4x20xf32>
    %50 = vector.multi_reduction <maximumf>, %49, %cst_33 [2] : vector<4x20x20xf32> to vector<4x20xf32>
    %51 = vector.shape_cast %50 : vector<4x20xf32> to vector<4x20x1xf32>
    %52 = vector.broadcast %51 : vector<4x20x1xf32> to vector<4x20x20xf32>
    %53 = arith.subf %49, %52 : vector<4x20x20xf32>
    %54 = math.exp %53 : vector<4x20x20xf32>
    %cst_34 = arith.constant dense<0.000000e+00> : vector<4x20xf32>
    %55 = vector.multi_reduction <add>, %54, %cst_34 [2] : vector<4x20x20xf32> to vector<4x20xf32>
    %56 = vector.shape_cast %55 : vector<4x20xf32> to vector<4x20x1xf32>
    %57 = tpu.reciprocal %56 {approx = true} : vector<4x20x1xf32> -> vector<4x20x1xf32>
    %58 = vector.broadcast %57 : vector<4x20x1xf32> to vector<4x20x20xf32>
    %59 = arith.mulf %54, %58 : vector<4x20x20xf32>
    %60 = vector.shape_cast %38 : vector<20x32xf32> to vector<1x20x32xf32>
    %61 = vector.broadcast %60 : vector<1x20x32xf32> to vector<4x20x32xf32>
    %62 = vector.broadcast %0 : vector<4x1x32xf32> to vector<4x20x32xf32>
    %63 = arith.mulf %61, %62 : vector<4x20x32xf32>
    "tpu.trace_start"() <{level = 10 : i32, message = "hqk,hkd->hqd"}> : () -> ()
    %cst_35 = arith.constant dense<0.000000e+00> : vector<4x20x32xf32>
    %64 = tpu.matmul %59, %63, %cst_35 {dimension_numbers = #tpu.dot_dimension_numbers<[2], [1], [1], [2], [0, 0, 0, 1, 1, 2], [0], [0]>} : vector<4x20x20xf32>, vector<4x20x32xf32>, vector<4x20x32xf32> -> vector<4x20x32xf32>
    "tpu.trace_stop"() : () -> ()
    %cst_36 = arith.constant dense<0.000000e+00> : vector<20x32xf32>
    %65 = vector.multi_reduction <add>, %64, %cst_36 [0] : vector<4x20x32xf32> to vector<20x32xf32>
    %c0_37 = arith.constant 0 : index
    %c384 = arith.constant 384 : index
    %66 = vector.load %arg8[%c0_37, %c384] : memref<32x2688xf32, #tpu.memory_space<vmem>>, vector<32x32xf32>
    %cst_38 = arith.constant dense<0.000000e+00> : vector<20x32xf32>
    %67 = tpu.matmul %65, %66, %cst_38 {dimension_numbers = #tpu.dot_dimension_numbers<[1], [0], [0], [1], [0, 0, 1, 1], [], []>} : vector<20x32xf32>, vector<32x32xf32>, vector<20x32xf32> -> vector<20x32xf32>
    %c5 = arith.constant 5 : index
    %c0_39 = arith.constant 0 : index
    %68 = vector.load %arg10[%c5, %c0_39] : memref<33x512xf32, #tpu.memory_space<vmem>>, vector<1x32xf32>
    %69 = vector.broadcast %68 : vector<1x32xf32> to vector<20x32xf32>
    %70 = arith.addf %67, %69 : vector<20x32xf32>
    %71 = arith.addf %12, %70 : vector<20x32xf32>
    %cst_40 = arith.constant dense<0.000000e+00> : vector<20xf32>
    %72 = vector.multi_reduction <add>, %71, %cst_40 [1] : vector<20x32xf32> to vector<20xf32>
    %73 = vector.shape_cast %72 : vector<20xf32> to vector<20x1xf32>
    %cst_41 = arith.constant 3.200000e+01 : f32
    %74 = vector.broadcast %cst_41 : f32 to vector<20x1xf32>
    %75 = arith.divf %73, %74 : vector<20x1xf32>
    %76 = vector.broadcast %75 : vector<20x1xf32> to vector<20x32xf32>
    %77 = arith.subf %71, %76 : vector<20x32xf32>
    %78 = arith.mulf %77, %77 : vector<20x32xf32>
    %cst_42 = arith.constant dense<0.000000e+00> : vector<20xf32>
    %79 = vector.multi_reduction <add>, %78, %cst_42 [1] : vector<20x32xf32> to vector<20xf32>
    %80 = vector.shape_cast %79 : vector<20xf32> to vector<20x1xf32>
    %cst_43 = arith.constant 3.200000e+01 : f32
    %81 = vector.broadcast %cst_43 : f32 to vector<20x1xf32>
    %82 = arith.divf %80, %81 : vector<20x1xf32>
    %83 = vector.broadcast %75 : vector<20x1xf32> to vector<20x32xf32>
    %84 = arith.subf %71, %83 : vector<20x32xf32>
    %cst_44 = arith.constant 9.99999974E-6 : f32
    %85 = vector.broadcast %cst_44 : f32 to vector<20x1xf32>
    %86 = arith.addf %82, %85 : vector<20x1xf32>
    %87 = math.rsqrt %86 : vector<20x1xf32>
    %88 = vector.broadcast %87 : vector<20x1xf32> to vector<20x32xf32>
    %89 = arith.mulf %84, %88 : vector<20x32xf32>
    %c8_45 = arith.constant 8 : index
    %c0_46 = arith.constant 0 : index
    %90 = vector.load %arg10[%c8_45, %c0_46] : memref<33x512xf32, #tpu.memory_space<vmem>>, vector<1x32xf32>
    %91 = vector.broadcast %90 : vector<1x32xf32> to vector<20x32xf32>
    %92 = arith.mulf %89, %91 : vector<20x32xf32>
    %c9 = arith.constant 9 : index
    %c0_47 = arith.constant 0 : index
    %93 = vector.load %arg10[%c9, %c0_47] : memref<33x512xf32, #tpu.memory_space<vmem>>, vector<1x32xf32>
    %94 = vector.broadcast %93 : vector<1x32xf32> to vector<20x32xf32>
    %95 = arith.addf %92, %94 : vector<20x32xf32>
    %c0_48 = arith.constant 0 : index
    %c512 = arith.constant 512 : index
    %96 = vector.load %arg8[%c0_48, %c512] : memref<32x2688xf32, #tpu.memory_space<vmem>>, vector<32x512xf32>
    %cst_49 = arith.constant dense<0.000000e+00> : vector<20x512xf32>
    %97 = tpu.matmul %95, %96, %cst_49 {dimension_numbers = #tpu.dot_dimension_numbers<[1], [0], [0], [1], [0, 0, 1, 1], [], []>} : vector<20x32xf32>, vector<32x512xf32>, vector<20x512xf32> -> vector<20x512xf32>
    %c6 = arith.constant 6 : index
    %c0_50 = arith.constant 0 : index
    %98 = vector.load %arg10[%c6, %c0_50] : memref<33x512xf32, #tpu.memory_space<vmem>>, vector<1x512xf32>
    %99 = vector.broadcast %98 : vector<1x512xf32> to vector<20x512xf32>
    %100 = arith.addf %97, %99 : vector<20x512xf32>
    %cst_51 = arith.constant 0.000000e+00 : f32
    %101 = vector.broadcast %cst_51 : f32 to vector<20x512xf32>
    %102 = arith.maximumf %100, %101 : vector<20x512xf32>
    %c16 = arith.constant 16 : index
    %c0_52 = arith.constant 0 : index
    %103 = vector.load %arg9[%c16, %c0_52] : memref<1040x32xf32, #tpu.memory_space<vmem>>, vector<512x32xf32>
    %cst_53 = arith.constant dense<0.000000e+00> : vector<20x32xf32>
    %104 = tpu.matmul %102, %103, %cst_53 {dimension_numbers = #tpu.dot_dimension_numbers<[1], [0], [0], [1], [0, 0, 1, 1], [], []>} : vector<20x512xf32>, vector<512x32xf32>, vector<20x32xf32> -> vector<20x32xf32>
    %c7 = arith.constant 7 : index
    %c0_54 = arith.constant 0 : index
    %105 = vector.load %arg10[%c7, %c0_54] : memref<33x512xf32, #tpu.memory_space<vmem>>, vector<1x32xf32>
    %106 = vector.broadcast %105 : vector<1x32xf32> to vector<20x32xf32>
    %107 = arith.addf %104, %106 : vector<20x32xf32>
    %108 = arith.addf %95, %107 : vector<20x32xf32>
    %cst_55 = arith.constant dense<0.000000e+00> : vector<20xf32>
    %109 = vector.multi_reduction <add>, %108, %cst_55 [1] : vector<20x32xf32> to vector<20xf32>
    %110 = vector.shape_cast %109 : vector<20xf32> to vector<20x1xf32>
    %cst_56 = arith.constant 3.200000e+01 : f32
    %111 = vector.broadcast %cst_56 : f32 to vector<20x1xf32>
    %112 = arith.divf %110, %111 : vector<20x1xf32>
    %113 = vector.broadcast %112 : vector<20x1xf32> to vector<20x32xf32>
    %114 = arith.subf %108, %113 : vector<20x32xf32>
    %115 = arith.mulf %114, %114 : vector<20x32xf32>
    %cst_57 = arith.constant dense<0.000000e+00> : vector<20xf32>
    %116 = vector.multi_reduction <add>, %115, %cst_57 [1] : vector<20x32xf32> to vector<20xf32>
    %117 = vector.shape_cast %116 : vector<20xf32> to vector<20x1xf32>
    %cst_58 = arith.constant 3.200000e+01 : f32
    %118 = vector.broadcast %cst_58 : f32 to vector<20x1xf32>
    %119 = arith.divf %117, %118 : vector<20x1xf32>
    %120 = vector.broadcast %112 : vector<20x1xf32> to vector<20x32xf32>
    %121 = arith.subf %108, %120 : vector<20x32xf32>
    %cst_59 = arith.constant 9.99999974E-6 : f32
    %122 = vector.broadcast %cst_59 : f32 to vector<20x1xf32>
    %123 = arith.addf %119, %122 : vector<20x1xf32>
    %124 = math.rsqrt %123 : vector<20x1xf32>
    %125 = vector.broadcast %124 : vector<20x1xf32> to vector<20x32xf32>
    %126 = arith.mulf %121, %125 : vector<20x32xf32>
    %c10 = arith.constant 10 : index
    %c0_60 = arith.constant 0 : index
    %127 = vector.load %arg10[%c10, %c0_60] : memref<33x512xf32, #tpu.memory_space<vmem>>, vector<1x32xf32>
    %128 = vector.broadcast %127 : vector<1x32xf32> to vector<20x32xf32>
    %129 = arith.mulf %126, %128 : vector<20x32xf32>
    %c11 = arith.constant 11 : index
    %c0_61 = arith.constant 0 : index
    %130 = vector.load %arg10[%c11, %c0_61] : memref<33x512xf32, #tpu.memory_space<vmem>>, vector<1x32xf32>
    %131 = vector.broadcast %130 : vector<1x32xf32> to vector<20x32xf32>
    %132 = arith.addf %129, %131 : vector<20x32xf32>
    %cst_62 = arith.constant dense<0.000000e+00> : vector<20xf32>
    %133 = vector.multi_reduction <add>, %132, %cst_62 [1] : vector<20x32xf32> to vector<20xf32>
    %134 = vector.shape_cast %133 : vector<20xf32> to vector<20x1xf32>
    %cst_63 = arith.constant 3.200000e+01 : f32
    %135 = vector.broadcast %cst_63 : f32 to vector<20x1xf32>
    %136 = arith.divf %134, %135 : vector<20x1xf32>
    %137 = vector.broadcast %136 : vector<20x1xf32> to vector<20x32xf32>
    %138 = arith.subf %132, %137 : vector<20x32xf32>
    %139 = arith.mulf %138, %138 : vector<20x32xf32>
    %cst_64 = arith.constant dense<0.000000e+00> : vector<20xf32>
    %140 = vector.multi_reduction <add>, %139, %cst_64 [1] : vector<20x32xf32> to vector<20xf32>
    %141 = vector.shape_cast %140 : vector<20xf32> to vector<20x1xf32>
    %cst_65 = arith.constant 3.200000e+01 : f32
    %142 = vector.broadcast %cst_65 : f32 to vector<20x1xf32>
    %143 = arith.divf %141, %142 : vector<20x1xf32>
    %144 = vector.broadcast %136 : vector<20x1xf32> to vector<20x32xf32>
    %145 = arith.subf %132, %144 : vector<20x32xf32>
    %cst_66 = arith.constant 9.99999974E-6 : f32
    %146 = vector.broadcast %cst_66 : f32 to vector<20x1xf32>
    %147 = arith.addf %143, %146 : vector<20x1xf32>
    %148 = math.rsqrt %147 : vector<20x1xf32>
    %149 = vector.broadcast %148 : vector<20x1xf32> to vector<20x32xf32>
    %150 = arith.mulf %145, %149 : vector<20x32xf32>
    %c12 = arith.constant 12 : index
    %c0_67 = arith.constant 0 : index
    %151 = vector.load %arg10[%c12, %c0_67] : memref<33x512xf32, #tpu.memory_space<vmem>>, vector<1x32xf32>
    %152 = vector.broadcast %151 : vector<1x32xf32> to vector<20x32xf32>
    %153 = arith.mulf %150, %152 : vector<20x32xf32>
    %c13 = arith.constant 13 : index
    %c0_68 = arith.constant 0 : index
    %154 = vector.load %arg10[%c13, %c0_68] : memref<33x512xf32, #tpu.memory_space<vmem>>, vector<1x32xf32>
    %155 = vector.broadcast %154 : vector<1x32xf32> to vector<20x32xf32>
    %156 = arith.addf %153, %155 : vector<20x32xf32>
    %c0_69 = arith.constant 0 : index
    %c0_70 = arith.constant 0 : index
    %157 = vector.load %arg6[%c0_69, %c0_70] : memref<16x16xf32, #tpu.memory_space<vmem>>, vector<16x16xf32>
    %c0_71 = arith.constant 0 : index
    %c1024 = arith.constant 1024 : index
    %158 = vector.load %arg8[%c0_71, %c1024] : memref<32x2688xf32, #tpu.memory_space<vmem>>, vector<32x32xf32>
    %cst_72 = arith.constant dense<0.000000e+00> : vector<16x32xf32>
    %159 = tpu.matmul %22, %158, %cst_72 {dimension_numbers = #tpu.dot_dimension_numbers<[1], [0], [0], [1], [0, 0, 1, 1], [], []>} : vector<16x32xf32>, vector<32x32xf32>, vector<16x32xf32> -> vector<16x32xf32>
    %c14 = arith.constant 14 : index
    %c0_73 = arith.constant 0 : index
    %160 = vector.load %arg10[%c14, %c0_73] : memref<33x512xf32, #tpu.memory_space<vmem>>, vector<1x32xf32>
    %161 = vector.broadcast %160 : vector<1x32xf32> to vector<16x32xf32>
    %162 = arith.addf %159, %161 : vector<16x32xf32>
    %c0_74 = arith.constant 0 : index
    %c1152 = arith.constant 1152 : index
    %163 = vector.load %arg8[%c0_74, %c1152] : memref<32x2688xf32, #tpu.memory_space<vmem>>, vector<32x32xf32>
    %cst_75 = arith.constant dense<0.000000e+00> : vector<16x32xf32>
    %164 = tpu.matmul %22, %163, %cst_75 {dimension_numbers = #tpu.dot_dimension_numbers<[1], [0], [0], [1], [0, 0, 1, 1], [], []>} : vector<16x32xf32>, vector<32x32xf32>, vector<16x32xf32> -> vector<16x32xf32>
    %c15 = arith.constant 15 : index
    %c0_76 = arith.constant 0 : index
    %165 = vector.load %arg10[%c15, %c0_76] : memref<33x512xf32, #tpu.memory_space<vmem>>, vector<1x32xf32>
    %166 = vector.broadcast %165 : vector<1x32xf32> to vector<16x32xf32>
    %167 = arith.addf %164, %166 : vector<16x32xf32>
    %c0_77 = arith.constant 0 : index
    %c1280 = arith.constant 1280 : index
    %168 = vector.load %arg8[%c0_77, %c1280] : memref<32x2688xf32, #tpu.memory_space<vmem>>, vector<32x32xf32>
    %cst_78 = arith.constant dense<0.000000e+00> : vector<16x32xf32>
    %169 = tpu.matmul %22, %168, %cst_78 {dimension_numbers = #tpu.dot_dimension_numbers<[1], [0], [0], [1], [0, 0, 1, 1], [], []>} : vector<16x32xf32>, vector<32x32xf32>, vector<16x32xf32> -> vector<16x32xf32>
    %c16_79 = arith.constant 16 : index
    %c0_80 = arith.constant 0 : index
    %170 = vector.load %arg10[%c16_79, %c0_80] : memref<33x512xf32, #tpu.memory_space<vmem>>, vector<1x32xf32>
    %171 = vector.broadcast %170 : vector<1x32xf32> to vector<16x32xf32>
    %172 = arith.addf %169, %171 : vector<16x32xf32>
    %173 = vector.shape_cast %162 : vector<16x32xf32> to vector<1x16x32xf32>
    %174 = vector.broadcast %173 : vector<1x16x32xf32> to vector<4x16x32xf32>
    %175 = vector.broadcast %2 : vector<4x1x32xf32> to vector<4x16x32xf32>
    %176 = arith.mulf %174, %175 : vector<4x16x32xf32>
    %177 = vector.shape_cast %167 : vector<16x32xf32> to vector<1x16x32xf32>
    %178 = vector.shape_cast %177 : vector<1x16x32xf32> to vector<1x16x32xf32>
    %179 = vector.broadcast %178 : vector<1x16x32xf32> to vector<4x16x32xf32>
    "tpu.trace_start"() <{level = 10 : i32, message = "hqd,hkd->hqk"}> : () -> ()
    %cst_81 = arith.constant dense<0.000000e+00> : vector<4x16x16xf32>
    %180 = tpu.matmul %176, %179, %cst_81 {dimension_numbers = #tpu.dot_dimension_numbers<[2], [2], [1], [1], [0, 0, 0, 1, 1, 1], [0], [0]>} : vector<4x16x32xf32>, vector<4x16x32xf32>, vector<4x16x16xf32> -> vector<4x16x16xf32>
    "tpu.trace_stop"() : () -> ()
    %181 = vector.shape_cast %157 : vector<16x16xf32> to vector<1x16x16xf32>
    %182 = vector.broadcast %181 : vector<1x16x16xf32> to vector<4x16x16xf32>
    %183 = arith.addf %180, %182 : vector<4x16x16xf32>
    %cst_82 = arith.constant dense<0xFF800000> : vector<4x16xf32>
    %184 = vector.multi_reduction <maximumf>, %183, %cst_82 [2] : vector<4x16x16xf32> to vector<4x16xf32>
    %185 = vector.shape_cast %184 : vector<4x16xf32> to vector<4x16x1xf32>
    %186 = vector.broadcast %185 : vector<4x16x1xf32> to vector<4x16x16xf32>
    %187 = arith.subf %183, %186 : vector<4x16x16xf32>
    %188 = math.exp %187 : vector<4x16x16xf32>
    %cst_83 = arith.constant dense<0.000000e+00> : vector<4x16xf32>
    %189 = vector.multi_reduction <add>, %188, %cst_83 [2] : vector<4x16x16xf32> to vector<4x16xf32>
    %190 = vector.shape_cast %189 : vector<4x16xf32> to vector<4x16x1xf32>
    %191 = tpu.reciprocal %190 {approx = true} : vector<4x16x1xf32> -> vector<4x16x1xf32>
    %192 = vector.broadcast %191 : vector<4x16x1xf32> to vector<4x16x16xf32>
    %193 = arith.mulf %188, %192 : vector<4x16x16xf32>
    %194 = vector.shape_cast %172 : vector<16x32xf32> to vector<1x16x32xf32>
    %195 = vector.broadcast %194 : vector<1x16x32xf32> to vector<4x16x32xf32>
    %196 = vector.broadcast %0 : vector<4x1x32xf32> to vector<4x16x32xf32>
    %197 = arith.mulf %195, %196 : vector<4x16x32xf32>
    "tpu.trace_start"() <{level = 10 : i32, message = "hqk,hkd->hqd"}> : () -> ()
    %cst_84 = arith.constant dense<0.000000e+00> : vector<4x16x32xf32>
    %198 = tpu.matmul %193, %197, %cst_84 {dimension_numbers = #tpu.dot_dimension_numbers<[2], [1], [1], [2], [0, 0, 0, 1, 1, 2], [0], [0]>} : vector<4x16x16xf32>, vector<4x16x32xf32>, vector<4x16x32xf32> -> vector<4x16x32xf32>
    "tpu.trace_stop"() : () -> ()
    %cst_85 = arith.constant dense<0.000000e+00> : vector<16x32xf32>
    %199 = vector.multi_reduction <add>, %198, %cst_85 [0] : vector<4x16x32xf32> to vector<16x32xf32>
    %c0_86 = arith.constant 0 : index
    %c1408 = arith.constant 1408 : index
    %200 = vector.load %arg8[%c0_86, %c1408] : memref<32x2688xf32, #tpu.memory_space<vmem>>, vector<32x32xf32>
    %cst_87 = arith.constant dense<0.000000e+00> : vector<16x32xf32>
    %201 = tpu.matmul %199, %200, %cst_87 {dimension_numbers = #tpu.dot_dimension_numbers<[1], [0], [0], [1], [0, 0, 1, 1], [], []>} : vector<16x32xf32>, vector<32x32xf32>, vector<16x32xf32> -> vector<16x32xf32>
    %c17 = arith.constant 17 : index
    %c0_88 = arith.constant 0 : index
    %202 = vector.load %arg10[%c17, %c0_88] : memref<33x512xf32, #tpu.memory_space<vmem>>, vector<1x32xf32>
    %203 = vector.broadcast %202 : vector<1x32xf32> to vector<16x32xf32>
    %204 = arith.addf %201, %203 : vector<16x32xf32>
    %205 = arith.addf %22, %204 : vector<16x32xf32>
    %cst_89 = arith.constant dense<0.000000e+00> : vector<16xf32>
    %206 = vector.multi_reduction <add>, %205, %cst_89 [1] : vector<16x32xf32> to vector<16xf32>
    %207 = vector.shape_cast %206 : vector<16xf32> to vector<16x1xf32>
    %cst_90 = arith.constant 3.200000e+01 : f32
    %208 = vector.broadcast %cst_90 : f32 to vector<16x1xf32>
    %209 = arith.divf %207, %208 : vector<16x1xf32>
    %210 = vector.broadcast %209 : vector<16x1xf32> to vector<16x32xf32>
    %211 = arith.subf %205, %210 : vector<16x32xf32>
    %212 = arith.mulf %211, %211 : vector<16x32xf32>
    %cst_91 = arith.constant dense<0.000000e+00> : vector<16xf32>
    %213 = vector.multi_reduction <add>, %212, %cst_91 [1] : vector<16x32xf32> to vector<16xf32>
    %214 = vector.shape_cast %213 : vector<16xf32> to vector<16x1xf32>
    %cst_92 = arith.constant 3.200000e+01 : f32
    %215 = vector.broadcast %cst_92 : f32 to vector<16x1xf32>
    %216 = arith.divf %214, %215 : vector<16x1xf32>
    %217 = vector.broadcast %209 : vector<16x1xf32> to vector<16x32xf32>
    %218 = arith.subf %205, %217 : vector<16x32xf32>
    %cst_93 = arith.constant 9.99999974E-6 : f32
    %219 = vector.broadcast %cst_93 : f32 to vector<16x1xf32>
    %220 = arith.addf %216, %219 : vector<16x1xf32>
    %221 = math.rsqrt %220 : vector<16x1xf32>
    %222 = vector.broadcast %221 : vector<16x1xf32> to vector<16x32xf32>
    %223 = arith.mulf %218, %222 : vector<16x32xf32>
    %c20 = arith.constant 20 : index
    %c0_94 = arith.constant 0 : index
    %224 = vector.load %arg10[%c20, %c0_94] : memref<33x512xf32, #tpu.memory_space<vmem>>, vector<1x32xf32>
    %225 = vector.broadcast %224 : vector<1x32xf32> to vector<16x32xf32>
    %226 = arith.mulf %223, %225 : vector<16x32xf32>
    %c21 = arith.constant 21 : index
    %c0_95 = arith.constant 0 : index
    %227 = vector.load %arg10[%c21, %c0_95] : memref<33x512xf32, #tpu.memory_space<vmem>>, vector<1x32xf32>
    %228 = vector.broadcast %227 : vector<1x32xf32> to vector<16x32xf32>
    %229 = arith.addf %226, %228 : vector<16x32xf32>
    %c0_96 = arith.constant 0 : index
    %c0_97 = arith.constant 0 : index
    %230 = vector.load %arg7[%c0_96, %c0_97] : memref<16x20xf32, #tpu.memory_space<vmem>>, vector<16x20xf32>
    %c0_98 = arith.constant 0 : index
    %c2048 = arith.constant 2048 : index
    %231 = vector.load %arg8[%c0_98, %c2048] : memref<32x2688xf32, #tpu.memory_space<vmem>>, vector<32x32xf32>
    %cst_99 = arith.constant dense<0.000000e+00> : vector<16x32xf32>
    %232 = tpu.matmul %229, %231, %cst_99 {dimension_numbers = #tpu.dot_dimension_numbers<[1], [0], [0], [1], [0, 0, 1, 1], [], []>} : vector<16x32xf32>, vector<32x32xf32>, vector<16x32xf32> -> vector<16x32xf32>
    %c28 = arith.constant 28 : index
    %c0_100 = arith.constant 0 : index
    %233 = vector.load %arg10[%c28, %c0_100] : memref<33x512xf32, #tpu.memory_space<vmem>>, vector<1x32xf32>
    %234 = vector.broadcast %233 : vector<1x32xf32> to vector<16x32xf32>
    %235 = arith.addf %232, %234 : vector<16x32xf32>
    %c0_101 = arith.constant 0 : index
    %c2176 = arith.constant 2176 : index
    %236 = vector.load %arg8[%c0_101, %c2176] : memref<32x2688xf32, #tpu.memory_space<vmem>>, vector<32x32xf32>
    %cst_102 = arith.constant dense<0.000000e+00> : vector<20x32xf32>
    %237 = tpu.matmul %156, %236, %cst_102 {dimension_numbers = #tpu.dot_dimension_numbers<[1], [0], [0], [1], [0, 0, 1, 1], [], []>} : vector<20x32xf32>, vector<32x32xf32>, vector<20x32xf32> -> vector<20x32xf32>
    %c29 = arith.constant 29 : index
    %c0_103 = arith.constant 0 : index
    %238 = vector.load %arg10[%c29, %c0_103] : memref<33x512xf32, #tpu.memory_space<vmem>>, vector<1x32xf32>
    %239 = vector.broadcast %238 : vector<1x32xf32> to vector<20x32xf32>
    %240 = arith.addf %237, %239 : vector<20x32xf32>
    %c0_104 = arith.constant 0 : index
    %c2304 = arith.constant 2304 : index
    %241 = vector.load %arg8[%c0_104, %c2304] : memref<32x2688xf32, #tpu.memory_space<vmem>>, vector<32x32xf32>
    %cst_105 = arith.constant dense<0.000000e+00> : vector<20x32xf32>
    %242 = tpu.matmul %156, %241, %cst_105 {dimension_numbers = #tpu.dot_dimension_numbers<[1], [0], [0], [1], [0, 0, 1, 1], [], []>} : vector<20x32xf32>, vector<32x32xf32>, vector<20x32xf32> -> vector<20x32xf32>
    %c30 = arith.constant 30 : index
    %c0_106 = arith.constant 0 : index
    %243 = vector.load %arg10[%c30, %c0_106] : memref<33x512xf32, #tpu.memory_space<vmem>>, vector<1x32xf32>
    %244 = vector.broadcast %243 : vector<1x32xf32> to vector<20x32xf32>
    %245 = arith.addf %242, %244 : vector<20x32xf32>
    %246 = vector.shape_cast %235 : vector<16x32xf32> to vector<1x16x32xf32>
    %247 = vector.broadcast %246 : vector<1x16x32xf32> to vector<4x16x32xf32>
    %248 = vector.broadcast %2 : vector<4x1x32xf32> to vector<4x16x32xf32>
    %249 = arith.mulf %247, %248 : vector<4x16x32xf32>
    %250 = vector.shape_cast %240 : vector<20x32xf32> to vector<1x20x32xf32>
    %251 = vector.shape_cast %250 : vector<1x20x32xf32> to vector<1x20x32xf32>
    %252 = vector.broadcast %251 : vector<1x20x32xf32> to vector<4x20x32xf32>
    "tpu.trace_start"() <{level = 10 : i32, message = "hqd,hkd->hqk"}> : () -> ()
    %cst_107 = arith.constant dense<0.000000e+00> : vector<4x16x20xf32>
    %253 = tpu.matmul %249, %252, %cst_107 {dimension_numbers = #tpu.dot_dimension_numbers<[2], [2], [1], [1], [0, 0, 0, 1, 1, 1], [0], [0]>} : vector<4x16x32xf32>, vector<4x20x32xf32>, vector<4x16x20xf32> -> vector<4x16x20xf32>
    "tpu.trace_stop"() : () -> ()
    %254 = vector.shape_cast %230 : vector<16x20xf32> to vector<1x16x20xf32>
    %255 = vector.broadcast %254 : vector<1x16x20xf32> to vector<4x16x20xf32>
    %256 = arith.addf %253, %255 : vector<4x16x20xf32>
    %cst_108 = arith.constant dense<0xFF800000> : vector<4x16xf32>
    %257 = vector.multi_reduction <maximumf>, %256, %cst_108 [2] : vector<4x16x20xf32> to vector<4x16xf32>
    %258 = vector.shape_cast %257 : vector<4x16xf32> to vector<4x16x1xf32>
    %259 = vector.broadcast %258 : vector<4x16x1xf32> to vector<4x16x20xf32>
    %260 = arith.subf %256, %259 : vector<4x16x20xf32>
    %261 = math.exp %260 : vector<4x16x20xf32>
    %cst_109 = arith.constant dense<0.000000e+00> : vector<4x16xf32>
    %262 = vector.multi_reduction <add>, %261, %cst_109 [2] : vector<4x16x20xf32> to vector<4x16xf32>
    %263 = vector.shape_cast %262 : vector<4x16xf32> to vector<4x16x1xf32>
    %264 = tpu.reciprocal %263 {approx = true} : vector<4x16x1xf32> -> vector<4x16x1xf32>
    %265 = vector.broadcast %264 : vector<4x16x1xf32> to vector<4x16x20xf32>
    %266 = arith.mulf %261, %265 : vector<4x16x20xf32>
    %267 = vector.shape_cast %245 : vector<20x32xf32> to vector<1x20x32xf32>
    %268 = vector.broadcast %267 : vector<1x20x32xf32> to vector<4x20x32xf32>
    %269 = vector.broadcast %0 : vector<4x1x32xf32> to vector<4x20x32xf32>
    %270 = arith.mulf %268, %269 : vector<4x20x32xf32>
    "tpu.trace_start"() <{level = 10 : i32, message = "hqk,hkd->hqd"}> : () -> ()
    %cst_110 = arith.constant dense<0.000000e+00> : vector<4x16x32xf32>
    %271 = tpu.matmul %266, %270, %cst_110 {dimension_numbers = #tpu.dot_dimension_numbers<[2], [1], [1], [2], [0, 0, 0, 1, 1, 2], [0], [0]>} : vector<4x16x20xf32>, vector<4x20x32xf32>, vector<4x16x32xf32> -> vector<4x16x32xf32>
    "tpu.trace_stop"() : () -> ()
    %cst_111 = arith.constant dense<0.000000e+00> : vector<16x32xf32>
    %272 = vector.multi_reduction <add>, %271, %cst_111 [0] : vector<4x16x32xf32> to vector<16x32xf32>
    %c0_112 = arith.constant 0 : index
    %c2432 = arith.constant 2432 : index
    %273 = vector.load %arg8[%c0_112, %c2432] : memref<32x2688xf32, #tpu.memory_space<vmem>>, vector<32x32xf32>
    %cst_113 = arith.constant dense<0.000000e+00> : vector<16x32xf32>
    %274 = tpu.matmul %272, %273, %cst_113 {dimension_numbers = #tpu.dot_dimension_numbers<[1], [0], [0], [1], [0, 0, 1, 1], [], []>} : vector<16x32xf32>, vector<32x32xf32>, vector<16x32xf32> -> vector<16x32xf32>
    %c31 = arith.constant 31 : index
    %c0_114 = arith.constant 0 : index
    %275 = vector.load %arg10[%c31, %c0_114] : memref<33x512xf32, #tpu.memory_space<vmem>>, vector<1x32xf32>
    %276 = vector.broadcast %275 : vector<1x32xf32> to vector<16x32xf32>
    %277 = arith.addf %274, %276 : vector<16x32xf32>
    %278 = arith.addf %229, %277 : vector<16x32xf32>
    %cst_115 = arith.constant dense<0.000000e+00> : vector<16xf32>
    %279 = vector.multi_reduction <add>, %278, %cst_115 [1] : vector<16x32xf32> to vector<16xf32>
    %280 = vector.shape_cast %279 : vector<16xf32> to vector<16x1xf32>
    %cst_116 = arith.constant 3.200000e+01 : f32
    %281 = vector.broadcast %cst_116 : f32 to vector<16x1xf32>
    %282 = arith.divf %280, %281 : vector<16x1xf32>
    %283 = vector.broadcast %282 : vector<16x1xf32> to vector<16x32xf32>
    %284 = arith.subf %278, %283 : vector<16x32xf32>
    %285 = arith.mulf %284, %284 : vector<16x32xf32>
    %cst_117 = arith.constant dense<0.000000e+00> : vector<16xf32>
    %286 = vector.multi_reduction <add>, %285, %cst_117 [1] : vector<16x32xf32> to vector<16xf32>
    %287 = vector.shape_cast %286 : vector<16xf32> to vector<16x1xf32>
    %cst_118 = arith.constant 3.200000e+01 : f32
    %288 = vector.broadcast %cst_118 : f32 to vector<16x1xf32>
    %289 = arith.divf %287, %288 : vector<16x1xf32>
    %290 = vector.broadcast %282 : vector<16x1xf32> to vector<16x32xf32>
    %291 = arith.subf %278, %290 : vector<16x32xf32>
    %cst_119 = arith.constant 9.99999974E-6 : f32
    %292 = vector.broadcast %cst_119 : f32 to vector<16x1xf32>
    %293 = arith.addf %289, %292 : vector<16x1xf32>
    %294 = math.rsqrt %293 : vector<16x1xf32>
    %295 = vector.broadcast %294 : vector<16x1xf32> to vector<16x32xf32>
    %296 = arith.mulf %291, %295 : vector<16x32xf32>
    %c22 = arith.constant 22 : index
    %c0_120 = arith.constant 0 : index
    %297 = vector.load %arg10[%c22, %c0_120] : memref<33x512xf32, #tpu.memory_space<vmem>>, vector<1x32xf32>
    %298 = vector.broadcast %297 : vector<1x32xf32> to vector<16x32xf32>
    %299 = arith.mulf %296, %298 : vector<16x32xf32>
    %c23 = arith.constant 23 : index
    %c0_121 = arith.constant 0 : index
    %300 = vector.load %arg10[%c23, %c0_121] : memref<33x512xf32, #tpu.memory_space<vmem>>, vector<1x32xf32>
    %301 = vector.broadcast %300 : vector<1x32xf32> to vector<16x32xf32>
    %302 = arith.addf %299, %301 : vector<16x32xf32>
    %c0_122 = arith.constant 0 : index
    %c1536 = arith.constant 1536 : index
    %303 = vector.load %arg8[%c0_122, %c1536] : memref<32x2688xf32, #tpu.memory_space<vmem>>, vector<32x512xf32>
    %cst_123 = arith.constant dense<0.000000e+00> : vector<16x512xf32>
    %304 = tpu.matmul %302, %303, %cst_123 {dimension_numbers = #tpu.dot_dimension_numbers<[1], [0], [0], [1], [0, 0, 1, 1], [], []>} : vector<16x32xf32>, vector<32x512xf32>, vector<16x512xf32> -> vector<16x512xf32>
    %c18 = arith.constant 18 : index
    %c0_124 = arith.constant 0 : index
    %305 = vector.load %arg10[%c18, %c0_124] : memref<33x512xf32, #tpu.memory_space<vmem>>, vector<1x512xf32>
    %306 = vector.broadcast %305 : vector<1x512xf32> to vector<16x512xf32>
    %307 = arith.addf %304, %306 : vector<16x512xf32>
    %cst_125 = arith.constant 0.000000e+00 : f32
    %308 = vector.broadcast %cst_125 : f32 to vector<16x512xf32>
    %309 = arith.maximumf %307, %308 : vector<16x512xf32>
    %c528 = arith.constant 528 : index
    %c0_126 = arith.constant 0 : index
    %310 = vector.load %arg9[%c528, %c0_126] : memref<1040x32xf32, #tpu.memory_space<vmem>>, vector<512x32xf32>
    %cst_127 = arith.constant dense<0.000000e+00> : vector<16x32xf32>
    %311 = tpu.matmul %309, %310, %cst_127 {dimension_numbers = #tpu.dot_dimension_numbers<[1], [0], [0], [1], [0, 0, 1, 1], [], []>} : vector<16x512xf32>, vector<512x32xf32>, vector<16x32xf32> -> vector<16x32xf32>
    %c19 = arith.constant 19 : index
    %c0_128 = arith.constant 0 : index
    %312 = vector.load %arg10[%c19, %c0_128] : memref<33x512xf32, #tpu.memory_space<vmem>>, vector<1x32xf32>
    %313 = vector.broadcast %312 : vector<1x32xf32> to vector<16x32xf32>
    %314 = arith.addf %311, %313 : vector<16x32xf32>
    %315 = arith.addf %302, %314 : vector<16x32xf32>
    %cst_129 = arith.constant dense<0.000000e+00> : vector<16xf32>
    %316 = vector.multi_reduction <add>, %315, %cst_129 [1] : vector<16x32xf32> to vector<16xf32>
    %317 = vector.shape_cast %316 : vector<16xf32> to vector<16x1xf32>
    %cst_130 = arith.constant 3.200000e+01 : f32
    %318 = vector.broadcast %cst_130 : f32 to vector<16x1xf32>
    %319 = arith.divf %317, %318 : vector<16x1xf32>
    %320 = vector.broadcast %319 : vector<16x1xf32> to vector<16x32xf32>
    %321 = arith.subf %315, %320 : vector<16x32xf32>
    %322 = arith.mulf %321, %321 : vector<16x32xf32>
    %cst_131 = arith.constant dense<0.000000e+00> : vector<16xf32>
    %323 = vector.multi_reduction <add>, %322, %cst_131 [1] : vector<16x32xf32> to vector<16xf32>
    %324 = vector.shape_cast %323 : vector<16xf32> to vector<16x1xf32>
    %cst_132 = arith.constant 3.200000e+01 : f32
    %325 = vector.broadcast %cst_132 : f32 to vector<16x1xf32>
    %326 = arith.divf %324, %325 : vector<16x1xf32>
    %327 = vector.broadcast %319 : vector<16x1xf32> to vector<16x32xf32>
    %328 = arith.subf %315, %327 : vector<16x32xf32>
    %cst_133 = arith.constant 9.99999974E-6 : f32
    %329 = vector.broadcast %cst_133 : f32 to vector<16x1xf32>
    %330 = arith.addf %326, %329 : vector<16x1xf32>
    %331 = math.rsqrt %330 : vector<16x1xf32>
    %332 = vector.broadcast %331 : vector<16x1xf32> to vector<16x32xf32>
    %333 = arith.mulf %328, %332 : vector<16x32xf32>
    %c24 = arith.constant 24 : index
    %c0_134 = arith.constant 0 : index
    %334 = vector.load %arg10[%c24, %c0_134] : memref<33x512xf32, #tpu.memory_space<vmem>>, vector<1x32xf32>
    %335 = vector.broadcast %334 : vector<1x32xf32> to vector<16x32xf32>
    %336 = arith.mulf %333, %335 : vector<16x32xf32>
    %c25 = arith.constant 25 : index
    %c0_135 = arith.constant 0 : index
    %337 = vector.load %arg10[%c25, %c0_135] : memref<33x512xf32, #tpu.memory_space<vmem>>, vector<1x32xf32>
    %338 = vector.broadcast %337 : vector<1x32xf32> to vector<16x32xf32>
    %339 = arith.addf %336, %338 : vector<16x32xf32>
    %cst_136 = arith.constant dense<0.000000e+00> : vector<16xf32>
    %340 = vector.multi_reduction <add>, %339, %cst_136 [1] : vector<16x32xf32> to vector<16xf32>
    %341 = vector.shape_cast %340 : vector<16xf32> to vector<16x1xf32>
    %cst_137 = arith.constant 3.200000e+01 : f32
    %342 = vector.broadcast %cst_137 : f32 to vector<16x1xf32>
    %343 = arith.divf %341, %342 : vector<16x1xf32>
    %344 = vector.broadcast %343 : vector<16x1xf32> to vector<16x32xf32>
    %345 = arith.subf %339, %344 : vector<16x32xf32>
    %346 = arith.mulf %345, %345 : vector<16x32xf32>
    %cst_138 = arith.constant dense<0.000000e+00> : vector<16xf32>
    %347 = vector.multi_reduction <add>, %346, %cst_138 [1] : vector<16x32xf32> to vector<16xf32>
    %348 = vector.shape_cast %347 : vector<16xf32> to vector<16x1xf32>
    %cst_139 = arith.constant 3.200000e+01 : f32
    %349 = vector.broadcast %cst_139 : f32 to vector<16x1xf32>
    %350 = arith.divf %348, %349 : vector<16x1xf32>
    %351 = vector.broadcast %343 : vector<16x1xf32> to vector<16x32xf32>
    %352 = arith.subf %339, %351 : vector<16x32xf32>
    %cst_140 = arith.constant 9.99999974E-6 : f32
    %353 = vector.broadcast %cst_140 : f32 to vector<16x1xf32>
    %354 = arith.addf %350, %353 : vector<16x1xf32>
    %355 = math.rsqrt %354 : vector<16x1xf32>
    %356 = vector.broadcast %355 : vector<16x1xf32> to vector<16x32xf32>
    %357 = arith.mulf %352, %356 : vector<16x32xf32>
    %c26 = arith.constant 26 : index
    %c0_141 = arith.constant 0 : index
    %358 = vector.load %arg10[%c26, %c0_141] : memref<33x512xf32, #tpu.memory_space<vmem>>, vector<1x32xf32>
    %359 = vector.broadcast %358 : vector<1x32xf32> to vector<16x32xf32>
    %360 = arith.mulf %357, %359 : vector<16x32xf32>
    %c27 = arith.constant 27 : index
    %c0_142 = arith.constant 0 : index
    %361 = vector.load %arg10[%c27, %c0_142] : memref<33x512xf32, #tpu.memory_space<vmem>>, vector<1x32xf32>
    %362 = vector.broadcast %361 : vector<1x32xf32> to vector<16x32xf32>
    %363 = arith.addf %360, %362 : vector<16x32xf32>
    %c0_143 = arith.constant 0 : index
    %c2560 = arith.constant 2560 : index
    %364 = vector.load %arg8[%c0_143, %c2560] : memref<32x2688xf32, #tpu.memory_space<vmem>>, vector<32x4xf32>
    %cst_144 = arith.constant dense<0.000000e+00> : vector<16x4xf32>
    %365 = tpu.matmul %363, %364, %cst_144 {dimension_numbers = #tpu.dot_dimension_numbers<[1], [0], [0], [1], [0, 0, 1, 1], [], []>} : vector<16x32xf32>, vector<32x4xf32>, vector<16x4xf32> -> vector<16x4xf32>
    %c32 = arith.constant 32 : index
    %c0_145 = arith.constant 0 : index
    %366 = vector.load %arg10[%c32, %c0_145] : memref<33x512xf32, #tpu.memory_space<vmem>>, vector<1x4xf32>
    %367 = vector.broadcast %366 : vector<1x4xf32> to vector<16x4xf32>
    %368 = arith.addf %365, %367 : vector<16x4xf32>
    %c0_146 = arith.constant 0 : index
    %c0_147 = arith.constant 0 : index
    %369 = vector.load %arg11[%c0_146, %c0_147] : memref<16x4xf32, #tpu.memory_space<vmem>>, vector<16x4xf32>
    tpu.vector_store %arg11[%c0_146, %c0_147], %368 {strides = array<i32>} : memref<16x4xf32, #tpu.memory_space<vmem>>, vector<16x4xf32>,
    return
  }
}

</mosaic_0001>

<llo_original>
// kernel: tpu_custom_call.1
$region0: #{tpu_custom_call.1}
  #allocation0 [shape = 'u32[]', space=smem, size = 0x4, offset = 0x4, fixed_abs, tag = 'smem constant byte address 0x4 - core index']
  #allocation1 [shape = 'u32[144,128]{1,0:T(1,128)}', space=vmem, size = 0x12000, scoped, tag = 'internal scratch']
  %s0 = inlined_call_operand.vmem [shape: f32[20,6], index: 0, kind: input, shape index: {}]
  %s1 = inlined_call_operand.vmem [shape: f32[16,4], index: 1, kind: input, shape index: {}]
  %s2 = inlined_call_operand.vmem [shape: f32[20,32], index: 2, kind: input, shape index: {}]
  %s3 = inlined_call_operand.vmem [shape: f32[16,32], index: 3, kind: input, shape index: {}]
  %s4 = inlined_call_operand.vmem [shape: f32[4,1,32], index: 4, kind: input, shape index: {}]
  %s5 = inlined_call_operand.vmem [shape: f32[20,20], index: 5, kind: input, shape index: {}]
  %s6 = inlined_call_operand.vmem [shape: f32[16,16], index: 6, kind: input, shape index: {}]
  %s7 = inlined_call_operand.vmem [shape: f32[16,20], index: 7, kind: input, shape index: {}]
  %s8 = inlined_call_operand.vmem [shape: f32[32,2688], index: 8, kind: input, shape index: {}]
  %s9 = inlined_call_operand.vmem [shape: f32[1040,32], index: 9, kind: input, shape index: {}]
  %s10 = inlined_call_operand.vmem [shape: f32[33,512], index: 10, kind: input, shape index: {}]
  %s11 = inlined_call_operand.vmem [shape: f32[16,4], index: 11, kind: output, shape index: {}]
  %s12 = sld [smem:[#allocation0]]
  $region54: #{tpu_custom_call.1} parent=0
    _
  %s14 = ssub.s32 1, %s12
  %s15 = scalar_select 0, %s14, %s12
  // Predicated region
  $region2: #{tpu_custom_call.1} parent=0 // pred_check
    _
  $region3: #{tpu_custom_call.1} parent=0 // pred_check_branch
    %17 = sbr.rel (0) target = $region5
  $region4: #{tpu_custom_call.1} parent=0 // pred_region
    _
  $region5: #{tpu_custom_call.1} parent=0 // pred_fallthru
    _
  // Predicated region
  $region6: #{tpu_custom_call.1} parent=0 // pred_check
    _
  $region7: #{tpu_custom_call.1} parent=0 // pred_check_branch
    %19 = sbr.rel (0) target = $region9
  $region8: #{tpu_custom_call.1} parent=0 // pred_region
    _
  $region9: #{tpu_custom_call.1} parent=0 // pred_fallthru
    _
  // Predicated region
  $region10: #{tpu_custom_call.1} parent=0 // pred_check
    _
  $region11: #{tpu_custom_call.1} parent=0 // pred_check_branch
    %21 = sbr.rel (0) target = $region13
  $region12: #{tpu_custom_call.1} parent=0 // pred_region
    _
  $region13: #{tpu_custom_call.1} parent=0 // pred_fallthru
    _
  // Predicated region
  $region14: #{tpu_custom_call.1} parent=0 // pred_check
    _
  $region15: #{tpu_custom_call.1} parent=0 // pred_check_branch
    %23 = sbr.rel (0) target = $region17
  $region16: #{tpu_custom_call.1} parent=0 // pred_region
    _
  $region17: #{tpu_custom_call.1} parent=0 // pred_fallthru
    _
  // Predicated region
  $region18: #{tpu_custom_call.1} parent=0 // pred_check
    _
  $region19: #{tpu_custom_call.1} parent=0 // pred_check_branch
    %25 = sbr.rel (0) target = $region21
  $region20: #{tpu_custom_call.1} parent=0 // pred_region
    _
  $region21: #{tpu_custom_call.1} parent=0 // pred_fallthru
    _
  // Predicated region
  $region22: #{tpu_custom_call.1} parent=0 // pred_check
    _
  $region23: #{tpu_custom_call.1} parent=0 // pred_check_branch
    %27 = sbr.rel (0) target = $region25
  $region24: #{tpu_custom_call.1} parent=0 // pred_region
    _
  $region25: #{tpu_custom_call.1} parent=0 // pred_fallthru
    _
  // Predicated region
  $region26: #{tpu_custom_call.1} parent=0 // pred_check
    _
  $region27: #{tpu_custom_call.1} parent=0 // pred_check_branch
    %29 = sbr.rel (0) target = $region29
  $region28: #{tpu_custom_call.1} parent=0 // pred_region
    _
  $region29: #{tpu_custom_call.1} parent=0 // pred_fallthru
    _
  // Predicated region
  $region30: #{tpu_custom_call.1} parent=0 // pred_check
    _
  $region31: #{tpu_custom_call.1} parent=0 // pred_check_branch
    %31 = sbr.rel (0) target = $region33
  $region32: #{tpu_custom_call.1} parent=0 // pred_region
    _
  $region33: #{tpu_custom_call.1} parent=0 // pred_fallthru
    _
  // Predicated region
  $region34: #{tpu_custom_call.1} parent=0 // pred_check
    _
  $region35: #{tpu_custom_call.1} parent=0 // pred_check_branch
    %33 = sbr.rel (0) target = $region37
  $region36: #{tpu_custom_call.1} parent=0 // pred_region
    _
  $region37: #{tpu_custom_call.1} parent=0 // pred_fallthru
    _
  // Predicated region
  $region38: #{tpu_custom_call.1} parent=0 // pred_check
    _
  $region39: #{tpu_custom_call.1} parent=0 // pred_check_branch
    %35 = sbr.rel (0) target = $region41
  $region40: #{tpu_custom_call.1} parent=0 // pred_region
    _
  $region41: #{tpu_custom_call.1} parent=0 // pred_fallthru
    _
  // Predicated region
  $region42: #{tpu_custom_call.1} parent=0 // pred_check
    _
  $region43: #{tpu_custom_call.1} parent=0 // pred_check_branch
    %37 = sbr.rel (0) target = $region45
  $region44: #{tpu_custom_call.1} parent=0 // pred_region
    _
  $region45: #{tpu_custom_call.1} parent=0 // pred_fallthru
    _
  %v38 = vld [vmem:[%s4] sm:$0x1]
  %v39 = vld [vmem:[%s4 + $0x1] sm:$0x1]
  %v40 = vld [vmem:[%s4 + $0x2] sm:$0x1]
  %v41 = vld [vmem:[%s4 + $0x3] sm:$0x1]
  %v42 = vmul.f32 %v38, 0.35355338
  %v43 = vmul.f32 %v39, 0.35355338
  %v44 = vmul.f32 %v40, 0.35355338
  %v45 = vmul.f32 %v41, 0.35355338
  %v46 = vld [vmem:[%s0] sm:$0xff]
  %v47 = vld [vmem:[%s0 + $0x8] sm:$0xff]
  %v48 = vld [vmem:[%s0 + $0x10] sm:$0xf]
  %v49 = vld [vmem:[%s9] sm:$0x3f]
  %v50 = vld [vmem:[%s10] ss:$0 sm:$0xff]
  %vm51 = vcmask 48128
  %v53 = vsel %vm51, %v46, 0
  %v56 = vsel %vm51, %v47, 0
  %v59 = vsel %vm51, %v48, 0
  %vm61 = vcmask 1045504
  %v63 = vsel %vm61, %v49, 0
  %65 = vmatprep.subr.mxu0 0.0
  %66 = vmatpush1.msra.mxu0 %v63
  %67 = vmatprep.subr.mxu0 0.0
  %68 = vmatpush1.msra.mxu0 0.0
  %69 = vmatprep.subr.mxu0 0.0
  %70 = vmatpush1.msra.mxu0 0.0
  %71 = vmatprep.subr.mxu0 0.0
  %72 = vmatpush1.msra.mxu0 0.0
  %73 = vmatprep.subr.mxu0 0.0
  %74 = vmatpush1.msra.mxu0 0.0
  %75 = vmatprep.subr.mxu0 0.0
  %76 = vmatpush1.msra.mxu0 0.0
  %77 = vmatprep.subr.mxu0 0.0
  %78 = vmatpush1.msra.mxu0 0.0
  %79 = vmatprep.subr.mxu0 0.0
  %80 = vmatpush1.msra.mxu0 0.0
  %81 = vmatprep.subr.mxu0 0.0
  %82 = vmatpush1.msra.mxu0 0.0
  %83 = vmatprep.subr.mxu0 0.0
  %84 = vmatpush1.msra.mxu0 0.0
  %85 = vmatprep.subr.mxu0 0.0
  %86 = vmatpush1.msra.mxu0 0.0
  %87 = vmatprep.subr.mxu0 0.0
  %88 = vmatpush1.msra.mxu0 0.0
  %89 = vmatprep.subr.mxu0 0.0
  %90 = vmatpush1.msra.mxu0 0.0
  %91 = vmatprep.subr.mxu0 0.0
  %92 = vmatpush1.msra.mxu0 0.0
  %93 = vmatprep.subr.mxu0 0.0
  %94 = vmatpush1.msra.mxu0 0.0
  %95 = vmatprep.subr.mxu0 0.0
  %96 = vmatpush1.msra.mxu0 0.0
  %97 = vmatprep.subr.mxu0 0.0
  %98 = vmatpush1.msra.mxu0 0.0
  %99 = vmatprep.subr.mxu0 0.0
  %100 = vmatpush1.msra.mxu0 0.0
  %101 = vmatprep.subr.mxu0 0.0
  %102 = vmatpush1.msra.mxu0 0.0
  %103 = vmatprep.subr.mxu0 0.0
  %104 = vmatpush1.msra.mxu0 0.0
  %105 = vmatprep.subr.mxu0 0.0
  %106 = vmatpush1.msra.mxu0 0.0
  %107 = vmatprep.subr.mxu0 0.0
  %108 = vmatpush1.msra.mxu0 0.0
  %109 = vmatprep.subr.mxu0 0.0
  %110 = vmatpush1.msra.mxu0 0.0
  %111 = vmatprep.subr.mxu0 0.0
  %112 = vmatpush1.msra.mxu0 0.0
  %113 = vmatprep.subr.mxu0 0.0
  %114 = vmatpush1.msra.mxu0 0.0
  %115 = vmatprep.subr.mxu0 0.0
  %116 = vmatpush1.msra.mxu0 0.0
  %117 = vmatprep.subr.mxu0 0.0
  %118 = vmatpush1.msra.mxu0 0.0
  %119 = vmatprep.subr.mxu0 0.0
  %120 = vmatpush1.msra.mxu0 0.0
  %121 = vmatprep.subr.mxu0 0.0
  %122 = vmatpush1.msra.mxu0 0.0
  %123 = vmatprep.subr.mxu0 0.0
  %124 = vmatpush1.msra.mxu0 0.0
  %125 = vmatprep.subr.mxu0 0.0
  %126 = vmatpush1.msra.mxu0 0.0
  %127 = vmatprep.subr.mxu0 0.0
  %128 = vmatpush1.msra.mxu0 0.0
  %129 = vmatprep.mubr.f32.mxu0 0.0
  %130 = vmatmul.mubr.f32.gmra.mrb[0].mxu0 %v53
  %v131 = vpop.f32.mrb[0].mxu0
  %v132 = vadd.f32 %v50, %v131
  %v133 = vpop.f32.mrb[0].mxu0
  %134 = vmatprep.mubr.f32.mxu0 0.0
  %135 = vmatmul.mubr.f32.gmra.mrb[0].mxu0 %v56
  %v136 = vpop.f32.mrb[0].mxu0
  %v137 = vadd.f32 %v50, %v136
  %v138 = vpop.f32.mrb[0].mxu0
  %139 = vmatprep.mubr.f32.mxu0 0.0
  %140 = vmatmul.mubr.f32.gmra.mrb[0].mxu0 %v59
  %v141 = vpop.f32.mrb[0].mxu0
  %v142 = vadd.f32 %v50, %v141
  %v143 = vpop.f32.mrb[0].mxu0
  %144 = vdwg.mxu0
  %v145 = vmul.f32 %v132, 2.4494898
  %v146 = vmul.f32 %v137, 2.4494898
  %v147 = vmul.f32 %v142, 2.4494898
  %v148 = vld [vmem:[%s2] sm:$0xff]
  %v149 = vld [vmem:[%s2 + $0x8] sm:$0xff]
  %v150 = vld [vmem:[%s2 + $0x10] sm:$0xf]
  %v151 = vadd.f32 %v145, %v148
  %v152 = vadd.f32 %v146, %v149
  %v153 = vadd.f32 %v147, %v150
  %v154 = vld [vmem:[%s1] sm:$0xff]
  %v155 = vld [vmem:[%s1 + $0x8] sm:$0xff]
  %v156 = vld [vmem:[%s9 + $0x8] sm:$0xf]
  %v157 = vld [vmem:[%s10 + $0x1] ss:$0 sm:$0xff]
  %vm158 = vcmask 31744
  %v160 = vsel %vm158, %v154, 0
  %v163 = vsel %vm158, %v155, 0
  %vm165 = vcmask 1043456
  %v167 = vsel %vm165, %v156, 0
  %169 = vmatprep.subr.mxu0 0.0
  %170 = vmatpush1.msra.mxu0 %v167
  %171 = vmatprep.subr.mxu0 0.0
  %172 = vmatpush1.msra.mxu0 0.0
  %173 = vmatprep.subr.mxu0 0.0
  %174 = vmatpush1.msra.mxu0 0.0
  %175 = vmatprep.subr.mxu0 0.0
  %176 = vmatpush1.msra.mxu0 0.0
  %177 = vmatprep.subr.mxu0 0.0
  %178 = vmatpush1.msra.mxu0 0.0
  %179 = vmatprep.subr.mxu0 0.0
  %180 = vmatpush1.msra.mxu0 0.0
  %181 = vmatprep.subr.mxu0 0.0
  %182 = vmatpush1.msra.mxu0 0.0
  %183 = vmatprep.subr.mxu0 0.0
  %184 = vmatpush1.msra.mxu0 0.0
  %185 = vmatprep.subr.mxu0 0.0
  %186 = vmatpush1.msra.mxu0 0.0
  %187 = vmatprep.subr.mxu0 0.0
  %188 = vmatpush1.msra.mxu0 0.0
  %189 = vmatprep.subr.mxu0 0.0
  %190 = vmatpush1.msra.mxu0 0.0
  %191 = vmatprep.subr.mxu0 0.0
  %192 = vmatpush1.msra.mxu0 0.0
  %193 = vmatprep.subr.mxu0 0.0
  %194 = vmatpush1.msra.mxu0 0.0
  %195 = vmatprep.subr.mxu0 0.0
  %196 = vmatpush1.msra.mxu0 0.0
  %197 = vmatprep.subr.mxu0 0.0
  %198 = vmatpush1.msra.mxu0 0.0
  %199 = vmatprep.subr.mxu0 0.0
  %200 = vmatpush1.msra.mxu0 0.0
  %201 = vmatprep.subr.mxu0 0.0
  %202 = vmatpush1.msra.mxu0 0.0
  %203 = vmatprep.subr.mxu0 0.0
  %204 = vmatpush1.msra.mxu0 0.0
  %205 = vmatprep.subr.mxu0 0.0
  %206 = vmatpush1.msra.mxu0 0.0
  %207 = vmatprep.subr.mxu0 0.0
  %208 = vmatpush1.msra.mxu0 0.0
  %209 = vmatprep.subr.mxu0 0.0
  %210 = vmatpush1.msra.mxu0 0.0
  %211 = vmatprep.subr.mxu0 0.0
  %212 = vmatpush1.msra.mxu0 0.0
  %213 = vmatprep.subr.mxu0 0.0
  %214 = vmatpush1.msra.mxu0 0.0
  %215 = vmatprep.subr.mxu0 0.0
  %216 = vmatpush1.msra.mxu0 0.0
  %217 = vmatprep.subr.mxu0 0.0
  %218 = vmatpush1.msra.mxu0 0.0
  %219 = vmatprep.subr.mxu0 0.0
  %220 = vmatpush1.msra.mxu0 0.0
  %221 = vmatprep.subr.mxu0 0.0
  %222 = vmatpush1.msra.mxu0 0.0
  %223 = vmatprep.subr.mxu0 0.0
  %224 = vmatpush1.msra.mxu0 0.0
  %225 = vmatprep.subr.mxu0 0.0
  %226 = vmatpush1.msra.mxu0 0.0
  %227 = vmatprep.subr.mxu0 0.0
  %228 = vmatpush1.msra.mxu0 0.0
  %229 = vmatprep.subr.mxu0 0.0
  %230 = vmatpush1.msra.mxu0 0.0
  %231 = vmatprep.subr.mxu0 0.0
  %232 = vmatpush1.msra.mxu0 0.0
  %233 = vmatprep.mubr.f32.mxu0 0.0
  %234 = vmatmul.mubr.f32.gmra.mrb[0].mxu0 %v160
  %v235 = vpop.f32.mrb[0].mxu0
  %v236 = vadd.f32 %v157, %v235
  %v237 = vpop.f32.mrb[0].mxu0
  %238 = vmatprep.mubr.f32.mxu0 0.0
  %239 = vmatmul.mubr.f32.gmra.mrb[0].mxu0 %v163
  %v240 = vpop.f32.mrb[0].mxu0
  %v241 = vadd.f32 %v157, %v240
  %v242 = vpop.f32.mrb[0].mxu0
  %243 = vdwg.mxu0
  %v244 = vmul.f32 %v236, 2.0
  %v245 = vmul.f32 %v241, 2.0
  %v246 = vld [vmem:[%s3] sm:$0xff]
  %v247 = vld [vmem:[%s3 + $0x8] sm:$0xff]
  %v248 = vadd.f32 %v244, %v246
  %v249 = vadd.f32 %v245, %v247
  %v250 = vld [vmem:[%s5] sm:$0xff]
  %v251 = vld [vmem:[%s5 + $0x8] sm:$0xff]
  %v252 = vld [vmem:[%s5 + $0x10] sm:$0xf]
  %v253 = vld [vmem:[%s8] sm:$0xff]
  %v254 = vld [vmem:[%s8 + $0xa8] sm:$0xff]
  %v255 = vld [vmem:[%s8 + $0x150] sm:$0xff]
  %v256 = vld [vmem:[%s8 + $0x1f8] sm:$0xff]
  %v257 = vld [vmem:[%s10 + $0x2] ss:$0 sm:$0xff]
  %vm258 = vcmask 261120
  %v260 = vsel %vm258, %v151, 0
  %v263 = vsel %vm258, %v152, 0
  %v266 = vsel %vm258, %v153, 0
  %268 = vmatprep.subr.mxu0 0.0
  %269 = vmatpush1.msra.mxu0 %v253
  %270 = vmatprep.subr.mxu0 0.0
  %271 = vmatpush1.msra.mxu0 %v254
  %272 = vmatprep.subr.mxu0 0.0
  %273 = vmatpush1.msra.mxu0 %v255
  %274 = vmatprep.subr.mxu0 0.0
  %275 = vmatpush1.msra.mxu0 %v256
  %276 = vmatprep.subr.mxu0 0.0
  %277 = vmatpush1.msra.mxu0 0.0
  %278 = vmatprep.subr.mxu0 0.0
  %279 = vmatpush1.msra.mxu0 0.0
  %280 = vmatprep.subr.mxu0 0.0
  %281 = vmatpush1.msra.mxu0 0.0
  %282 = vmatprep.subr.mxu0 0.0
  %283 = vmatpush1.msra.mxu0 0.0
  %284 = vmatprep.subr.mxu0 0.0
  %285 = vmatpush1.msra.mxu0 0.0
  %286 = vmatprep.subr.mxu0 0.0
  %287 = vmatpush1.msra.mxu0 0.0
  %288 = vmatprep.subr.mxu0 0.0
  %289 = vmatpush1.msra.mxu0 0.0
  %290 = vmatprep.subr.mxu0 0.0
  %291 = vmatpush1.msra.mxu0 0.0
  %292 = vmatprep.subr.mxu0 0.0
  %293 = vmatpush1.msra.mxu0 0.0
  %294 = vmatprep.subr.mxu0 0.0
  %295 = vmatpush1.msra.mxu0 0.0
  %296 = vmatprep.subr.mxu0 0.0
  %297 = vmatpush1.msra.mxu0 0.0
  %298 = vmatprep.subr.mxu0 0.0
  %299 = vmatpush1.msra.mxu0 0.0
  %300 = vmatprep.subr.mxu0 0.0
  %301 = vmatpush1.msra.mxu0 0.0
  %302 = vmatprep.subr.mxu0 0.0
  %303 = vmatpush1.msra.mxu0 0.0
  %304 = vmatprep.subr.mxu0 0.0
  %305 = vmatpush1.msra.mxu0 0.0
  %306 = vmatprep.subr.mxu0 0.0
  %307 = vmatpush1.msra.mxu0 0.0
  %308 = vmatprep.subr.mxu0 0.0
  %309 = vmatpush1.msra.mxu0 0.0
  %310 = vmatprep.subr.mxu0 0.0
  %311 = vmatpush1.msra.mxu0 0.0
  %312 = vmatprep.subr.mxu0 0.0
  %313 = vmatpush1.msra.mxu0 0.0
  %314 = vmatprep.subr.mxu0 0.0
  %315 = vmatpush1.msra.mxu0 0.0
  %316 = vmatprep.subr.mxu0 0.0
  %317 = vmatpush1.msra.mxu0 0.0
  %318 = vmatprep.subr.mxu0 0.0
  %319 = vmatpush1.msra.mxu0 0.0
  %320 = vmatprep.subr.mxu0 0.0
  %321 = vmatpush1.msra.mxu0 0.0
  %322 = vmatprep.subr.mxu0 0.0
  %323 = vmatpush1.msra.mxu0 0.0
  %324 = vmatprep.subr.mxu0 0.0
  %325 = vmatpush1.msra.mxu0 0.0
  %326 = vmatprep.subr.mxu0 0.0
  %327 = vmatpush1.msra.mxu0 0.0
  %328 = vmatprep.subr.mxu0 0.0
  %329 = vmatpush1.msra.mxu0 0.0
  %330 = vmatprep.subr.mxu0 0.0
  %331 = vmatpush1.msra.mxu0 0.0
  %332 = vmatprep.mubr.f32.mxu0 0.0
  %333 = vmatmul.mubr.f32.gmra.mrb[0].mxu0 %v260
  %v334 = vpop.f32.mrb[0].mxu0
  %v335 = vadd.f32 %v257, %v334
  %v336 = vpop.f32.mrb[0].mxu0
  %337 = vmatprep.mubr.f32.mxu0 0.0
  %338 = vmatmul.mubr.f32.gmra.mrb[0].mxu0 %v263
  %v339 = vpop.f32.mrb[0].mxu0
  %v340 = vadd.f32 %v257, %v339
  %v341 = vpop.f32.mrb[0].mxu0
  %342 = vmatprep.mubr.f32.mxu0 0.0
  %343 = vmatmul.mubr.f32.gmra.mrb[0].mxu0 %v266
  %v344 = vpop.f32.mrb[0].mxu0
  %v345 = vadd.f32 %v257, %v344
  %v346 = vpop.f32.mrb[0].mxu0
  %347 = vdwg.mxu0
  %v348 = vld [vmem:[%s8 + $0x8] sm:$0xff]
  %v349 = vld [vmem:[%s8 + $0xb0] sm:$0xff]
  %v350 = vld [vmem:[%s8 + $0x158] sm:$0xff]
  %v351 = vld [vmem:[%s8 + $0x200] sm:$0xff]
  %v352 = vld [vmem:[%s10 + $0x3] ss:$0 sm:$0xff]
  %353 = vmatprep.subr.mxu0 0.0
  %354 = vmatpush1.msra.mxu0 %v348
  %355 = vmatprep.subr.mxu0 0.0
  %356 = vmatpush1.msra.mxu0 %v349
  %357 = vmatprep.subr.mxu0 0.0
  %358 = vmatpush1.msra.mxu0 %v350
  %359 = vmatprep.subr.mxu0 0.0
  %360 = vmatpush1.msra.mxu0 %v351
  %361 = vmatprep.subr.mxu0 0.0
  %362 = vmatpush1.msra.mxu0 0.0
  %363 = vmatprep.subr.mxu0 0.0
  %364 = vmatpush1.msra.mxu0 0.0
  %365 = vmatprep.subr.mxu0 0.0
  %366 = vmatpush1.msra.mxu0 0.0
  %367 = vmatprep.subr.mxu0 0.0
  %368 = vmatpush1.msra.mxu0 0.0
  %369 = vmatprep.subr.mxu0 0.0
  %370 = vmatpush1.msra.mxu0 0.0
  %371 = vmatprep.subr.mxu0 0.0
  %372 = vmatpush1.msra.mxu0 0.0
  %373 = vmatprep.subr.mxu0 0.0
  %374 = vmatpush1.msra.mxu0 0.0
  %375 = vmatprep.subr.mxu0 0.0
  %376 = vmatpush1.msra.mxu0 0.0
  %377 = vmatprep.subr.mxu0 0.0
  %378 = vmatpush1.msra.mxu0 0.0
  %379 = vmatprep.subr.mxu0 0.0
  %380 = vmatpush1.msra.mxu0 0.0
  %381 = vmatprep.subr.mxu0 0.0
  %382 = vmatpush1.msra.mxu0 0.0
  %383 = vmatprep.subr.mxu0 0.0
  %384 = vmatpush1.msra.mxu0 0.0
  %385 = vmatprep.subr.mxu0 0.0
  %386 = vmatpush1.msra.mxu0 0.0
  %387 = vmatprep.subr.mxu0 0.0
  %388 = vmatpush1.msra.mxu0 0.0
  %389 = vmatprep.subr.mxu0 0.0
  %390 = vmatpush1.msra.mxu0 0.0
  %391 = vmatprep.subr.mxu0 0.0
  %392 = vmatpush1.msra.mxu0 0.0
  %393 = vmatprep.subr.mxu0 0.0
  %394 = vmatpush1.msra.mxu0 0.0
  %395 = vmatprep.subr.mxu0 0.0
  %396 = vmatpush1.msra.mxu0 0.0
  %397 = vmatprep.subr.mxu0 0.0
  %398 = vmatpush1.msra.mxu0 0.0
  %399 = vmatprep.subr.mxu0 0.0
  %400 = vmatpush1.msra.mxu0 0.0
  %401 = vmatprep.subr.mxu0 0.0
  %402 = vmatpush1.msra.mxu0 0.0
  %403 = vmatprep.subr.mxu0 0.0
  %404 = vmatpush1.msra.mxu0 0.0
  %405 = vmatprep.subr.mxu0 0.0
  %406 = vmatpush1.msra.mxu0 0.0
  %407 = vmatprep.subr.mxu0 0.0
  %408 = vmatpush1.msra.mxu0 0.0
  %409 = vmatprep.subr.mxu0 0.0
  %410 = vmatpush1.msra.mxu0 0.0
  %411 = vmatprep.subr.mxu0 0.0
  %412 = vmatpush1.msra.mxu0 0.0
  %413 = vmatprep.subr.mxu0 0.0
  %414 = vmatpush1.msra.mxu0 0.0
  %415 = vmatprep.subr.mxu0 0.0
  %416 = vmatpush1.msra.mxu0 0.0
  %417 = vmatprep.mubr.f32.mxu0 0.0
  %418 = vmatmul.mubr.f32.gmra.mrb[0].mxu0 %v260
  %v419 = vpop.f32.mrb[0].mxu0
  %v420 = vadd.f32 %v352, %v419
  %v421 = vpop.f32.mrb[0].mxu0
  %422 = vmatprep.mubr.f32.mxu0 0.0
  %423 = vmatmul.mubr.f32.gmra.mrb[0].mxu0 %v263
  %v424 = vpop.f32.mrb[0].mxu0
  %v425 = vadd.f32 %v352, %v424
  %v426 = vpop.f32.mrb[0].mxu0
  %427 = vmatprep.mubr.f32.mxu0 0.0
  %428 = vmatmul.mubr.f32.gmra.mrb[0].mxu0 %v266
  %v429 = vpop.f32.mrb[0].mxu0
  %v430 = vadd.f32 %v352, %v429
  %v431 = vpop.f32.mrb[0].mxu0
  %432 = vdwg.mxu0
  %v433 = vld [vmem:[%s8 + $0x10] sm:$0xff]
  %v434 = vld [vmem:[%s8 + $0xb8] sm:$0xff]
  %v435 = vld [vmem:[%s8 + $0x160] sm:$0xff]
  %v436 = vld [vmem:[%s8 + $0x208] sm:$0xff]
  %v437 = vld [vmem:[%s10 + $0x4] ss:$0 sm:$0xff]
  %438 = vmatprep.subr.mxu0 0.0
  %439 = vmatpush1.msra.mxu0 %v433
  %440 = vmatprep.subr.mxu0 0.0
  %441 = vmatpush1.msra.mxu0 %v434
  %442 = vmatprep.subr.mxu0 0.0
  %443 = vmatpush1.msra.mxu0 %v435
  %444 = vmatprep.subr.mxu0 0.0
  %445 = vmatpush1.msra.mxu0 %v436
  %446 = vmatprep.subr.mxu0 0.0
  %447 = vmatpush1.msra.mxu0 0.0
  %448 = vmatprep.subr.mxu0 0.0
  %449 = vmatpush1.msra.mxu0 0.0
  %450 = vmatprep.subr.mxu0 0.0
  %451 = vmatpush1.msra.mxu0 0.0
  %452 = vmatprep.subr.mxu0 0.0
  %453 = vmatpush1.msra.mxu0 0.0
  %454 = vmatprep.subr.mxu0 0.0
  %455 = vmatpush1.msra.mxu0 0.0
  %456 = vmatprep.subr.mxu0 0.0
  %457 = vmatpush1.msra.mxu0 0.0
  %458 = vmatprep.subr.mxu0 0.0
  %459 = vmatpush1.msra.mxu0 0.0
  %460 = vmatprep.subr.mxu0 0.0
  %461 = vmatpush1.msra.mxu0 0.0
  %462 = vmatprep.subr.mxu0 0.0
  %463 = vmatpush1.msra.mxu0 0.0
  %464 = vmatprep.subr.mxu0 0.0
  %465 = vmatpush1.msra.mxu0 0.0
  %466 = vmatprep.subr.mxu0 0.0
  %467 = vmatpush1.msra.mxu0 0.0
  %468 = vmatprep.subr.mxu0 0.0
  %469 = vmatpush1.msra.mxu0 0.0
  %470 = vmatprep.subr.mxu0 0.0
  %471 = vmatpush1.msra.mxu0 0.0
  %472 = vmatprep.subr.mxu0 0.0
  %473 = vmatpush1.msra.mxu0 0.0
  %474 = vmatprep.subr.mxu0 0.0
  %475 = vmatpush1.msra.mxu0 0.0
  %476 = vmatprep.subr.mxu0 0.0
  %477 = vmatpush1.msra.mxu0 0.0
  %478 = vmatprep.subr.mxu0 0.0
  %479 = vmatpush1.msra.mxu0 0.0
  %480 = vmatprep.subr.mxu0 0.0
  %481 = vmatpush1.msra.mxu0 0.0
  %482 = vmatprep.subr.mxu0 0.0
  %483 = vmatpush1.msra.mxu0 0.0
  %484 = vmatprep.subr.mxu0 0.0
  %485 = vmatpush1.msra.mxu0 0.0
  %486 = vmatprep.subr.mxu0 0.0
  %487 = vmatpush1.msra.mxu0 0.0
  %488 = vmatprep.subr.mxu0 0.0
  %489 = vmatpush1.msra.mxu0 0.0
  %490 = vmatprep.subr.mxu0 0.0
  %491 = vmatpush1.msra.mxu0 0.0
  %492 = vmatprep.subr.mxu0 0.0
  %493 = vmatpush1.msra.mxu0 0.0
  %494 = vmatprep.subr.mxu0 0.0
  %495 = vmatpush1.msra.mxu0 0.0
  %496 = vmatprep.subr.mxu0 0.0
  %497 = vmatpush1.msra.mxu0 0.0
  %498 = vmatprep.subr.mxu0 0.0
  %499 = vmatpush1.msra.mxu0 0.0
  %500 = vmatprep.subr.mxu0 0.0
  %501 = vmatpush1.msra.mxu0 0.0
  %502 = vmatprep.mubr.f32.mxu0 0.0
  %503 = vmatmul.mubr.f32.gmra.mrb[0].mxu0 %v260
  %v504 = vpop.f32.mrb[0].mxu0
  %v505 = vadd.f32 %v437, %v504
  %v506 = vpop.f32.mrb[0].mxu0
  %507 = vmatprep.mubr.f32.mxu0 0.0
  %508 = vmatmul.mubr.f32.gmra.mrb[0].mxu0 %v263
  %v509 = vpop.f32.mrb[0].mxu0
  %v510 = vadd.f32 %v437, %v509
  %v511 = vpop.f32.mrb[0].mxu0
  %512 = vmatprep.mubr.f32.mxu0 0.0
  %513 = vmatmul.mubr.f32.gmra.mrb[0].mxu0 %v266
  %v514 = vpop.f32.mrb[0].mxu0
  %v515 = vadd.f32 %v437, %v514
  %v516 = vpop.f32.mrb[0].mxu0
  %517 = vdwg.mxu0
  %v522 = vlaneseq
  %v523 = vshrl.u32 %v522, 7
  %v524 = vsub.s32 0, %v523
  %v525 = vrot.slane %v42, %v524
  %v526 = vlaneseq
  %v527 = vshrl.u32 %v526, 7
  %v528 = vsub.s32 0, %v527
  %v529 = vrot.slane %v43, %v528
  %v530 = vlaneseq
  %v531 = vshrl.u32 %v530, 7
  %v532 = vsub.s32 0, %v531
  %v533 = vrot.slane %v44, %v532
  %v534 = vlaneseq
  %v535 = vshrl.u32 %v534, 7
  %v536 = vsub.s32 0, %v535
  %v537 = vrot.slane %v45, %v536
  %v542 = vmul.f32 %v335, %v525
  %v543 = vmul.f32 %v340, %v525
  %v544 = vmul.f32 %v345, %v525
  %v545 = vmul.f32 %v335, %v529
  %v546 = vmul.f32 %v340, %v529
  %v547 = vmul.f32 %v345, %v529
  %v548 = vmul.f32 %v335, %v533
  %v549 = vmul.f32 %v340, %v533
  %v550 = vmul.f32 %v345, %v533
  %v551 = vmul.f32 %v335, %v537
  %v552 = vmul.f32 %v340, %v537
  %v553 = vmul.f32 %v345, %v537
  %v555 = vsel %vm258, %v542, 0
  %v558 = vsel %vm258, %v543, 0
  %v561 = vsel %vm258, %v544, 0
  %v564 = vsel %vm258, %v420, 0
  %v567 = vsel %vm258, %v425, 0
  %v570 = vsel %vm258, %v430, 0
  %572 = vmatprep.subr.mxu0 0.0
  %573 = vmatpush1.xpose.msra.mxu0 %v564
  %574 = vmatprep.subr.mxu0 0.0
  %575 = vmatpush1.xpose.msra.mxu0 %v567
  %576 = vmatprep.subr.mxu0 0.0
  %577 = vmatpush1.xpose.msra.mxu0 %v570
  %578 = vmatprep.subr.mxu0 0.0
  %579 = vmatpush1.xpose.msra.mxu0 0.0
  %580 = vmatprep.subr.mxu0 0.0
  %581 = vmatpush1.xpose.msra.mxu0 0.0
  %582 = vmatprep.subr.mxu0 0.0
  %583 = vmatpush1.xpose.msra.mxu0 0.0
  %584 = vmatprep.subr.mxu0 0.0
  %585 = vmatpush1.xpose.msra.mxu0 0.0
  %586 = vmatprep.subr.mxu0 0.0
  %587 = vmatpush1.xpose.msra.mxu0 0.0
  %588 = vmatprep.subr.mxu0 0.0
  %589 = vmatpush1.xpose.msra.mxu0 0.0
  %590 = vmatprep.subr.mxu0 0.0
  %591 = vmatpush1.xpose.msra.mxu0 0.0
  %592 = vmatprep.subr.mxu0 0.0
  %593 = vmatpush1.xpose.msra.mxu0 0.0
  %594 = vmatprep.subr.mxu0 0.0
  %595 = vmatpush1.xpose.msra.mxu0 0.0
  %596 = vmatprep.subr.mxu0 0.0
  %597 = vmatpush1.xpose.msra.mxu0 0.0
  %598 = vmatprep.subr.mxu0 0.0
  %599 = vmatpush1.xpose.msra.mxu0 0.0
  %600 = vmatprep.subr.mxu0 0.0
  %601 = vmatpush1.xpose.msra.mxu0 0.0
  %602 = vmatprep.subr.mxu0 0.0
  %603 = vmatpush1.xpose.msra.mxu0 0.0
  %604 = vmatprep.subr.mxu0 0.0
  %605 = vmatpush1.xpose.msra.mxu0 0.0
  %606 = vmatprep.subr.mxu0 0.0
  %607 = vmatpush1.xpose.msra.mxu0 0.0
  %608 = vmatprep.subr.mxu0 0.0
  %609 = vmatpush1.xpose.msra.mxu0 0.0
  %610 = vmatprep.subr.mxu0 0.0
  %611 = vmatpush1.xpose.msra.mxu0 0.0
  %612 = vmatprep.subr.mxu0 0.0
  %613 = vmatpush1.xpose.msra.mxu0 0.0
  %614 = vmatprep.subr.mxu0 0.0
  %615 = vmatpush1.xpose.msra.mxu0 0.0
  %616 = vmatprep.subr.mxu0 0.0
  %617 = vmatpush1.xpose.msra.mxu0 0.0
  %618 = vmatprep.subr.mxu0 0.0
  %619 = vmatpush1.xpose.msra.mxu0 0.0
  %620 = vmatprep.subr.mxu0 0.0
  %621 = vmatpush1.xpose.msra.mxu0 0.0
  %622 = vmatprep.subr.mxu0 0.0
  %623 = vmatpush1.xpose.msra.mxu0 0.0
  %624 = vmatprep.subr.mxu0 0.0
  %625 = vmatpush1.xpose.msra.mxu0 0.0
  %626 = vmatprep.subr.mxu0 0.0
  %627 = vmatpush1.xpose.msra.mxu0 0.0
  %628 = vmatprep.subr.mxu0 0.0
  %629 = vmatpush1.xpose.msra.mxu0 0.0
  %630 = vmatprep.subr.mxu0 0.0
  %631 = vmatpush1.xpose.msra.mxu0 0.0
  %632 = vmatprep.subr.mxu0 0.0
  %633 = vmatpush1.xpose.msra.mxu0 0.0
  %634 = vmatprep.subr.mxu0 0.0
  %635 = vmatpush1.xpose.msra.mxu0 0.0
  %636 = vmatprep.mubr.f32.mxu0 0.0
  %637 = vmatmul.mubr.f32.gmra.mrb[0].mxu0 %v555
  %v638 = vpop.f32.mrb[0].mxu0
  %v639 = vadd.f32 %v250, %v638
  %v640 = vpop.f32.mrb[0].mxu0
  %641 = vmatprep.mubr.f32.mxu0 0.0
  %642 = vmatmul.mubr.f32.gmra.mrb[0].mxu0 %v558
  %v643 = vpop.f32.mrb[0].mxu0
  %v644 = vadd.f32 %v251, %v643
  %v645 = vpop.f32.mrb[0].mxu0
  %646 = vmatprep.mubr.f32.mxu0 0.0
  %647 = vmatmul.mubr.f32.gmra.mrb[0].mxu0 %v561
  %v648 = vpop.f32.mrb[0].mxu0
  %v649 = vadd.f32 %v252, %v648
  %v650 = vpop.f32.mrb[0].mxu0
  %651 = vdwg.mxu0
  %v653 = vsel %vm258, %v545, 0
  %v656 = vsel %vm258, %v546, 0
  %v659 = vsel %vm258, %v547, 0
  %661 = vmatprep.subr.mxu0 0.0
  %662 = vmatpush1.xpose.msra.mxu0 %v564
  %663 = vmatprep.subr.mxu0 0.0
  %664 = vmatpush1.xpose.msra.mxu0 %v567
  %665 = vmatprep.subr.mxu0 0.0
  %666 = vmatpush1.xpose.msra.mxu0 %v570
  %667 = vmatprep.subr.mxu0 0.0
  %668 = vmatpush1.xpose.msra.mxu0 0.0
  %669 = vmatprep.subr.mxu0 0.0
  %670 = vmatpush1.xpose.msra.mxu0 0.0
  %671 = vmatprep.subr.mxu0 0.0
  %672 = vmatpush1.xpose.msra.mxu0 0.0
  %673 = vmatprep.subr.mxu0 0.0
  %674 = vmatpush1.xpose.msra.mxu0 0.0
  %675 = vmatprep.subr.mxu0 0.0
  %676 = vmatpush1.xpose.msra.mxu0 0.0
  %677 = vmatprep.subr.mxu0 0.0
  %678 = vmatpush1.xpose.msra.mxu0 0.0
  %679 = vmatprep.subr.mxu0 0.0
  %680 = vmatpush1.xpose.msra.mxu0 0.0
  %681 = vmatprep.subr.mxu0 0.0
  %682 = vmatpush1.xpose.msra.mxu0 0.0
  %683 = vmatprep.subr.mxu0 0.0
  %684 = vmatpush1.xpose.msra.mxu0 0.0
  %685 = vmatprep.subr.mxu0 0.0
  %686 = vmatpush1.xpose.msra.mxu0 0.0
  %687 = vmatprep.subr.mxu0 0.0
  %688 = vmatpush1.xpose.msra.mxu0 0.0
  %689 = vmatprep.subr.mxu0 0.0
  %690 = vmatpush1.xpose.msra.mxu0 0.0
  %691 = vmatprep.subr.mxu0 0.0
  %692 = vmatpush1.xpose.msra.mxu0 0.0
  %693 = vmatprep.subr.mxu0 0.0
  %694 = vmatpush1.xpose.msra.mxu0 0.0
  %695 = vmatprep.subr.mxu0 0.0
  %696 = vmatpush1.xpose.msra.mxu0 0.0
  %697 = vmatprep.subr.mxu0 0.0
  %698 = vmatpush1.xpose.msra.mxu0 0.0
  %699 = vmatprep.subr.mxu0 0.0
  %700 = vmatpush1.xpose.msra.mxu0 0.0
  %701 = vmatprep.subr.mxu0 0.0
  %702 = vmatpush1.xpose.msra.mxu0 0.0
  %703 = vmatprep.subr.mxu0 0.0
  %704 = vmatpush1.xpose.msra.mxu0 0.0
  %705 = vmatprep.subr.mxu0 0.0
  %706 = vmatpush1.xpose.msra.mxu0 0.0
  %707 = vmatprep.subr.mxu0 0.0
  %708 = vmatpush1.xpose.msra.mxu0 0.0
  %709 = vmatprep.subr.mxu0 0.0
  %710 = vmatpush1.xpose.msra.mxu0 0.0
  %711 = vmatprep.subr.mxu0 0.0
  %712 = vmatpush1.xpose.msra.mxu0 0.0
  %713 = vmatprep.subr.mxu0 0.0
  %714 = vmatpush1.xpose.msra.mxu0 0.0
  %715 = vmatprep.subr.mxu0 0.0
  %716 = vmatpush1.xpose.msra.mxu0 0.0
  %717 = vmatprep.subr.mxu0 0.0
  %718 = vmatpush1.xpose.msra.mxu0 0.0
  %719 = vmatprep.subr.mxu0 0.0
  %720 = vmatpush1.xpose.msra.mxu0 0.0
  %721 = vmatprep.subr.mxu0 0.0
  %722 = vmatpush1.xpose.msra.mxu0 0.0
  %723 = vmatprep.subr.mxu0 0.0
  %724 = vmatpush1.xpose.msra.mxu0 0.0
  %725 = vmatprep.mubr.f32.mxu0 0.0
  %726 = vmatmul.mubr.f32.gmra.mrb[0].mxu0 %v653
  %v727 = vpop.f32.mrb[0].mxu0
  %v728 = vadd.f32 %v250, %v727
  %v729 = vpop.f32.mrb[0].mxu0
  %730 = vmatprep.mubr.f32.mxu0 0.0
  %731 = vmatmul.mubr.f32.gmra.mrb[0].mxu0 %v656
  %v732 = vpop.f32.mrb[0].mxu0
  %v733 = vadd.f32 %v251, %v732
  %v734 = vpop.f32.mrb[0].mxu0
  %735 = vmatprep.mubr.f32.mxu0 0.0
  %736 = vmatmul.mubr.f32.gmra.mrb[0].mxu0 %v659
  %v737 = vpop.f32.mrb[0].mxu0
  %v738 = vadd.f32 %v252, %v737
  %v739 = vpop.f32.mrb[0].mxu0
  %740 = vdwg.mxu0
  %v742 = vsel %vm258, %v548, 0
  %v745 = vsel %vm258, %v549, 0
  %v748 = vsel %vm258, %v550, 0
  %750 = vmatprep.subr.mxu0 0.0
  %751 = vmatpush1.xpose.msra.mxu0 %v564
  %752 = vmatprep.subr.mxu0 0.0
  %753 = vmatpush1.xpose.msra.mxu0 %v567
  %754 = vmatprep.subr.mxu0 0.0
  %755 = vmatpush1.xpose.msra.mxu0 %v570
  %756 = vmatprep.subr.mxu0 0.0
  %757 = vmatpush1.xpose.msra.mxu0 0.0
  %758 = vmatprep.subr.mxu0 0.0
  %759 = vmatpush1.xpose.msra.mxu0 0.0
  %760 = vmatprep.subr.mxu0 0.0
  %761 = vmatpush1.xpose.msra.mxu0 0.0
  %762 = vmatprep.subr.mxu0 0.0
  %763 = vmatpush1.xpose.msra.mxu0 0.0
  %764 = vmatprep.subr.mxu0 0.0
  %765 = vmatpush1.xpose.msra.mxu0 0.0
  %766 = vmatprep.subr.mxu0 0.0
  %767 = vmatpush1.xpose.msra.mxu0 0.0
  %768 = vmatprep.subr.mxu0 0.0
  %769 = vmatpush1.xpose.msra.mxu0 0.0
  %770 = vmatprep.subr.mxu0 0.0
  %771 = vmatpush1.xpose.msra.mxu0 0.0
  %772 = vmatprep.subr.mxu0 0.0
  %773 = vmatpush1.xpose.msra.mxu0 0.0
  %774 = vmatprep.subr.mxu0 0.0
  %775 = vmatpush1.xpose.msra.mxu0 0.0
  %776 = vmatprep.subr.mxu0 0.0
  %777 = vmatpush1.xpose.msra.mxu0 0.0
  %778 = vmatprep.subr.mxu0 0.0
  %779 = vmatpush1.xpose.msra.mxu0 0.0
  %780 = vmatprep.subr.mxu0 0.0
  %781 = vmatpush1.xpose.msra.mxu0 0.0
  %782 = vmatprep.subr.mxu0 0.0
  %783 = vmatpush1.xpose.msra.mxu0 0.0
  %784 = vmatprep.subr.mxu0 0.0
  %785 = vmatpush1.xpose.msra.mxu0 0.0
  %786 = vmatprep.subr.mxu0 0.0
  %787 = vmatpush1.xpose.msra.mxu0 0.0
  %788 = vmatprep.subr.mxu0 0.0
  %789 = vmatpush1.xpose.msra.mxu0 0.0
  %790 = vmatprep.subr.mxu0 0.0
  %791 = vmatpush1.xpose.msra.mxu0 0.0
  %792 = vmatprep.subr.mxu0 0.0
  %793 = vmatpush1.xpose.msra.mxu0 0.0
  %794 = vmatprep.subr.mxu0 0.0
  %795 = vmatpush1.xpose.msra.mxu0 0.0
  %796 = vmatprep.subr.mxu0 0.0
  %797 = vmatpush1.xpose.msra.mxu0 0.0
  %798 = vmatprep.subr.mxu0 0.0
  %799 = vmatpush1.xpose.msra.mxu0 0.0
  %800 = vmatprep.subr.mxu0 0.0
  %801 = vmatpush1.xpose.msra.mxu0 0.0
  %802 = vmatprep.subr.mxu0 0.0
  %803 = vmatpush1.xpose.msra.mxu0 0.0
  %804 = vmatprep.subr.mxu0 0.0
  %805 = vmatpush1.xpose.msra.mxu0 0.0
  %806 = vmatprep.subr.mxu0 0.0
  %807 = vmatpush1.xpose.msra.mxu0 0.0
  %808 = vmatprep.subr.mxu0 0.0
  %809 = vmatpush1.xpose.msra.mxu0 0.0
  %810 = vmatprep.subr.mxu0 0.0
  %811 = vmatpush1.xpose.msra.mxu0 0.0
  %812 = vmatprep.subr.mxu0 0.0
  %813 = vmatpush1.xpose.msra.mxu0 0.0
  %814 = vmatprep.mubr.f32.mxu0 0.0
  %815 = vmatmul.mubr.f32.gmra.mrb[0].mxu0 %v742
  %v816 = vpop.f32.mrb[0].mxu0
  %v817 = vadd.f32 %v250, %v816
  %v818 = vpop.f32.mrb[0].mxu0
  %819 = vmatprep.mubr.f32.mxu0 0.0
  %820 = vmatmul.mubr.f32.gmra.mrb[0].mxu0 %v745
  %v821 = vpop.f32.mrb[0].mxu0
  %v822 = vadd.f32 %v251, %v821
  %v823 = vpop.f32.mrb[0].mxu0
  %824 = vmatprep.mubr.f32.mxu0 0.0
  %825 = vmatmul.mubr.f32.gmra.mrb[0].mxu0 %v748
  %v826 = vpop.f32.mrb[0].mxu0
  %v827 = vadd.f32 %v252, %v826
  %v828 = vpop.f32.mrb[0].mxu0
  %829 = vdwg.mxu0
  %v831 = vsel %vm258, %v551, 0
  %v834 = vsel %vm258, %v552, 0
  %v837 = vsel %vm258, %v553, 0
  %839 = vmatprep.subr.mxu0 0.0
  %840 = vmatpush1.xpose.msra.mxu0 %v564
  %841 = vmatprep.subr.mxu0 0.0
  %842 = vmatpush1.xpose.msra.mxu0 %v567
  %843 = vmatprep.subr.mxu0 0.0
  %844 = vmatpush1.xpose.msra.mxu0 %v570
  %845 = vmatprep.subr.mxu0 0.0
  %846 = vmatpush1.xpose.msra.mxu0 0.0
  %847 = vmatprep.subr.mxu0 0.0
  %848 = vmatpush1.xpose.msra.mxu0 0.0
  %849 = vmatprep.subr.mxu0 0.0
  %850 = vmatpush1.xpose.msra.mxu0 0.0
  %851 = vmatprep.subr.mxu0 0.0
  %852 = vmatpush1.xpose.msra.mxu0 0.0
  %853 = vmatprep.subr.mxu0 0.0
  %854 = vmatpush1.xpose.msra.mxu0 0.0
  %855 = vmatprep.subr.mxu0 0.0
  %856 = vmatpush1.xpose.msra.mxu0 0.0
  %857 = vmatprep.subr.mxu0 0.0
  %858 = vmatpush1.xpose.msra.mxu0 0.0
  %859 = vmatprep.subr.mxu0 0.0
  %860 = vmatpush1.xpose.msra.mxu0 0.0
  %861 = vmatprep.subr.mxu0 0.0
  %862 = vmatpush1.xpose.msra.mxu0 0.0
  %863 = vmatprep.subr.mxu0 0.0
  %864 = vmatpush1.xpose.msra.mxu0 0.0
  %865 = vmatprep.subr.mxu0 0.0
  %866 = vmatpush1.xpose.msra.mxu0 0.0
  %867 = vmatprep.subr.mxu0 0.0
  %868 = vmatpush1.xpose.msra.mxu0 0.0
  %869 = vmatprep.subr.mxu0 0.0
  %870 = vmatpush1.xpose.msra.mxu0 0.0
  %871 = vmatprep.subr.mxu0 0.0
  %872 = vmatpush1.xpose.msra.mxu0 0.0
  %873 = vmatprep.subr.mxu0 0.0
  %874 = vmatpush1.xpose.msra.mxu0 0.0
  %875 = vmatprep.subr.mxu0 0.0
  %876 = vmatpush1.xpose.msra.mxu0 0.0
  %877 = vmatprep.subr.mxu0 0.0
  %878 = vmatpush1.xpose.msra.mxu0 0.0
  %879 = vmatprep.subr.mxu0 0.0
  %880 = vmatpush1.xpose.msra.mxu0 0.0
  %881 = vmatprep.subr.mxu0 0.0
  %882 = vmatpush1.xpose.msra.mxu0 0.0
  %883 = vmatprep.subr.mxu0 0.0
  %884 = vmatpush1.xpose.msra.mxu0 0.0
  %885 = vmatprep.subr.mxu0 0.0
  %886 = vmatpush1.xpose.msra.mxu0 0.0
  %887 = vmatprep.subr.mxu0 0.0
  %888 = vmatpush1.xpose.msra.mxu0 0.0
  %889 = vmatprep.subr.mxu0 0.0
  %890 = vmatpush1.xpose.msra.mxu0 0.0
  %891 = vmatprep.subr.mxu0 0.0
  %892 = vmatpush1.xpose.msra.mxu0 0.0
  %893 = vmatprep.subr.mxu0 0.0
  %894 = vmatpush1.xpose.msra.mxu0 0.0
  %895 = vmatprep.subr.mxu0 0.0
  %896 = vmatpush1.xpose.msra.mxu0 0.0
  %897 = vmatprep.subr.mxu0 0.0
  %898 = vmatpush1.xpose.msra.mxu0 0.0
  %899 = vmatprep.subr.mxu0 0.0
  %900 = vmatpush1.xpose.msra.mxu0 0.0
  %901 = vmatprep.subr.mxu0 0.0
  %902 = vmatpush1.xpose.msra.mxu0 0.0
  %903 = vmatprep.mubr.f32.mxu0 0.0
  %904 = vmatmul.mubr.f32.gmra.mrb[0].mxu0 %v831
  %v905 = vpop.f32.mrb[0].mxu0
  %v906 = vadd.f32 %v250, %v905
  %v907 = vpop.f32.mrb[0].mxu0
  %908 = vmatprep.mubr.f32.mxu0 0.0
  %909 = vmatmul.mubr.f32.gmra.mrb[0].mxu0 %v834
  %v910 = vpop.f32.mrb[0].mxu0
  %v911 = vadd.f32 %v251, %v910
  %v912 = vpop.f32.mrb[0].mxu0
  %913 = vmatprep.mubr.f32.mxu0 0.0
  %914 = vmatmul.mubr.f32.gmra.mrb[0].mxu0 %v837
  %v915 = vpop.f32.mrb[0].mxu0
  %v916 = vadd.f32 %v252, %v915
  %v917 = vpop.f32.mrb[0].mxu0
  %918 = vdwg.mxu0
  %vm919 = vcmask 162816
  %v920 = vsel %vm919, %v639, -inf
  %921 = vmax.xlane.f32.xlu0 %v920
  %v922 = vpop.xlane.xlu0 %921
  %v923 = vsel %vm919, %v644, -inf
  %924 = vmax.xlane.f32.xlu0 %v923
  %v925 = vpop.xlane.xlu0 %924
  %vm926 = vcmask 158720
  %v927 = vsel %vm926, %v649, -inf
  %928 = vmax.xlane.f32.xlu0 %v927
  %v929 = vpop.xlane.xlu0 %928
  %v930 = vsel %vm919, %v728, -inf
  %931 = vmax.xlane.f32.xlu0 %v930
  %v932 = vpop.xlane.xlu0 %931
  %v933 = vsel %vm919, %v733, -inf
  %934 = vmax.xlane.f32.xlu0 %v933
  %v935 = vpop.xlane.xlu0 %934
  %v936 = vsel %vm926, %v738, -inf
  %937 = vmax.xlane.f32.xlu0 %v936
  %v938 = vpop.xlane.xlu0 %937
  %v939 = vsel %vm919, %v817, -inf
  %940 = vmax.xlane.f32.xlu0 %v939
  %v941 = vpop.xlane.xlu0 %940
  %v942 = vsel %vm919, %v822, -inf
  %943 = vmax.xlane.f32.xlu0 %v942
  %v944 = vpop.xlane.xlu0 %943
  %v945 = vsel %vm926, %v827, -inf
  %946 = vmax.xlane.f32.xlu0 %v945
  %v947 = vpop.xlane.xlu0 %946
  %v948 = vsel %vm919, %v906, -inf
  %949 = vmax.xlane.f32.xlu0 %v948
  %v950 = vpop.xlane.xlu0 %949
  %v951 = vsel %vm919, %v911, -inf
  %952 = vmax.xlane.f32.xlu0 %v951
  %v953 = vpop.xlane.xlu0 %952
  %v954 = vsel %vm926, %v916, -inf
  %955 = vmax.xlane.f32.xlu0 %v954
  %v956 = vpop.xlane.xlu0 %955
  %v957 = vsub.f32 %v639, %v922
  %v958 = vsub.f32 %v644, %v925
  %v959 = vsub.f32 %v649, %v929
  %v960 = vsub.f32 %v728, %v932
  %v961 = vsub.f32 %v733, %v935
  %v962 = vsub.f32 %v738, %v938
  %v963 = vsub.f32 %v817, %v941
  %v964 = vsub.f32 %v822, %v944
  %v965 = vsub.f32 %v827, %v947
  %v966 = vsub.f32 %v906, %v950
  %v967 = vsub.f32 %v911, %v953
  %v968 = vsub.f32 %v916, %v956
  %v969 = vmul.f32 %v957, 1.442695
  %v970 = vpow.pop %v969
  %v971 = vmul.f32 %v958, 1.442695
  %v972 = vpow.pop %v971
  %v973 = vmul.f32 %v959, 1.442695
  %v974 = vpow.pop %v973
  %v975 = vmul.f32 %v960, 1.442695
  %v976 = vpow.pop %v975
  %v977 = vmul.f32 %v961, 1.442695
  %v978 = vpow.pop %v977
  %v979 = vmul.f32 %v962, 1.442695
  %v980 = vpow.pop %v979
  %v981 = vmul.f32 %v963, 1.442695
  %v982 = vpow.pop %v981
  %v983 = vmul.f32 %v964, 1.442695
  %v984 = vpow.pop %v983
  %v985 = vmul.f32 %v965, 1.442695
  %v986 = vpow.pop %v985
  %v987 = vmul.f32 %v966, 1.442695
  %v988 = vpow.pop %v987
  %v989 = vmul.f32 %v967, 1.442695
  %v990 = vpow.pop %v989
  %v991 = vmul.f32 %v968, 1.442695
  %v992 = vpow.pop %v991
  %v993 = vsel %vm919, %v970, 0.0
  %994 = vadd.xlane.f32.xlu0 %v993
  %v995 = vpop.xlane.xlu0 %994
  %v996 = vsel %vm919, %v972, 0.0
  %997 = vadd.xlane.f32.xlu0 %v996
  %v998 = vpop.xlane.xlu0 %997
  %v999 = vsel %vm926, %v974, 0.0
  %1000 = vadd.xlane.f32.xlu0 %v999
  %v1001 = vpop.xlane.xlu0 %1000
  %v1002 = vsel %vm919, %v976, 0.0
  %1003 = vadd.xlane.f32.xlu0 %v1002
  %v1004 = vpop.xlane.xlu0 %1003
  %v1005 = vsel %vm919, %v978, 0.0
  %1006 = vadd.xlane.f32.xlu0 %v1005
  %v1007 = vpop.xlane.xlu0 %1006
  %v1008 = vsel %vm926, %v980, 0.0
  %1009 = vadd.xlane.f32.xlu0 %v1008
  %v1010 = vpop.xlane.xlu0 %1009
  %v1011 = vsel %vm919, %v982, 0.0
  %1012 = vadd.xlane.f32.xlu0 %v1011
  %v1013 = vpop.xlane.xlu0 %1012
  %v1014 = vsel %vm919, %v984, 0.0
  %1015 = vadd.xlane.f32.xlu0 %v1014
  %v1016 = vpop.xlane.xlu0 %1015
  %v1017 = vsel %vm926, %v986, 0.0
  %1018 = vadd.xlane.f32.xlu0 %v1017
  %v1019 = vpop.xlane.xlu0 %1018
  %v1020 = vsel %vm919, %v988, 0.0
  %1021 = vadd.xlane.f32.xlu0 %v1020
  %v1022 = vpop.xlane.xlu0 %1021
  %v1023 = vsel %vm919, %v990, 0.0
  %1024 = vadd.xlane.f32.xlu0 %v1023
  %v1025 = vpop.xlane.xlu0 %1024
  %v1026 = vsel %vm926, %v992, 0.0
  %1027 = vadd.xlane.f32.xlu0 %v1026
  %v1028 = vpop.xlane.xlu0 %1027
  %v1029 = vrcp.pop %v995
  %v1030 = vrcp.pop %v998
  %v1031 = vrcp.pop %v1001
  %v1032 = vrcp.pop %v1004
  %v1033 = vrcp.pop %v1007
  %v1034 = vrcp.pop %v1010
  %v1035 = vrcp.pop %v1013
  %v1036 = vrcp.pop %v1016
  %v1037 = vrcp.pop %v1019
  %v1038 = vrcp.pop %v1022
  %v1039 = vrcp.pop %v1025
  %v1040 = vrcp.pop %v1028
  %v1041 = vmul.f32 %v970, %v1029
  %v1042 = vmul.f32 %v972, %v1030
  %v1043 = vmul.f32 %v974, %v1031
  %v1044 = vmul.f32 %v976, %v1032
  %v1045 = vmul.f32 %v978, %v1033
  %v1046 = vmul.f32 %v980, %v1034
  %v1047 = vmul.f32 %v982, %v1035
  %v1048 = vmul.f32 %v984, %v1036
  %v1049 = vmul.f32 %v986, %v1037
  %v1050 = vmul.f32 %v988, %v1038
  %v1051 = vmul.f32 %v990, %v1039
  %v1052 = vmul.f32 %v992, %v1040
  %v1057 = vlaneseq
  %v1058 = vshrl.u32 %v1057, 7
  %v1059 = vsub.s32 0, %v1058
  %v1060 = vrot.slane %v38, %v1059
  %v1061 = vlaneseq
  %v1062 = vshrl.u32 %v1061, 7
  %v1063 = vsub.s32 0, %v1062
  %v1064 = vrot.slane %v39, %v1063
  %v1065 = vlaneseq
  %v1066 = vshrl.u32 %v1065, 7
  %v1067 = vsub.s32 0, %v1066
  %v1068 = vrot.slane %v40, %v1067
  %v1069 = vlaneseq
  %v1070 = vshrl.u32 %v1069, 7
  %v1071 = vsub.s32 0, %v1070
  %v1072 = vrot.slane %v41, %v1071
  %v1077 = vmul.f32 %v505, %v1060
  %v1078 = vmul.f32 %v510, %v1060
  %v1079 = vmul.f32 %v515, %v1060
  %v1080 = vmul.f32 %v505, %v1064
  %v1081 = vmul.f32 %v510, %v1064
  %v1082 = vmul.f32 %v515, %v1064
  %v1083 = vmul.f32 %v505, %v1068
  %v1084 = vmul.f32 %v510, %v1068
  %v1085 = vmul.f32 %v515, %v1068
  %v1086 = vmul.f32 %v505, %v1072
  %v1087 = vmul.f32 %v510, %v1072
  %v1088 = vmul.f32 %v515, %v1072
  %v1090 = vsel %vm919, %v1041, 0
  %v1093 = vsel %vm919, %v1042, 0
  %v1096 = vsel %vm919, %v1043, 0
  %v1099 = vsel %vm165, %v1079, 0
  %1101 = vmatprep.subr.mxu0 0.0
  %1102 = vmatpush1.msra.mxu0 %v1077
  %1103 = vmatprep.subr.mxu0 0.0
  %1104 = vmatpush1.msra.mxu0 %v1078
  %1105 = vmatprep.subr.mxu0 0.0
  %1106 = vmatpush1.msra.mxu0 %v1099
  %1107 = vmatprep.subr.mxu0 0.0
  %1108 = vmatpush1.msra.mxu0 0.0
  %1109 = vmatprep.subr.mxu0 0.0
  %1110 = vmatpush1.msra.mxu0 0.0
  %1111 = vmatprep.subr.mxu0 0.0
  %1112 = vmatpush1.msra.mxu0 0.0
  %1113 = vmatprep.subr.mxu0 0.0
  %1114 = vmatpush1.msra.mxu0 0.0
  %1115 = vmatprep.subr.mxu0 0.0
  %1116 = vmatpush1.msra.mxu0 0.0
  %1117 = vmatprep.subr.mxu0 0.0
  %1118 = vmatpush1.msra.mxu0 0.0
  %1119 = vmatprep.subr.mxu0 0.0
  %1120 = vmatpush1.msra.mxu0 0.0
  %1121 = vmatprep.subr.mxu0 0.0
  %1122 = vmatpush1.msra.mxu0 0.0
  %1123 = vmatprep.subr.mxu0 0.0
  %1124 = vmatpush1.msra.mxu0 0.0
  %1125 = vmatprep.subr.mxu0 0.0
  %1126 = vmatpush1.msra.mxu0 0.0
  %1127 = vmatprep.subr.mxu0 0.0
  %1128 = vmatpush1.msra.mxu0 0.0
  %1129 = vmatprep.subr.mxu0 0.0
  %1130 = vmatpush1.msra.mxu0 0.0
  %1131 = vmatprep.subr.mxu0 0.0
  %1132 = vmatpush1.msra.mxu0 0.0
  %1133 = vmatprep.subr.mxu0 0.0
  %1134 = vmatpush1.msra.mxu0 0.0
  %1135 = vmatprep.subr.mxu0 0.0
  %1136 = vmatpush1.msra.mxu0 0.0
  %1137 = vmatprep.subr.mxu0 0.0
  %1138 = vmatpush1.msra.mxu0 0.0
  %1139 = vmatprep.subr.mxu0 0.0
  %1140 = vmatpush1.msra.mxu0 0.0
  %1141 = vmatprep.subr.mxu0 0.0
  %1142 = vmatpush1.msra.mxu0 0.0
  %1143 = vmatprep.subr.mxu0 0.0
  %1144 = vmatpush1.msra.mxu0 0.0
  %1145 = vmatprep.subr.mxu0 0.0
  %1146 = vmatpush1.msra.mxu0 0.0
  %1147 = vmatprep.subr.mxu0 0.0
  %1148 = vmatpush1.msra.mxu0 0.0
  %1149 = vmatprep.subr.mxu0 0.0
  %1150 = vmatpush1.msra.mxu0 0.0
  %1151 = vmatprep.subr.mxu0 0.0
  %1152 = vmatpush1.msra.mxu0 0.0
  %1153 = vmatprep.subr.mxu0 0.0
  %1154 = vmatpush1.msra.mxu0 0.0
  %1155 = vmatprep.subr.mxu0 0.0
  %1156 = vmatpush1.msra.mxu0 0.0
  %1157 = vmatprep.subr.mxu0 0.0
  %1158 = vmatpush1.msra.mxu0 0.0
  %1159 = vmatprep.subr.mxu0 0.0
  %1160 = vmatpush1.msra.mxu0 0.0
  %1161 = vmatprep.subr.mxu0 0.0
  %1162 = vmatpush1.msra.mxu0 0.0
  %1163 = vmatprep.subr.mxu0 0.0
  %1164 = vmatpush1.msra.mxu0 0.0
  %1165 = vmatprep.mubr.f32.mxu0 0.0
  %1166 = vmatmul.mubr.f32.gmra.mrb[0].mxu0 %v1090
  %v1167 = vpop.f32.mrb[0].mxu0
  %v1168 = vadd.f32 0.0, %v1167
  %v1169 = vpop.f32.mrb[0].mxu0
  %1170 = vmatprep.mubr.f32.mxu0 0.0
  %1171 = vmatmul.mubr.f32.gmra.mrb[0].mxu0 %v1093
  %v1172 = vpop.f32.mrb[0].mxu0
  %v1173 = vadd.f32 0.0, %v1172
  %v1174 = vpop.f32.mrb[0].mxu0
  %1175 = vmatprep.mubr.f32.mxu0 0.0
  %1176 = vmatmul.mubr.f32.gmra.mrb[0].mxu0 %v1096
  %v1177 = vpop.f32.mrb[0].mxu0
  %v1178 = vadd.f32 0.0, %v1177
  %v1179 = vpop.f32.mrb[0].mxu0
  %1180 = vdwg.mxu0
  %v1182 = vsel %vm919, %v1044, 0
  %v1185 = vsel %vm919, %v1045, 0
  %v1188 = vsel %vm919, %v1046, 0
  %v1191 = vsel %vm165, %v1082, 0
  %1193 = vmatprep.subr.mxu0 0.0
  %1194 = vmatpush1.msra.mxu0 %v1080
  %1195 = vmatprep.subr.mxu0 0.0
  %1196 = vmatpush1.msra.mxu0 %v1081
  %1197 = vmatprep.subr.mxu0 0.0
  %1198 = vmatpush1.msra.mxu0 %v1191
  %1199 = vmatprep.subr.mxu0 0.0
  %1200 = vmatpush1.msra.mxu0 0.0
  %1201 = vmatprep.subr.mxu0 0.0
  %1202 = vmatpush1.msra.mxu0 0.0
  %1203 = vmatprep.subr.mxu0 0.0
  %1204 = vmatpush1.msra.mxu0 0.0
  %1205 = vmatprep.subr.mxu0 0.0
  %1206 = vmatpush1.msra.mxu0 0.0
  %1207 = vmatprep.subr.mxu0 0.0
  %1208 = vmatpush1.msra.mxu0 0.0
  %1209 = vmatprep.subr.mxu0 0.0
  %1210 = vmatpush1.msra.mxu0 0.0
  %1211 = vmatprep.subr.mxu0 0.0
  %1212 = vmatpush1.msra.mxu0 0.0
  %1213 = vmatprep.subr.mxu0 0.0
  %1214 = vmatpush1.msra.mxu0 0.0
  %1215 = vmatprep.subr.mxu0 0.0
  %1216 = vmatpush1.msra.mxu0 0.0
  %1217 = vmatprep.subr.mxu0 0.0
  %1218 = vmatpush1.msra.mxu0 0.0
  %1219 = vmatprep.subr.mxu0 0.0
  %1220 = vmatpush1.msra.mxu0 0.0
  %1221 = vmatprep.subr.mxu0 0.0
  %1222 = vmatpush1.msra.mxu0 0.0
  %1223 = vmatprep.subr.mxu0 0.0
  %1224 = vmatpush1.msra.mxu0 0.0
  %1225 = vmatprep.subr.mxu0 0.0
  %1226 = vmatpush1.msra.mxu0 0.0
  %1227 = vmatprep.subr.mxu0 0.0
  %1228 = vmatpush1.msra.mxu0 0.0
  %1229 = vmatprep.subr.mxu0 0.0
  %1230 = vmatpush1.msra.mxu0 0.0
  %1231 = vmatprep.subr.mxu0 0.0
  %1232 = vmatpush1.msra.mxu0 0.0
  %1233 = vmatprep.subr.mxu0 0.0
  %1234 = vmatpush1.msra.mxu0 0.0
  %1235 = vmatprep.subr.mxu0 0.0
  %1236 = vmatpush1.msra.mxu0 0.0
  %1237 = vmatprep.subr.mxu0 0.0
  %1238 = vmatpush1.msra.mxu0 0.0
  %1239 = vmatprep.subr.mxu0 0.0
  %1240 = vmatpush1.msra.mxu0 0.0
  %1241 = vmatprep.subr.mxu0 0.0
  %1242 = vmatpush1.msra.mxu0 0.0
  %1243 = vmatprep.subr.mxu0 0.0
  %1244 = vmatpush1.msra.mxu0 0.0
  %1245 = vmatprep.subr.mxu0 0.0
  %1246 = vmatpush1.msra.mxu0 0.0
  %1247 = vmatprep.subr.mxu0 0.0
  %1248 = vmatpush1.msra.mxu0 0.0
  %1249 = vmatprep.subr.mxu0 0.0
  %1250 = vmatpush1.msra.mxu0 0.0
  %1251 = vmatprep.subr.mxu0 0.0
  %1252 = vmatpush1.msra.mxu0 0.0
  %1253 = vmatprep.subr.mxu0 0.0
  %1254 = vmatpush1.msra.mxu0 0.0
  %1255 = vmatprep.subr.mxu0 0.0
  %1256 = vmatpush1.msra.mxu0 0.0
  %1257 = vmatprep.mubr.f32.mxu0 0.0
  %1258 = vmatmul.mubr.f32.gmra.mrb[0].mxu0 %v1182
  %v1259 = vpop.f32.mrb[0].mxu0
  %v1260 = vadd.f32 0.0, %v1259
  %v1261 = vpop.f32.mrb[0].mxu0
  %1262 = vmatprep.mubr.f32.mxu0 0.0
  %1263 = vmatmul.mubr.f32.gmra.mrb[0].mxu0 %v1185
  %v1264 = vpop.f32.mrb[0].mxu0
  %v1265 = vadd.f32 0.0, %v1264
  %v1266 = vpop.f32.mrb[0].mxu0
  %1267 = vmatprep.mubr.f32.mxu0 0.0
  %1268 = vmatmul.mubr.f32.gmra.mrb[0].mxu0 %v1188
  %v1269 = vpop.f32.mrb[0].mxu0
  %v1270 = vadd.f32 0.0, %v1269
  %v1271 = vpop.f32.mrb[0].mxu0
  %1272 = vdwg.mxu0
  %v1274 = vsel %vm919, %v1047, 0
  %v1277 = vsel %vm919, %v1048, 0
  %v1280 = vsel %vm919, %v1049, 0
  %v1283 = vsel %vm165, %v1085, 0
  %1285 = vmatprep.subr.mxu0 0.0
  %1286 = vmatpush1.msra.mxu0 %v1083
  %1287 = vmatprep.subr.mxu0 0.0
  %1288 = vmatpush1.msra.mxu0 %v1084
  %1289 = vmatprep.subr.mxu0 0.0
  %1290 = vmatpush1.msra.mxu0 %v1283
  %1291 = vmatprep.subr.mxu0 0.0
  %1292 = vmatpush1.msra.mxu0 0.0
  %1293 = vmatprep.subr.mxu0 0.0
  %1294 = vmatpush1.msra.mxu0 0.0
  %1295 = vmatprep.subr.mxu0 0.0
  %1296 = vmatpush1.msra.mxu0 0.0
  %1297 = vmatprep.subr.mxu0 0.0
  %1298 = vmatpush1.msra.mxu0 0.0
  %1299 = vmatprep.subr.mxu0 0.0
  %1300 = vmatpush1.msra.mxu0 0.0
  %1301 = vmatprep.subr.mxu0 0.0
  %1302 = vmatpush1.msra.mxu0 0.0
  %1303 = vmatprep.subr.mxu0 0.0
  %1304 = vmatpush1.msra.mxu0 0.0
  %1305 = vmatprep.subr.mxu0 0.0
  %1306 = vmatpush1.msra.mxu0 0.0
  %1307 = vmatprep.subr.mxu0 0.0
  %1308 = vmatpush1.msra.mxu0 0.0
  %1309 = vmatprep.subr.mxu0 0.0
  %1310 = vmatpush1.msra.mxu0 0.0
  %1311 = vmatprep.subr.mxu0 0.0
  %1312 = vmatpush1.msra.mxu0 0.0
  %1313 = vmatprep.subr.mxu0 0.0
  %1314 = vmatpush1.msra.mxu0 0.0
  %1315 = vmatprep.subr.mxu0 0.0
  %1316 = vmatpush1.msra.mxu0 0.0
  %1317 = vmatprep.subr.mxu0 0.0
  %1318 = vmatpush1.msra.mxu0 0.0
  %1319 = vmatprep.subr.mxu0 0.0
  %1320 = vmatpush1.msra.mxu0 0.0
  %1321 = vmatprep.subr.mxu0 0.0
  %1322 = vmatpush1.msra.mxu0 0.0
  %1323 = vmatprep.subr.mxu0 0.0
  %1324 = vmatpush1.msra.mxu0 0.0
  %1325 = vmatprep.subr.mxu0 0.0
  %1326 = vmatpush1.msra.mxu0 0.0
  %1327 = vmatprep.subr.mxu0 0.0
  %1328 = vmatpush1.msra.mxu0 0.0
  %1329 = vmatprep.subr.mxu0 0.0
  %1330 = vmatpush1.msra.mxu0 0.0
  %1331 = vmatprep.subr.mxu0 0.0
  %1332 = vmatpush1.msra.mxu0 0.0
  %1333 = vmatprep.subr.mxu0 0.0
  %1334 = vmatpush1.msra.mxu0 0.0
  %1335 = vmatprep.subr.mxu0 0.0
  %1336 = vmatpush1.msra.mxu0 0.0
  %1337 = vmatprep.subr.mxu0 0.0
  %1338 = vmatpush1.msra.mxu0 0.0
  %1339 = vmatprep.subr.mxu0 0.0
  %1340 = vmatpush1.msra.mxu0 0.0
  %1341 = vmatprep.subr.mxu0 0.0
  %1342 = vmatpush1.msra.mxu0 0.0
  %1343 = vmatprep.subr.mxu0 0.0
  %1344 = vmatpush1.msra.mxu0 0.0
  %1345 = vmatprep.subr.mxu0 0.0
  %1346 = vmatpush1.msra.mxu0 0.0
  %1347 = vmatprep.subr.mxu0 0.0
  %1348 = vmatpush1.msra.mxu0 0.0
  %1349 = vmatprep.mubr.f32.mxu0 0.0
  %1350 = vmatmul.mubr.f32.gmra.mrb[0].mxu0 %v1274
  %v1351 = vpop.f32.mrb[0].mxu0
  %v1352 = vadd.f32 0.0, %v1351
  %v1353 = vpop.f32.mrb[0].mxu0
  %1354 = vmatprep.mubr.f32.mxu0 0.0
  %1355 = vmatmul.mubr.f32.gmra.mrb[0].mxu0 %v1277
  %v1356 = vpop.f32.mrb[0].mxu0
  %v1357 = vadd.f32 0.0, %v1356
  %v1358 = vpop.f32.mrb[0].mxu0
  %1359 = vmatprep.mubr.f32.mxu0 0.0
  %1360 = vmatmul.mubr.f32.gmra.mrb[0].mxu0 %v1280
  %v1361 = vpop.f32.mrb[0].mxu0
  %v1362 = vadd.f32 0.0, %v1361
  %v1363 = vpop.f32.mrb[0].mxu0
  %1364 = vdwg.mxu0
  %v1366 = vsel %vm919, %v1050, 0
  %v1369 = vsel %vm919, %v1051, 0
  %v1372 = vsel %vm919, %v1052, 0
  %v1375 = vsel %vm165, %v1088, 0
  %1377 = vmatprep.subr.mxu0 0.0
  %1378 = vmatpush1.msra.mxu0 %v1086
  %1379 = vmatprep.subr.mxu0 0.0
  %1380 = vmatpush1.msra.mxu0 %v1087
  %1381 = vmatprep.subr.mxu0 0.0
  %1382 = vmatpush1.msra.mxu0 %v1375
  %1383 = vmatprep.subr.mxu0 0.0
  %1384 = vmatpush1.msra.mxu0 0.0
  %1385 = vmatprep.subr.mxu0 0.0
  %1386 = vmatpush1.msra.mxu0 0.0
  %1387 = vmatprep.subr.mxu0 0.0
  %1388 = vmatpush1.msra.mxu0 0.0
  %1389 = vmatprep.subr.mxu0 0.0
  %1390 = vmatpush1.msra.mxu0 0.0
  %1391 = vmatprep.subr.mxu0 0.0
  %1392 = vmatpush1.msra.mxu0 0.0
  %1393 = vmatprep.subr.mxu0 0.0
  %1394 = vmatpush1.msra.mxu0 0.0
  %1395 = vmatprep.subr.mxu0 0.0
  %1396 = vmatpush1.msra.mxu0 0.0
  %1397 = vmatprep.subr.mxu0 0.0
  %1398 = vmatpush1.msra.mxu0 0.0
  %1399 = vmatprep.subr.mxu0 0.0
  %1400 = vmatpush1.msra.mxu0 0.0
  %1401 = vmatprep.subr.mxu0 0.0
  %1402 = vmatpush1.msra.mxu0 0.0
  %1403 = vmatprep.subr.mxu0 0.0
  %1404 = vmatpush1.msra.mxu0 0.0
  %1405 = vmatprep.subr.mxu0 0.0
  %1406 = vmatpush1.msra.mxu0 0.0
  %1407 = vmatprep.subr.mxu0 0.0
  %1408 = vmatpush1.msra.mxu0 0.0
  %1409 = vmatprep.subr.mxu0 0.0
  %1410 = vmatpush1.msra.mxu0 0.0
  %1411 = vmatprep.subr.mxu0 0.0
  %1412 = vmatpush1.msra.mxu0 0.0
  %1413 = vmatprep.subr.mxu0 0.0
  %1414 = vmatpush1.msra.mxu0 0.0
  %1415 = vmatprep.subr.mxu0 0.0
  %1416 = vmatpush1.msra.mxu0 0.0
  %1417 = vmatprep.subr.mxu0 0.0
  %1418 = vmatpush1.msra.mxu0 0.0
  %1419 = vmatprep.subr.mxu0 0.0
  %1420 = vmatpush1.msra.mxu0 0.0
  %1421 = vmatprep.subr.mxu0 0.0
  %1422 = vmatpush1.msra.mxu0 0.0
  %1423 = vmatprep.subr.mxu0 0.0
  %1424 = vmatpush1.msra.mxu0 0.0
  %1425 = vmatprep.subr.mxu0 0.0
  %1426 = vmatpush1.msra.mxu0 0.0
  %1427 = vmatprep.subr.mxu0 0.0
  %1428 = vmatpush1.msra.mxu0 0.0
  %1429 = vmatprep.subr.mxu0 0.0
  %1430 = vmatpush1.msra.mxu0 0.0
  %1431 = vmatprep.subr.mxu0 0.0
  %1432 = vmatpush1.msra.mxu0 0.0
  %1433 = vmatprep.subr.mxu0 0.0
  %1434 = vmatpush1.msra.mxu0 0.0
  %1435 = vmatprep.subr.mxu0 0.0
  %1436 = vmatpush1.msra.mxu0 0.0
  %1437 = vmatprep.subr.mxu0 0.0
  %1438 = vmatpush1.msra.mxu0 0.0
  %1439 = vmatprep.subr.mxu0 0.0
  %1440 = vmatpush1.msra.mxu0 0.0
  %1441 = vmatprep.mubr.f32.mxu0 0.0
  %1442 = vmatmul.mubr.f32.gmra.mrb[0].mxu0 %v1366
  %v1443 = vpop.f32.mrb[0].mxu0
  %v1444 = vadd.f32 0.0, %v1443
  %v1445 = vpop.f32.mrb[0].mxu0
  %1446 = vmatprep.mubr.f32.mxu0 0.0
  %1447 = vmatmul.mubr.f32.gmra.mrb[0].mxu0 %v1369
  %v1448 = vpop.f32.mrb[0].mxu0
  %v1449 = vadd.f32 0.0, %v1448
  %v1450 = vpop.f32.mrb[0].mxu0
  %1451 = vmatprep.mubr.f32.mxu0 0.0
  %1452 = vmatmul.mubr.f32.gmra.mrb[0].mxu0 %v1372
  %v1453 = vpop.f32.mrb[0].mxu0
  %v1454 = vadd.f32 0.0, %v1453
  %v1455 = vpop.f32.mrb[0].mxu0
  %1456 = vdwg.mxu0
  %v1457 = vsel %vm258, %v1168, 0.0
  %v1458 = vsel %vm258, %v1260, 0.0
  %v1459 = vadd.f32 %v1457, %v1458
  %v1460 = vsel %vm258, %v1352, 0.0
  %v1461 = vadd.f32 %v1459, %v1460
  %v1462 = vsel %vm258, %v1444, 0.0
  %v1463 = vadd.f32 %v1461, %v1462
  %v1464 = vsel %vm258, %v1173, 0.0
  %v1465 = vsel %vm258, %v1265, 0.0
  %v1466 = vadd.f32 %v1464, %v1465
  %v1467 = vsel %vm258, %v1357, 0.0
  %v1468 = vadd.f32 %v1466, %v1467
  %v1469 = vsel %vm258, %v1449, 0.0
  %v1470 = vadd.f32 %v1468, %v1469
  %vm1471 = vcmask 257024
  %v1472 = vsel %vm1471, %v1178, 0.0
  %v1473 = vsel %vm1471, %v1270, 0.0
  %v1474 = vadd.f32 %v1472, %v1473
  %v1475 = vsel %vm1471, %v1362, 0.0
  %v1476 = vadd.f32 %v1474, %v1475
  %v1477 = vsel %vm1471, %v1454, 0.0
  %v1478 = vadd.f32 %v1476, %v1477
  %v1479 = vld [vmem:[%s8 + $0x18] sm:$0xff]
  %v1480 = vld [vmem:[%s8 + $0xc0] sm:$0xff]
  %v1481 = vld [vmem:[%s8 + $0x168] sm:$0xff]
  %v1482 = vld [vmem:[%s8 + $0x210] sm:$0xff]
  %v1483 = vld [vmem:[%s10 + $0x5] ss:$0 sm:$0xff]
  %v1485 = vsel %vm258, %v1463, 0
  %v1488 = vsel %vm258, %v1470, 0
  %v1491 = vsel %vm258, %v1478, 0
  %1493 = vmatprep.subr.mxu0 0.0
  %1494 = vmatpush1.msra.mxu0 %v1479
  %1495 = vmatprep.subr.mxu0 0.0
  %1496 = vmatpush1.msra.mxu0 %v1480
  %1497 = vmatprep.subr.mxu0 0.0
  %1498 = vmatpush1.msra.mxu0 %v1481
  %1499 = vmatprep.subr.mxu0 0.0
  %1500 = vmatpush1.msra.mxu0 %v1482
  %1501 = vmatprep.subr.mxu0 0.0
  %1502 = vmatpush1.msra.mxu0 0.0
  %1503 = vmatprep.subr.mxu0 0.0
  %1504 = vmatpush1.msra.mxu0 0.0
  %1505 = vmatprep.subr.mxu0 0.0
  %1506 = vmatpush1.msra.mxu0 0.0
  %1507 = vmatprep.subr.mxu0 0.0
  %1508 = vmatpush1.msra.mxu0 0.0
  %1509 = vmatprep.subr.mxu0 0.0
  %1510 = vmatpush1.msra.mxu0 0.0
  %1511 = vmatprep.subr.mxu0 0.0
  %1512 = vmatpush1.msra.mxu0 0.0
  %1513 = vmatprep.subr.mxu0 0.0
  %1514 = vmatpush1.msra.mxu0 0.0
  %1515 = vmatprep.subr.mxu0 0.0
  %1516 = vmatpush1.msra.mxu0 0.0
  %1517 = vmatprep.subr.mxu0 0.0
  %1518 = vmatpush1.msra.mxu0 0.0
  %1519 = vmatprep.subr.mxu0 0.0
  %1520 = vmatpush1.msra.mxu0 0.0
  %1521 = vmatprep.subr.mxu0 0.0
  %1522 = vmatpush1.msra.mxu0 0.0
  %1523 = vmatprep.subr.mxu0 0.0
  %1524 = vmatpush1.msra.mxu0 0.0
  %1525 = vmatprep.subr.mxu0 0.0
  %1526 = vmatpush1.msra.mxu0 0.0
  %1527 = vmatprep.subr.mxu0 0.0
  %1528 = vmatpush1.msra.mxu0 0.0
  %1529 = vmatprep.subr.mxu0 0.0
  %1530 = vmatpush1.msra.mxu0 0.0
  %1531 = vmatprep.subr.mxu0 0.0
  %1532 = vmatpush1.msra.mxu0 0.0
  %1533 = vmatprep.subr.mxu0 0.0
  %1534 = vmatpush1.msra.mxu0 0.0
  %1535 = vmatprep.subr.mxu0 0.0
  %1536 = vmatpush1.msra.mxu0 0.0
  %1537 = vmatprep.subr.mxu0 0.0
  %1538 = vmatpush1.msra.mxu0 0.0
  %1539 = vmatprep.subr.mxu0 0.0
  %1540 = vmatpush1.msra.mxu0 0.0
  %1541 = vmatprep.subr.mxu0 0.0
  %1542 = vmatpush1.msra.mxu0 0.0
  %1543 = vmatprep.subr.mxu0 0.0
  %1544 = vmatpush1.msra.mxu0 0.0
  %1545 = vmatprep.subr.mxu0 0.0
  %1546 = vmatpush1.msra.mxu0 0.0
  %1547 = vmatprep.subr.mxu0 0.0
  %1548 = vmatpush1.msra.mxu0 0.0
  %1549 = vmatprep.subr.mxu0 0.0
  %1550 = vmatpush1.msra.mxu0 0.0
  %1551 = vmatprep.subr.mxu0 0.0
  %1552 = vmatpush1.msra.mxu0 0.0
  %1553 = vmatprep.subr.mxu0 0.0
  %1554 = vmatpush1.msra.mxu0 0.0
  %1555 = vmatprep.subr.mxu0 0.0
  %1556 = vmatpush1.msra.mxu0 0.0
  %1557 = vmatprep.mubr.f32.mxu0 0.0
  %1558 = vmatmul.mubr.f32.gmra.mrb[0].mxu0 %v1485
  %v1559 = vpop.f32.mrb[0].mxu0
  %v1560 = vadd.f32 %v1483, %v1559
  %v1561 = vpop.f32.mrb[0].mxu0
  %1562 = vmatprep.mubr.f32.mxu0 0.0
  %1563 = vmatmul.mubr.f32.gmra.mrb[0].mxu0 %v1488
  %v1564 = vpop.f32.mrb[0].mxu0
  %v1565 = vadd.f32 %v1483, %v1564
  %v1566 = vpop.f32.mrb[0].mxu0
  %1567 = vmatprep.mubr.f32.mxu0 0.0
  %1568 = vmatmul.mubr.f32.gmra.mrb[0].mxu0 %v1491
  %v1569 = vpop.f32.mrb[0].mxu0
  %v1570 = vadd.f32 %v1483, %v1569
  %v1571 = vpop.f32.mrb[0].mxu0
  %1572 = vdwg.mxu0
  %v1573 = vadd.f32 %v151, %v1560
  %v1574 = vadd.f32 %v152, %v1565
  %v1575 = vadd.f32 %v153, %v1570
  %v1576 = vsel %vm258, %v1573, 0.0
  %1577 = vadd.xlane.f32.xlu0 %v1576
  %v1578 = vpop.xlane.xlu0 %1577
  %v1579 = vsel %vm258, %v1574, 0.0
  %1580 = vadd.xlane.f32.xlu0 %v1579
  %v1581 = vpop.xlane.xlu0 %1580
  %v1582 = vsel %vm1471, %v1575, 0.0
  %1583 = vadd.xlane.f32.xlu0 %v1582
  %v1584 = vpop.xlane.xlu0 %1583
  %v1585 = vrcp.pop 32.0
  %v1586 = vmul.f32 %v1578, %v1585
  %v1587 = vmul.f32 %v1581, %v1585
  %v1588 = vmul.f32 %v1584, %v1585
  %v1589 = vsub.f32 %v1573, %v1586
  %v1590 = vsub.f32 %v1574, %v1587
  %v1591 = vsub.f32 %v1575, %v1588
  %v1592 = vmul.f32 %v1589, %v1589
  %v1593 = vmul.f32 %v1590, %v1590
  %v1594 = vmul.f32 %v1591, %v1591
  %v1595 = vsel %vm258, %v1592, 0.0
  %1596 = vadd.xlane.f32.xlu0 %v1595
  %v1597 = vpop.xlane.xlu0 %1596
  %v1598 = vsel %vm258, %v1593, 0.0
  %1599 = vadd.xlane.f32.xlu0 %v1598
  %v1600 = vpop.xlane.xlu0 %1599
  %v1601 = vsel %vm1471, %v1594, 0.0
  %1602 = vadd.xlane.f32.xlu0 %v1601
  %v1603 = vpop.xlane.xlu0 %1602
  %v1604 = vmul.f32 %v1597, %v1585
  %v1605 = vmul.f32 %v1600, %v1585
  %v1606 = vmul.f32 %v1603, %v1585
  %v1607 = vadd.f32 %v1604, 1e-05
  %v1608 = vadd.f32 %v1605, 1e-05
  %v1609 = vadd.f32 %v1606, 1e-05
  %v1610 = vrsqrt.pop %v1607
  %v1611 = vrsqrt.pop %v1608
  %v1612 = vrsqrt.pop %v1609
  %v1613 = vmul.f32 %v1589, %v1610
  %v1614 = vmul.f32 %v1590, %v1611
  %v1615 = vmul.f32 %v1591, %v1612
  %v1616 = vld [vmem:[%s10 + $0x20] ss:$0 sm:$0xff]
  %v1617 = vmul.f32 %v1613, %v1616
  %v1618 = vmul.f32 %v1614, %v1616
  %v1619 = vmul.f32 %v1615, %v1616
  %v1620 = vld [vmem:[%s10 + $0x21] ss:$0 sm:$0xff]
  %v1621 = vadd.f32 %v1617, %v1620
  %v1622 = vadd.f32 %v1618, %v1620
  %v1623 = vadd.f32 %v1619, %v1620
  %v1624 = vld [vmem:[%s8 + $0x20] sm:$0xff]
  %v1625 = vld [vmem:[%s8 + $0x28] sm:$0xff]
  %v1626 = vld [vmem:[%s8 + $0x30] sm:$0xff]
  %v1627 = vld [vmem:[%s8 + $0x38] sm:$0xff]
  %v1628 = vld [vmem:[%s8 + $0xc8] sm:$0xff]
  %v1629 = vld [vmem:[%s8 + $0xd0] sm:$0xff]
  %v1630 = vld [vmem:[%s8 + $0xd8] sm:$0xff]
  %v1631 = vld [vmem:[%s8 + $0xe0] sm:$0xff]
  %v1632 = vld [vmem:[%s8 + $0x170] sm:$0xff]
  %v1633 = vld [vmem:[%s8 + $0x178] sm:$0xff]
  %v1634 = vld [vmem:[%s8 + $0x180] sm:$0xff]
  %v1635 = vld [vmem:[%s8 + $0x188] sm:$0xff]
  %v1636 = vld [vmem:[%s8 + $0x218] sm:$0xff]
  %v1637 = vld [vmem:[%s8 + $0x220] sm:$0xff]
  %v1638 = vld [vmem:[%s8 + $0x228] sm:$0xff]
  %v1639 = vld [vmem:[%s8 + $0x230] sm:$0xff]
  %s1640 = scalar_lea.vmem %s10, 6
  %v1641 = vld [vmem:[%s1640] ss:$8 sm:$0xf]
  %v1643 = vlaneseq
  %v1644 = vshrl.u32 %v1643, 7
  %v1645 = vsub.s32 0, %v1644
  %v1646 = vrot.slane %v1641, %v1645
  %v1647 = vlaneseq
  %v1648 = vshrl.u32 %v1647, 7
  %v1649 = vsub.s32 1, %v1648
  %v1650 = vrot.slane %v1641, %v1649
  %v1651 = vlaneseq
  %v1652 = vshrl.u32 %v1651, 7
  %v1653 = vsub.s32 2, %v1652
  %v1654 = vrot.slane %v1641, %v1653
  %v1655 = vlaneseq
  %v1656 = vshrl.u32 %v1655, 7
  %v1657 = vsub.s32 3, %v1656
  %v1658 = vrot.slane %v1641, %v1657
  %v1664 = vsel %vm258, %v1621, 0
  %v1667 = vsel %vm258, %v1622, 0
  %v1670 = vsel %vm258, %v1623, 0
  %1672 = vmatprep.subr.mxu0 %v1625
  %1673 = vmatpush1.msra.mxu0 %v1624
  %1674 = vmatprep.subr.mxu0 %v1629
  %1675 = vmatpush1.msra.mxu0 %v1628
  %1676 = vmatprep.subr.mxu0 %v1633
  %1677 = vmatpush1.msra.mxu0 %v1632
  %1678 = vmatprep.subr.mxu0 %v1637
  %1679 = vmatpush1.msra.mxu0 %v1636
  %1680 = vmatprep.subr.mxu0 0.0
  %1681 = vmatpush1.msra.mxu0 0.0
  %1682 = vmatprep.subr.mxu0 0.0
  %1683 = vmatpush1.msra.mxu0 0.0
  %1684 = vmatprep.subr.mxu0 0.0
  %1685 = vmatpush1.msra.mxu0 0.0
  %1686 = vmatprep.subr.mxu0 0.0
  %1687 = vmatpush1.msra.mxu0 0.0
  %1688 = vmatprep.subr.mxu0 0.0
  %1689 = vmatpush1.msra.mxu0 0.0
  %1690 = vmatprep.subr.mxu0 0.0
  %1691 = vmatpush1.msra.mxu0 0.0
  %1692 = vmatprep.subr.mxu0 0.0
  %1693 = vmatpush1.msra.mxu0 0.0
  %1694 = vmatprep.subr.mxu0 0.0
  %1695 = vmatpush1.msra.mxu0 0.0
  %1696 = vmatprep.subr.mxu0 0.0
  %1697 = vmatpush1.msra.mxu0 0.0
  %1698 = vmatprep.subr.mxu0 0.0
  %1699 = vmatpush1.msra.mxu0 0.0
  %1700 = vmatprep.subr.mxu0 0.0
  %1701 = vmatpush1.msra.mxu0 0.0
  %1702 = vmatprep.subr.mxu0 0.0
  %1703 = vmatpush1.msra.mxu0 0.0
  %1704 = vmatprep.subr.mxu0 0.0
  %1705 = vmatpush1.msra.mxu0 0.0
  %1706 = vmatprep.subr.mxu0 0.0
  %1707 = vmatpush1.msra.mxu0 0.0
  %1708 = vmatprep.subr.mxu0 0.0
  %1709 = vmatpush1.msra.mxu0 0.0
  %1710 = vmatprep.subr.mxu0 0.0
  %1711 = vmatpush1.msra.mxu0 0.0
  %1712 = vmatprep.subr.mxu0 0.0
  %1713 = vmatpush1.msra.mxu0 0.0
  %1714 = vmatprep.subr.mxu0 0.0
  %1715 = vmatpush1.msra.mxu0 0.0
  %1716 = vmatprep.subr.mxu0 0.0
  %1717 = vmatpush1.msra.mxu0 0.0
  %1718 = vmatprep.subr.mxu0 0.0
  %1719 = vmatpush1.msra.mxu0 0.0
  %1720 = vmatprep.subr.mxu0 0.0
  %1721 = vmatpush1.msra.mxu0 0.0
  %1722 = vmatprep.subr.mxu0 0.0
  %1723 = vmatpush1.msra.mxu0 0.0
  %1724 = vmatprep.subr.mxu0 0.0
  %1725 = vmatpush1.msra.mxu0 0.0
  %1726 = vmatprep.subr.mxu0 0.0
  %1727 = vmatpush1.msra.mxu0 0.0
  %1728 = vmatprep.subr.mxu0 0.0
  %1729 = vmatpush1.msra.mxu0 0.0
  %1730 = vmatprep.subr.mxu0 0.0
  %1731 = vmatpush1.msra.mxu0 0.0
  %1732 = vmatprep.subr.mxu0 0.0
  %1733 = vmatpush1.msra.mxu0 0.0
  %1734 = vmatprep.subr.mxu0 0.0
  %1735 = vmatpush1.msra.mxu0 0.0
  %1736 = vmatprep.mubr.f32.mxu0 0.0
  %1737 = vmatmul.mubr.f32.gmra.mrb[0].mxu0 %v1664
  %v1738 = vpop.f32.mrb[0].mxu0
  %v1739 = vadd.f32 %v1646, %v1738
  %v1740 = vpop.f32.mrb[0].mxu0
  %v1741 = vadd.f32 %v1650, %v1740
  %1742 = vmatprep.mubr.f32.mxu0 0.0
  %1743 = vmatmul.mubr.f32.gmra.mrb[0].mxu0 %v1667
  %v1744 = vpop.f32.mrb[0].mxu0
  %v1745 = vadd.f32 %v1646, %v1744
  %v1746 = vpop.f32.mrb[0].mxu0
  %v1747 = vadd.f32 %v1650, %v1746
  %1748 = vmatprep.mubr.f32.mxu0 0.0
  %1749 = vmatmul.mubr.f32.gmra.mrb[0].mxu0 %v1670
  %v1750 = vpop.f32.mrb[0].mxu0
  %v1751 = vadd.f32 %v1646, %v1750
  %v1752 = vpop.f32.mrb[0].mxu0
  %v1753 = vadd.f32 %v1650, %v1752
  %1754 = vdwg.mxu0
  %1755 = vmatprep.subr.mxu0 %v1627
  %1756 = vmatpush1.msra.mxu0 %v1626
  %1757 = vmatprep.subr.mxu0 %v1631
  %1758 = vmatpush1.msra.mxu0 %v1630
  %1759 = vmatprep.subr.mxu0 %v1635
  %1760 = vmatpush1.msra.mxu0 %v1634
  %1761 = vmatprep.subr.mxu0 %v1639
  %1762 = vmatpush1.msra.mxu0 %v1638
  %1763 = vmatprep.subr.mxu0 0.0
  %1764 = vmatpush1.msra.mxu0 0.0
  %1765 = vmatprep.subr.mxu0 0.0
  %1766 = vmatpush1.msra.mxu0 0.0
  %1767 = vmatprep.subr.mxu0 0.0
  %1768 = vmatpush1.msra.mxu0 0.0
  %1769 = vmatprep.subr.mxu0 0.0
  %1770 = vmatpush1.msra.mxu0 0.0
  %1771 = vmatprep.subr.mxu0 0.0
  %1772 = vmatpush1.msra.mxu0 0.0
  %1773 = vmatprep.subr.mxu0 0.0
  %1774 = vmatpush1.msra.mxu0 0.0
  %1775 = vmatprep.subr.mxu0 0.0
  %1776 = vmatpush1.msra.mxu0 0.0
  %1777 = vmatprep.subr.mxu0 0.0
  %1778 = vmatpush1.msra.mxu0 0.0
  %1779 = vmatprep.subr.mxu0 0.0
  %1780 = vmatpush1.msra.mxu0 0.0
  %1781 = vmatprep.subr.mxu0 0.0
  %1782 = vmatpush1.msra.mxu0 0.0
  %1783 = vmatprep.subr.mxu0 0.0
  %1784 = vmatpush1.msra.mxu0 0.0
  %1785 = vmatprep.subr.mxu0 0.0
  %1786 = vmatpush1.msra.mxu0 0.0
  %1787 = vmatprep.subr.mxu0 0.0
  %1788 = vmatpush1.msra.mxu0 0.0
  %1789 = vmatprep.subr.mxu0 0.0
  %1790 = vmatpush1.msra.mxu0 0.0
  %1791 = vmatprep.subr.mxu0 0.0
  %1792 = vmatpush1.msra.mxu0 0.0
  %1793 = vmatprep.subr.mxu0 0.0
  %1794 = vmatpush1.msra.mxu0 0.0
  %1795 = vmatprep.subr.mxu0 0.0
  %1796 = vmatpush1.msra.mxu0 0.0
  %1797 = vmatprep.subr.mxu0 0.0
  %1798 = vmatpush1.msra.mxu0 0.0
  %1799 = vmatprep.subr.mxu0 0.0
  %1800 = vmatpush1.msra.mxu0 0.0
  %1801 = vmatprep.subr.mxu0 0.0
  %1802 = vmatpush1.msra.mxu0 0.0
  %1803 = vmatprep.subr.mxu0 0.0
  %1804 = vmatpush1.msra.mxu0 0.0
  %1805 = vmatprep.subr.mxu0 0.0
  %1806 = vmatpush1.msra.mxu0 0.0
  %1807 = vmatprep.subr.mxu0 0.0
  %1808 = vmatpush1.msra.mxu0 0.0
  %1809 = vmatprep.subr.mxu0 0.0
  %1810 = vmatpush1.msra.mxu0 0.0
  %1811 = vmatprep.subr.mxu0 0.0
  %1812 = vmatpush1.msra.mxu0 0.0
  %1813 = vmatprep.subr.mxu0 0.0
  %1814 = vmatpush1.msra.mxu0 0.0
  %1815 = vmatprep.subr.mxu0 0.0
  %1816 = vmatpush1.msra.mxu0 0.0
  %1817 = vmatprep.subr.mxu0 0.0
  %1818 = vmatpush1.msra.mxu0 0.0
  %1819 = vmatprep.mubr.f32.mxu0 0.0
  %1820 = vmatmul.mubr.f32.gmra.mrb[0].mxu0 %v1664
  %v1821 = vpop.f32.mrb[0].mxu0
  %v1822 = vadd.f32 %v1654, %v1821
  %v1823 = vpop.f32.mrb[0].mxu0
  %v1824 = vadd.f32 %v1658, %v1823
  %1825 = vmatprep.mubr.f32.mxu0 0.0
  %1826 = vmatmul.mubr.f32.gmra.mrb[0].mxu0 %v1667
  %v1827 = vpop.f32.mrb[0].mxu0
  %v1828 = vadd.f32 %v1654, %v1827
  %v1829 = vpop.f32.mrb[0].mxu0
  %v1830 = vadd.f32 %v1658, %v1829
  %1831 = vmatprep.mubr.f32.mxu0 0.0
  %1832 = vmatmul.mubr.f32.gmra.mrb[0].mxu0 %v1670
  %v1833 = vpop.f32.mrb[0].mxu0
  %v1834 = vadd.f32 %v1654, %v1833
  %v1835 = vpop.f32.mrb[0].mxu0
  %v1836 = vadd.f32 %v1658, %v1835
  %1837 = vdwg.mxu0
  %v1838 = vmax.f32 %v1739, 0.0
  %v1839 = vmax.f32 %v1741, 0.0
  %v1840 = vmax.f32 %v1822, 0.0
  %v1841 = vmax.f32 %v1824, 0.0
  %v1842 = vmax.f32 %v1745, 0.0
  %v1843 = vmax.f32 %v1747, 0.0
  %v1844 = vmax.f32 %v1828, 0.0
  %v1845 = vmax.f32 %v1830, 0.0
  %v1846 = vmax.f32 %v1751, 0.0
  %v1847 = vmax.f32 %v1753, 0.0
  %v1848 = vmax.f32 %v1834, 0.0
  %v1849 = vmax.f32 %v1836, 0.0
  %v1850 = vld [vmem:[%s9 + $0x10] sm:$0xff]
  %v1851 = vld [vmem:[%s9 + $0x18] sm:$0xff]
  %v1852 = vld [vmem:[%s9 + $0x20] sm:$0xff]
  %v1853 = vld [vmem:[%s9 + $0x28] sm:$0xff]
  %v1854 = vld [vmem:[%s9 + $0x30] sm:$0xff]
  %v1855 = vld [vmem:[%s9 + $0x38] sm:$0xff]
  %v1856 = vld [vmem:[%s9 + $0x40] sm:$0xff]
  %v1857 = vld [vmem:[%s9 + $0x48] sm:$0xff]
  %v1858 = vld [vmem:[%s9 + $0x50] sm:$0xff]
  %v1859 = vld [vmem:[%s9 + $0x58] sm:$0xff]
  %v1860 = vld [vmem:[%s9 + $0x60] sm:$0xff]
  %v1861 = vld [vmem:[%s9 + $0x68] sm:$0xff]
  %v1862 = vld [vmem:[%s9 + $0x70] sm:$0xff]
  %v1863 = vld [vmem:[%s9 + $0x78] sm:$0xff]
  %v1864 = vld [vmem:[%s9 + $0x80] sm:$0xff]
  %v1865 = vld [vmem:[%s9 + $0x88] sm:$0xff]
  %v1866 = vld [vmem:[%s9 + $0x90] sm:$0xff]
  %v1867 = vld [vmem:[%s9 + $0x98] sm:$0xff]
  %v1868 = vld [vmem:[%s9 + $0xa0] sm:$0xff]
  %v1869 = vld [vmem:[%s9 + $0xa8] sm:$0xff]
  %v1870 = vld [vmem:[%s9 + $0xb0] sm:$0xff]
  %v1871 = vld [vmem:[%s9 + $0xb8] sm:$0xff]
  %v1872 = vld [vmem:[%s9 + $0xc0] sm:$0xff]
  %v1873 = vld [vmem:[%s9 + $0xc8] sm:$0xff]
  %v1874 = vld [vmem:[%s9 + $0xd0] sm:$0xff]
  %v1875 = vld [vmem:[%s9 + $0xd8] sm:$0xff]
  %v1876 = vld [vmem:[%s9 + $0xe0] sm:$0xff]
  %v1877 = vld [vmem:[%s9 + $0xe8] sm:$0xff]
  %v1878 = vld [vmem:[%s9 + $0xf0] sm:$0xff]
  %v1879 = vld [vmem:[%s9 + $0xf8] sm:$0xff]
  %v1880 = vld [vmem:[%s9 + $0x100] sm:$0xff]
  %v1881 = vld [vmem:[%s9 + $0x108] sm:$0xff]
  %v1882 = vld [vmem:[%s9 + $0x110] sm:$0xff]
  %v1883 = vld [vmem:[%s9 + $0x118] sm:$0xff]
  %v1884 = vld [vmem:[%s9 + $0x120] sm:$0xff]
  %v1885 = vld [vmem:[%s9 + $0x128] sm:$0xff]
  %v1886 = vld [vmem:[%s9 + $0x130] sm:$0xff]
  %v1887 = vld [vmem:[%s9 + $0x138] sm:$0xff]
  %v1888 = vld [vmem:[%s9 + $0x140] sm:$0xff]
  %v1889 = vld [vmem:[%s9 + $0x148] sm:$0xff]
  %v1890 = vld [vmem:[%s9 + $0x150] sm:$0xff]
  %v1891 = vld [vmem:[%s9 + $0x158] sm:$0xff]
  %v1892 = vld [vmem:[%s9 + $0x160] sm:$0xff]
  %v1893 = vld [vmem:[%s9 + $0x168] sm:$0xff]
  %v1894 = vld [vmem:[%s9 + $0x170] sm:$0xff]
  %v1895 = vld [vmem:[%s9 + $0x178] sm:$0xff]
  %v1896 = vld [vmem:[%s9 + $0x180] sm:$0xff]
  %v1897 = vld [vmem:[%s9 + $0x188] sm:$0xff]
  %v1898 = vld [vmem:[%s9 + $0x190] sm:$0xff]
  %v1899 = vld [vmem:[%s9 + $0x198] sm:$0xff]
  %v1900 = vld [vmem:[%s9 + $0x1a0] sm:$0xff]
  %v1901 = vld [vmem:[%s9 + $0x1a8] sm:$0xff]
  %v1902 = vld [vmem:[%s9 + $0x1b0] sm:$0xff]
  %v1903 = vld [vmem:[%s9 + $0x1b8] sm:$0xff]
  %v1904 = vld [vmem:[%s9 + $0x1c0] sm:$0xff]
  %v1905 = vld [vmem:[%s9 + $0x1c8] sm:$0xff]
  %v1906 = vld [vmem:[%s9 + $0x1d0] sm:$0xff]
  %v1907 = vld [vmem:[%s9 + $0x1d8] sm:$0xff]
  %v1908 = vld [vmem:[%s9 + $0x1e0] sm:$0xff]
  %v1909 = vld [vmem:[%s9 + $0x1e8] sm:$0xff]
  %v1910 = vld [vmem:[%s9 + $0x1f0] sm:$0xff]
  %v1911 = vld [vmem:[%s9 + $0x1f8] sm:$0xff]
  %v1912 = vld [vmem:[%s9 + $0x200] sm:$0xff]
  %v1913 = vld [vmem:[%s9 + $0x208] sm:$0xff]
  %v1914 = vld [vmem:[%s10 + $0x7] ss:$0 sm:$0xff]
  %1915 = vmatprep.subr.mxu0 0.0
  %1916 = vmatpush1.msra.mxu0 %v1850
  %1917 = vmatprep.subr.mxu0 0.0
  %1918 = vmatpush1.msra.mxu0 %v1851
  %1919 = vmatprep.subr.mxu0 0.0
  %1920 = vmatpush1.msra.mxu0 %v1852
  %1921 = vmatprep.subr.mxu0 0.0
  %1922 = vmatpush1.msra.mxu0 %v1853
  %1923 = vmatprep.subr.mxu0 0.0
  %1924 = vmatpush1.msra.mxu0 %v1854
  %1925 = vmatprep.subr.mxu0 0.0
  %1926 = vmatpush1.msra.mxu0 %v1855
  %1927 = vmatprep.subr.mxu0 0.0
  %1928 = vmatpush1.msra.mxu0 %v1856
  %1929 = vmatprep.subr.mxu0 0.0
  %1930 = vmatpush1.msra.mxu0 %v1857
  %1931 = vmatprep.subr.mxu0 0.0
  %1932 = vmatpush1.msra.mxu0 %v1858
  %1933 = vmatprep.subr.mxu0 0.0
  %1934 = vmatpush1.msra.mxu0 %v1859
  %1935 = vmatprep.subr.mxu0 0.0
  %1936 = vmatpush1.msra.mxu0 %v1860
  %1937 = vmatprep.subr.mxu0 0.0
  %1938 = vmatpush1.msra.mxu0 %v1861
  %1939 = vmatprep.subr.mxu0 0.0
  %1940 = vmatpush1.msra.mxu0 %v1862
  %1941 = vmatprep.subr.mxu0 0.0
  %1942 = vmatpush1.msra.mxu0 %v1863
  %1943 = vmatprep.subr.mxu0 0.0
  %1944 = vmatpush1.msra.mxu0 %v1864
  %1945 = vmatprep.subr.mxu0 0.0
  %1946 = vmatpush1.msra.mxu0 %v1865
  %1947 = vmatprep.subr.mxu0 0.0
  %1948 = vmatpush1.msra.mxu0 %v1866
  %1949 = vmatprep.subr.mxu0 0.0
  %1950 = vmatpush1.msra.mxu0 %v1867
  %1951 = vmatprep.subr.mxu0 0.0
  %1952 = vmatpush1.msra.mxu0 %v1868
  %1953 = vmatprep.subr.mxu0 0.0
  %1954 = vmatpush1.msra.mxu0 %v1869
  %1955 = vmatprep.subr.mxu0 0.0
  %1956 = vmatpush1.msra.mxu0 %v1870
  %1957 = vmatprep.subr.mxu0 0.0
  %1958 = vmatpush1.msra.mxu0 %v1871
  %1959 = vmatprep.subr.mxu0 0.0
  %1960 = vmatpush1.msra.mxu0 %v1872
  %1961 = vmatprep.subr.mxu0 0.0
  %1962 = vmatpush1.msra.mxu0 %v1873
  %1963 = vmatprep.subr.mxu0 0.0
  %1964 = vmatpush1.msra.mxu0 %v1874
  %1965 = vmatprep.subr.mxu0 0.0
  %1966 = vmatpush1.msra.mxu0 %v1875
  %1967 = vmatprep.subr.mxu0 0.0
  %1968 = vmatpush1.msra.mxu0 %v1876
  %1969 = vmatprep.subr.mxu0 0.0
  %1970 = vmatpush1.msra.mxu0 %v1877
  %1971 = vmatprep.subr.mxu0 0.0
  %1972 = vmatpush1.msra.mxu0 %v1878
  %1973 = vmatprep.subr.mxu0 0.0
  %1974 = vmatpush1.msra.mxu0 %v1879
  %1975 = vmatprep.subr.mxu0 0.0
  %1976 = vmatpush1.msra.mxu0 %v1880
  %1977 = vmatprep.subr.mxu0 0.0
  %1978 = vmatpush1.msra.mxu0 %v1881
  %1979 = vmatprep.mubr.f32.mxu0 %v1839
  %1980 = vmatmul.mubr.f32.gmra.mrb[0].mxu0 %v1838
  %v1981 = vpop.f32.mrb[0].mxu0
  %v1982 = vadd.f32 %v1914, %v1981
  %v1983 = vpop.f32.mrb[0].mxu0
  %1984 = vmatprep.mubr.f32.mxu0 %v1843
  %1985 = vmatmul.mubr.f32.gmra.mrb[0].mxu0 %v1842
  %v1986 = vpop.f32.mrb[0].mxu0
  %v1987 = vadd.f32 %v1914, %v1986
  %v1988 = vpop.f32.mrb[0].mxu0
  %1989 = vmatprep.mubr.f32.mxu0 %v1847
  %1990 = vmatmul.mubr.f32.gmra.mrb[0].mxu0 %v1846
  %v1991 = vpop.f32.mrb[0].mxu0
  %v1992 = vadd.f32 %v1914, %v1991
  %v1993 = vpop.f32.mrb[0].mxu0
  %1994 = vdwg.mxu0
  %1995 = vmatprep.subr.mxu0 0.0
  %1996 = vmatpush1.msra.mxu0 %v1882
  %1997 = vmatprep.subr.mxu0 0.0
  %1998 = vmatpush1.msra.mxu0 %v1883
  %1999 = vmatprep.subr.mxu0 0.0
  %2000 = vmatpush1.msra.mxu0 %v1884
  %2001 = vmatprep.subr.mxu0 0.0
  %2002 = vmatpush1.msra.mxu0 %v1885
  %2003 = vmatprep.subr.mxu0 0.0
  %2004 = vmatpush1.msra.mxu0 %v1886
  %2005 = vmatprep.subr.mxu0 0.0
  %2006 = vmatpush1.msra.mxu0 %v1887
  %2007 = vmatprep.subr.mxu0 0.0
  %2008 = vmatpush1.msra.mxu0 %v1888
  %2009 = vmatprep.subr.mxu0 0.0
  %2010 = vmatpush1.msra.mxu0 %v1889
  %2011 = vmatprep.subr.mxu0 0.0
  %2012 = vmatpush1.msra.mxu0 %v1890
  %2013 = vmatprep.subr.mxu0 0.0
  %2014 = vmatpush1.msra.mxu0 %v1891
  %2015 = vmatprep.subr.mxu0 0.0
  %2016 = vmatpush1.msra.mxu0 %v1892
  %2017 = vmatprep.subr.mxu0 0.0
  %2018 = vmatpush1.msra.mxu0 %v1893
  %2019 = vmatprep.subr.mxu0 0.0
  %2020 = vmatpush1.msra.mxu0 %v1894
  %2021 = vmatprep.subr.mxu0 0.0
  %2022 = vmatpush1.msra.mxu0 %v1895
  %2023 = vmatprep.subr.mxu0 0.0
  %2024 = vmatpush1.msra.mxu0 %v1896
  %2025 = vmatprep.subr.mxu0 0.0
  %2026 = vmatpush1.msra.mxu0 %v1897
  %2027 = vmatprep.subr.mxu0 0.0
  %2028 = vmatpush1.msra.mxu0 %v1898
  %2029 = vmatprep.subr.mxu0 0.0
  %2030 = vmatpush1.msra.mxu0 %v1899
  %2031 = vmatprep.subr.mxu0 0.0
  %2032 = vmatpush1.msra.mxu0 %v1900
  %2033 = vmatprep.subr.mxu0 0.0
  %2034 = vmatpush1.msra.mxu0 %v1901
  %2035 = vmatprep.subr.mxu0 0.0
  %2036 = vmatpush1.msra.mxu0 %v1902
  %2037 = vmatprep.subr.mxu0 0.0
  %2038 = vmatpush1.msra.mxu0 %v1903
  %2039 = vmatprep.subr.mxu0 0.0
  %2040 = vmatpush1.msra.mxu0 %v1904
  %2041 = vmatprep.subr.mxu0 0.0
  %2042 = vmatpush1.msra.mxu0 %v1905
  %2043 = vmatprep.subr.mxu0 0.0
  %2044 = vmatpush1.msra.mxu0 %v1906
  %2045 = vmatprep.subr.mxu0 0.0
  %2046 = vmatpush1.msra.mxu0 %v1907
  %2047 = vmatprep.subr.mxu0 0.0
  %2048 = vmatpush1.msra.mxu0 %v1908
  %2049 = vmatprep.subr.mxu0 0.0
  %2050 = vmatpush1.msra.mxu0 %v1909
  %2051 = vmatprep.subr.mxu0 0.0
  %2052 = vmatpush1.msra.mxu0 %v1910
  %2053 = vmatprep.subr.mxu0 0.0
  %2054 = vmatpush1.msra.mxu0 %v1911
  %2055 = vmatprep.subr.mxu0 0.0
  %2056 = vmatpush1.msra.mxu0 %v1912
  %2057 = vmatprep.subr.mxu0 0.0
  %2058 = vmatpush1.msra.mxu0 %v1913
  %2059 = vmatprep.mubr.f32.mxu0 %v1841
  %2060 = vmatmul.mubr.f32.gmra.mrb[0].mxu0 %v1840
  %v2061 = vpop.f32.mrb[0].mxu0
  %v2062 = vadd.f32 %v1982, %v2061
  %v2063 = vpop.f32.mrb[0].mxu0
  %2064 = vmatprep.mubr.f32.mxu0 %v1845
  %2065 = vmatmul.mubr.f32.gmra.mrb[0].mxu0 %v1844
  %v2066 = vpop.f32.mrb[0].mxu0
  %v2067 = vadd.f32 %v1987, %v2066
  %v2068 = vpop.f32.mrb[0].mxu0
  %2069 = vmatprep.mubr.f32.mxu0 %v1849
  %2070 = vmatmul.mubr.f32.gmra.mrb[0].mxu0 %v1848
  %v2071 = vpop.f32.mrb[0].mxu0
  %v2072 = vadd.f32 %v1992, %v2071
  %v2073 = vpop.f32.mrb[0].mxu0
  %2074 = vdwg.mxu0
  %v2075 = vadd.f32 %v1621, %v2062
  %v2076 = vadd.f32 %v1622, %v2067
  %v2077 = vadd.f32 %v1623, %v2072
  %v2078 = vsel %vm258, %v2075, 0.0
  %2079 = vadd.xlane.f32.xlu0 %v2078
  %v2080 = vpop.xlane.xlu0 %2079
  %v2081 = vsel %vm258, %v2076, 0.0
  %2082 = vadd.xlane.f32.xlu0 %v2081
  %v2083 = vpop.xlane.xlu0 %2082
  %v2084 = vsel %vm1471, %v2077, 0.0
  %2085 = vadd.xlane.f32.xlu0 %v2084
  %v2086 = vpop.xlane.xlu0 %2085
  %v2087 = vmul.f32 %v2080, %v1585
  %v2088 = vmul.f32 %v2083, %v1585
  %v2089 = vmul.f32 %v2086, %v1585
  %v2090 = vsub.f32 %v2075, %v2087
  %v2091 = vsub.f32 %v2076, %v2088
  %v2092 = vsub.f32 %v2077, %v2089
  %v2093 = vmul.f32 %v2090, %v2090
  %v2094 = vmul.f32 %v2091, %v2091
  %v2095 = vmul.f32 %v2092, %v2092
  %v2096 = vsel %vm258, %v2093, 0.0
  %2097 = vadd.xlane.f32.xlu0 %v2096
  %v2098 = vpop.xlane.xlu0 %2097
  %v2099 = vsel %vm258, %v2094, 0.0
  %2100 = vadd.xlane.f32.xlu0 %v2099
  %v2101 = vpop.xlane.xlu0 %2100
  %v2102 = vsel %vm1471, %v2095, 0.0
  %2103 = vadd.xlane.f32.xlu0 %v2102
  %v2104 = vpop.xlane.xlu0 %2103
  %v2105 = vmul.f32 %v2098, %v1585
  %v2106 = vmul.f32 %v2101, %v1585
  %v2107 = vmul.f32 %v2104, %v1585
  %v2108 = vadd.f32 %v2105, 1e-05
  %v2109 = vadd.f32 %v2106, 1e-05
  %v2110 = vadd.f32 %v2107, 1e-05
  %v2111 = vrsqrt.pop %v2108
  %v2112 = vrsqrt.pop %v2109
  %v2113 = vrsqrt.pop %v2110
  %v2114 = vmul.f32 %v2090, %v2111
  %v2115 = vmul.f32 %v2091, %v2112
  %v2116 = vmul.f32 %v2092, %v2113
  %v2117 = vld [vmem:[%s10 + $0x22] ss:$0 sm:$0xff]
  %v2118 = vmul.f32 %v2114, %v2117
  %v2119 = vmul.f32 %v2115, %v2117
  %v2120 = vmul.f32 %v2116, %v2117
  %v2121 = vld [vmem:[%s10 + $0x23] ss:$0 sm:$0xff]
  %v2122 = vadd.f32 %v2118, %v2121
  %v2123 = vadd.f32 %v2119, %v2121
  %v2124 = vadd.f32 %v2120, %v2121
  %v2125 = vsel %vm258, %v2122, 0.0
  %2126 = vadd.xlane.f32.xlu0 %v2125
  %v2127 = vpop.xlane.xlu0 %2126
  %v2128 = vsel %vm258, %v2123, 0.0
  %2129 = vadd.xlane.f32.xlu0 %v2128
  %v2130 = vpop.xlane.xlu0 %2129
  %v2131 = vsel %vm1471, %v2124, 0.0
  %2132 = vadd.xlane.f32.xlu0 %v2131
  %v2133 = vpop.xlane.xlu0 %2132
  %v2134 = vmul.f32 %v2127, %v1585
  %v2135 = vmul.f32 %v2130, %v1585
  %v2136 = vmul.f32 %v2133, %v1585
  %v2137 = vsub.f32 %v2122, %v2134
  %v2138 = vsub.f32 %v2123, %v2135
  %v2139 = vsub.f32 %v2124, %v2136
  %v2140 = vmul.f32 %v2137, %v2137
  %v2141 = vmul.f32 %v2138, %v2138
  %v2142 = vmul.f32 %v2139, %v2139
  %v2143 = vsel %vm258, %v2140, 0.0
  %2144 = vadd.xlane.f32.xlu0 %v2143
  %v2145 = vpop.xlane.xlu0 %2144
  %v2146 = vsel %vm258, %v2141, 0.0
  %2147 = vadd.xlane.f32.xlu0 %v2146
  %v2148 = vpop.xlane.xlu0 %2147
  %v2149 = vsel %vm1471, %v2142, 0.0
  %2150 = vadd.xlane.f32.xlu0 %v2149
  %v2151 = vpop.xlane.xlu0 %2150
  %v2152 = vmul.f32 %v2145, %v1585
  %v2153 = vmul.f32 %v2148, %v1585
  %v2154 = vmul.f32 %v2151, %v1585
  %v2155 = vadd.f32 %v2152, 1e-05
  %v2156 = vadd.f32 %v2153, 1e-05
  %v2157 = vadd.f32 %v2154, 1e-05
  %v2158 = vrsqrt.pop %v2155
  %v2159 = vrsqrt.pop %v2156
  %v2160 = vrsqrt.pop %v2157
  %v2161 = vmul.f32 %v2137, %v2158
  %v2162 = vmul.f32 %v2138, %v2159
  %v2163 = vmul.f32 %v2139, %v2160
  %v2164 = vld [vmem:[%s10 + $0x24] ss:$0 sm:$0xff]
  %v2165 = vmul.f32 %v2161, %v2164
  %v2166 = vmul.f32 %v2162, %v2164
  %v2167 = vmul.f32 %v2163, %v2164
  %v2168 = vld [vmem:[%s10 + $0x25] ss:$0 sm:$0xff]
  %v2169 = vadd.f32 %v2165, %v2168
  %v2170 = vadd.f32 %v2166, %v2168
  %v2171 = vadd.f32 %v2167, %v2168
  %v2172 = vld [vmem:[%s6] sm:$0xff]
  %v2173 = vld [vmem:[%s6 + $0x8] sm:$0xff]
  %v2174 = vld [vmem:[%s8 + $0x40] sm:$0xff]
  %v2175 = vld [vmem:[%s8 + $0xe8] sm:$0xff]
  %v2176 = vld [vmem:[%s8 + $0x190] sm:$0xff]
  %v2177 = vld [vmem:[%s8 + $0x238] sm:$0xff]
  %v2178 = vld [vmem:[%s10 + $0x26] ss:$0 sm:$0xff]
  %v2180 = vsel %vm258, %v248, 0
  %v2183 = vsel %vm258, %v249, 0
  %2185 = vmatprep.subr.mxu0 0.0
  %2186 = vmatpush1.msra.mxu0 %v2174
  %2187 = vmatprep.subr.mxu0 0.0
  %2188 = vmatpush1.msra.mxu0 %v2175
  %2189 = vmatprep.subr.mxu0 0.0
  %2190 = vmatpush1.msra.mxu0 %v2176
  %2191 = vmatprep.subr.mxu0 0.0
  %2192 = vmatpush1.msra.mxu0 %v2177
  %2193 = vmatprep.subr.mxu0 0.0
  %2194 = vmatpush1.msra.mxu0 0.0
  %2195 = vmatprep.subr.mxu0 0.0
  %2196 = vmatpush1.msra.mxu0 0.0
  %2197 = vmatprep.subr.mxu0 0.0
  %2198 = vmatpush1.msra.mxu0 0.0
  %2199 = vmatprep.subr.mxu0 0.0
  %2200 = vmatpush1.msra.mxu0 0.0
  %2201 = vmatprep.subr.mxu0 0.0
  %2202 = vmatpush1.msra.mxu0 0.0
  %2203 = vmatprep.subr.mxu0 0.0
  %2204 = vmatpush1.msra.mxu0 0.0
  %2205 = vmatprep.subr.mxu0 0.0
  %2206 = vmatpush1.msra.mxu0 0.0
  %2207 = vmatprep.subr.mxu0 0.0
  %2208 = vmatpush1.msra.mxu0 0.0
  %2209 = vmatprep.subr.mxu0 0.0
  %2210 = vmatpush1.msra.mxu0 0.0
  %2211 = vmatprep.subr.mxu0 0.0
  %2212 = vmatpush1.msra.mxu0 0.0
  %2213 = vmatprep.subr.mxu0 0.0
  %2214 = vmatpush1.msra.mxu0 0.0
  %2215 = vmatprep.subr.mxu0 0.0
  %2216 = vmatpush1.msra.mxu0 0.0
  %2217 = vmatprep.subr.mxu0 0.0
  %2218 = vmatpush1.msra.mxu0 0.0
  %2219 = vmatprep.subr.mxu0 0.0
  %2220 = vmatpush1.msra.mxu0 0.0
  %2221 = vmatprep.subr.mxu0 0.0
  %2222 = vmatpush1.msra.mxu0 0.0
  %2223 = vmatprep.subr.mxu0 0.0
  %2224 = vmatpush1.msra.mxu0 0.0
  %2225 = vmatprep.subr.mxu0 0.0
  %2226 = vmatpush1.msra.mxu0 0.0
  %2227 = vmatprep.subr.mxu0 0.0
  %2228 = vmatpush1.msra.mxu0 0.0
  %2229 = vmatprep.subr.mxu0 0.0
  %2230 = vmatpush1.msra.mxu0 0.0
  %2231 = vmatprep.subr.mxu0 0.0
  %2232 = vmatpush1.msra.mxu0 0.0
  %2233 = vmatprep.subr.mxu0 0.0
  %2234 = vmatpush1.msra.mxu0 0.0
  %2235 = vmatprep.subr.mxu0 0.0
  %2236 = vmatpush1.msra.mxu0 0.0
  %2237 = vmatprep.subr.mxu0 0.0
  %2238 = vmatpush1.msra.mxu0 0.0
  %2239 = vmatprep.subr.mxu0 0.0
  %2240 = vmatpush1.msra.mxu0 0.0
  %2241 = vmatprep.subr.mxu0 0.0
  %2242 = vmatpush1.msra.mxu0 0.0
  %2243 = vmatprep.subr.mxu0 0.0
  %2244 = vmatpush1.msra.mxu0 0.0
  %2245 = vmatprep.subr.mxu0 0.0
  %2246 = vmatpush1.msra.mxu0 0.0
  %2247 = vmatprep.subr.mxu0 0.0
  %2248 = vmatpush1.msra.mxu0 0.0
  %2249 = vmatprep.mubr.f32.mxu0 0.0
  %2250 = vmatmul.mubr.f32.gmra.mrb[0].mxu0 %v2180
  %v2251 = vpop.f32.mrb[0].mxu0
  %v2252 = vadd.f32 %v2178, %v2251
  %v2253 = vpop.f32.mrb[0].mxu0
  %2254 = vmatprep.mubr.f32.mxu0 0.0
  %2255 = vmatmul.mubr.f32.gmra.mrb[0].mxu0 %v2183
  %v2256 = vpop.f32.mrb[0].mxu0
  %v2257 = vadd.f32 %v2178, %v2256
  %v2258 = vpop.f32.mrb[0].mxu0
  %2259 = vdwg.mxu0
  %v2260 = vld [vmem:[%s8 + $0x48] sm:$0xff]
  %v2261 = vld [vmem:[%s8 + $0xf0] sm:$0xff]
  %v2262 = vld [vmem:[%s8 + $0x198] sm:$0xff]
  %v2263 = vld [vmem:[%s8 + $0x240] sm:$0xff]
  %v2264 = vld [vmem:[%s10 + $0x27] ss:$0 sm:$0xff]
  %2265 = vmatprep.subr.mxu0 0.0
  %2266 = vmatpush1.msra.mxu0 %v2260
  %2267 = vmatprep.subr.mxu0 0.0
  %2268 = vmatpush1.msra.mxu0 %v2261
  %2269 = vmatprep.subr.mxu0 0.0
  %2270 = vmatpush1.msra.mxu0 %v2262
  %2271 = vmatprep.subr.mxu0 0.0
  %2272 = vmatpush1.msra.mxu0 %v2263
  %2273 = vmatprep.subr.mxu0 0.0
  %2274 = vmatpush1.msra.mxu0 0.0
  %2275 = vmatprep.subr.mxu0 0.0
  %2276 = vmatpush1.msra.mxu0 0.0
  %2277 = vmatprep.subr.mxu0 0.0
  %2278 = vmatpush1.msra.mxu0 0.0
  %2279 = vmatprep.subr.mxu0 0.0
  %2280 = vmatpush1.msra.mxu0 0.0
  %2281 = vmatprep.subr.mxu0 0.0
  %2282 = vmatpush1.msra.mxu0 0.0
  %2283 = vmatprep.subr.mxu0 0.0
  %2284 = vmatpush1.msra.mxu0 0.0
  %2285 = vmatprep.subr.mxu0 0.0
  %2286 = vmatpush1.msra.mxu0 0.0
  %2287 = vmatprep.subr.mxu0 0.0
  %2288 = vmatpush1.msra.mxu0 0.0
  %2289 = vmatprep.subr.mxu0 0.0
  %2290 = vmatpush1.msra.mxu0 0.0
  %2291 = vmatprep.subr.mxu0 0.0
  %2292 = vmatpush1.msra.mxu0 0.0
  %2293 = vmatprep.subr.mxu0 0.0
  %2294 = vmatpush1.msra.mxu0 0.0
  %2295 = vmatprep.subr.mxu0 0.0
  %2296 = vmatpush1.msra.mxu0 0.0
  %2297 = vmatprep.subr.mxu0 0.0
  %2298 = vmatpush1.msra.mxu0 0.0
  %2299 = vmatprep.subr.mxu0 0.0
  %2300 = vmatpush1.msra.mxu0 0.0
  %2301 = vmatprep.subr.mxu0 0.0
  %2302 = vmatpush1.msra.mxu0 0.0
  %2303 = vmatprep.subr.mxu0 0.0
  %2304 = vmatpush1.msra.mxu0 0.0
  %2305 = vmatprep.subr.mxu0 0.0
  %2306 = vmatpush1.msra.mxu0 0.0
  %2307 = vmatprep.subr.mxu0 0.0
  %2308 = vmatpush1.msra.mxu0 0.0
  %2309 = vmatprep.subr.mxu0 0.0
  %2310 = vmatpush1.msra.mxu0 0.0
  %2311 = vmatprep.subr.mxu0 0.0
  %2312 = vmatpush1.msra.mxu0 0.0
  %2313 = vmatprep.subr.mxu0 0.0
  %2314 = vmatpush1.msra.mxu0 0.0
  %2315 = vmatprep.subr.mxu0 0.0
  %2316 = vmatpush1.msra.mxu0 0.0
  %2317 = vmatprep.subr.mxu0 0.0
  %2318 = vmatpush1.msra.mxu0 0.0
  %2319 = vmatprep.subr.mxu0 0.0
  %2320 = vmatpush1.msra.mxu0 0.0
  %2321 = vmatprep.subr.mxu0 0.0
  %2322 = vmatpush1.msra.mxu0 0.0
  %2323 = vmatprep.subr.mxu0 0.0
  %2324 = vmatpush1.msra.mxu0 0.0
  %2325 = vmatprep.subr.mxu0 0.0
  %2326 = vmatpush1.msra.mxu0 0.0
  %2327 = vmatprep.subr.mxu0 0.0
  %2328 = vmatpush1.msra.mxu0 0.0
  %2329 = vmatprep.mubr.f32.mxu0 0.0
  %2330 = vmatmul.mubr.f32.gmra.mrb[0].mxu0 %v2180
  %v2331 = vpop.f32.mrb[0].mxu0
  %v2332 = vadd.f32 %v2264, %v2331
  %v2333 = vpop.f32.mrb[0].mxu0
  %2334 = vmatprep.mubr.f32.mxu0 0.0
  %2335 = vmatmul.mubr.f32.gmra.mrb[0].mxu0 %v2183
  %v2336 = vpop.f32.mrb[0].mxu0
  %v2337 = vadd.f32 %v2264, %v2336
  %v2338 = vpop.f32.mrb[0].mxu0
  %2339 = vdwg.mxu0
  %v2340 = vld [vmem:[%s8 + $0x50] sm:$0xff]
  %v2341 = vld [vmem:[%s8 + $0xf8] sm:$0xff]
  %v2342 = vld [vmem:[%s8 + $0x1a0] sm:$0xff]
  %v2343 = vld [vmem:[%s8 + $0x248] sm:$0xff]
  %v2344 = vld [vmem:[%s10 + $0x40] ss:$0 sm:$0xff]
  %2345 = vmatprep.subr.mxu0 0.0
  %2346 = vmatpush1.msra.mxu0 %v2340
  %2347 = vmatprep.subr.mxu0 0.0
  %2348 = vmatpush1.msra.mxu0 %v2341
  %2349 = vmatprep.subr.mxu0 0.0
  %2350 = vmatpush1.msra.mxu0 %v2342
  %2351 = vmatprep.subr.mxu0 0.0
  %2352 = vmatpush1.msra.mxu0 %v2343
  %2353 = vmatprep.subr.mxu0 0.0
  %2354 = vmatpush1.msra.mxu0 0.0
  %2355 = vmatprep.subr.mxu0 0.0
  %2356 = vmatpush1.msra.mxu0 0.0
  %2357 = vmatprep.subr.mxu0 0.0
  %2358 = vmatpush1.msra.mxu0 0.0
  %2359 = vmatprep.subr.mxu0 0.0
  %2360 = vmatpush1.msra.mxu0 0.0
  %2361 = vmatprep.subr.mxu0 0.0
  %2362 = vmatpush1.msra.mxu0 0.0
  %2363 = vmatprep.subr.mxu0 0.0
  %2364 = vmatpush1.msra.mxu0 0.0
  %2365 = vmatprep.subr.mxu0 0.0
  %2366 = vmatpush1.msra.mxu0 0.0
  %2367 = vmatprep.subr.mxu0 0.0
  %2368 = vmatpush1.msra.mxu0 0.0
  %2369 = vmatprep.subr.mxu0 0.0
  %2370 = vmatpush1.msra.mxu0 0.0
  %2371 = vmatprep.subr.mxu0 0.0
  %2372 = vmatpush1.msra.mxu0 0.0
  %2373 = vmatprep.subr.mxu0 0.0
  %2374 = vmatpush1.msra.mxu0 0.0
  %2375 = vmatprep.subr.mxu0 0.0
  %2376 = vmatpush1.msra.mxu0 0.0
  %2377 = vmatprep.subr.mxu0 0.0
  %2378 = vmatpush1.msra.mxu0 0.0
  %2379 = vmatprep.subr.mxu0 0.0
  %2380 = vmatpush1.msra.mxu0 0.0
  %2381 = vmatprep.subr.mxu0 0.0
  %2382 = vmatpush1.msra.mxu0 0.0
  %2383 = vmatprep.subr.mxu0 0.0
  %2384 = vmatpush1.msra.mxu0 0.0
  %2385 = vmatprep.subr.mxu0 0.0
  %2386 = vmatpush1.msra.mxu0 0.0
  %2387 = vmatprep.subr.mxu0 0.0
  %2388 = vmatpush1.msra.mxu0 0.0
  %2389 = vmatprep.subr.mxu0 0.0
  %2390 = vmatpush1.msra.mxu0 0.0
  %2391 = vmatprep.subr.mxu0 0.0
  %2392 = vmatpush1.msra.mxu0 0.0
  %2393 = vmatprep.subr.mxu0 0.0
  %2394 = vmatpush1.msra.mxu0 0.0
  %2395 = vmatprep.subr.mxu0 0.0
  %2396 = vmatpush1.msra.mxu0 0.0
  %2397 = vmatprep.subr.mxu0 0.0
  %2398 = vmatpush1.msra.mxu0 0.0
  %2399 = vmatprep.subr.mxu0 0.0
  %2400 = vmatpush1.msra.mxu0 0.0
  %2401 = vmatprep.subr.mxu0 0.0
  %2402 = vmatpush1.msra.mxu0 0.0
  %2403 = vmatprep.subr.mxu0 0.0
  %2404 = vmatpush1.msra.mxu0 0.0
  %2405 = vmatprep.subr.mxu0 0.0
  %2406 = vmatpush1.msra.mxu0 0.0
  %2407 = vmatprep.subr.mxu0 0.0
  %2408 = vmatpush1.msra.mxu0 0.0
  %2409 = vmatprep.mubr.f32.mxu0 0.0
  %2410 = vmatmul.mubr.f32.gmra.mrb[0].mxu0 %v2180
  %v2411 = vpop.f32.mrb[0].mxu0
  %v2412 = vadd.f32 %v2344, %v2411
  %v2413 = vpop.f32.mrb[0].mxu0
  %2414 = vmatprep.mubr.f32.mxu0 0.0
  %2415 = vmatmul.mubr.f32.gmra.mrb[0].mxu0 %v2183
  %v2416 = vpop.f32.mrb[0].mxu0
  %v2417 = vadd.f32 %v2344, %v2416
  %v2418 = vpop.f32.mrb[0].mxu0
  %2419 = vdwg.mxu0
  %v2420 = vmul.f32 %v2252, %v525
  %v2421 = vmul.f32 %v2257, %v525
  %v2422 = vmul.f32 %v2252, %v529
  %v2423 = vmul.f32 %v2257, %v529
  %v2424 = vmul.f32 %v2252, %v533
  %v2425 = vmul.f32 %v2257, %v533
  %v2426 = vmul.f32 %v2252, %v537
  %v2427 = vmul.f32 %v2257, %v537
  %v2429 = vsel %vm258, %v2420, 0
  %v2432 = vsel %vm258, %v2421, 0
  %v2435 = vsel %vm258, %v2332, 0
  %v2438 = vsel %vm258, %v2337, 0
  %2440 = vmatprep.subr.mxu0 0.0
  %2441 = vmatpush1.xpose.msra.mxu0 %v2435
  %2442 = vmatprep.subr.mxu0 0.0
  %2443 = vmatpush1.xpose.msra.mxu0 %v2438
  %2444 = vmatprep.subr.mxu0 0.0
  %2445 = vmatpush1.xpose.msra.mxu0 0.0
  %2446 = vmatprep.subr.mxu0 0.0
  %2447 = vmatpush1.xpose.msra.mxu0 0.0
  %2448 = vmatprep.subr.mxu0 0.0
  %2449 = vmatpush1.xpose.msra.mxu0 0.0
  %2450 = vmatprep.subr.mxu0 0.0
  %2451 = vmatpush1.xpose.msra.mxu0 0.0
  %2452 = vmatprep.subr.mxu0 0.0
  %2453 = vmatpush1.xpose.msra.mxu0 0.0
  %2454 = vmatprep.subr.mxu0 0.0
  %2455 = vmatpush1.xpose.msra.mxu0 0.0
  %2456 = vmatprep.subr.mxu0 0.0
  %2457 = vmatpush1.xpose.msra.mxu0 0.0
  %2458 = vmatprep.subr.mxu0 0.0
  %2459 = vmatpush1.xpose.msra.mxu0 0.0
  %2460 = vmatprep.subr.mxu0 0.0
  %2461 = vmatpush1.xpose.msra.mxu0 0.0
  %2462 = vmatprep.subr.mxu0 0.0
  %2463 = vmatpush1.xpose.msra.mxu0 0.0
  %2464 = vmatprep.subr.mxu0 0.0
  %2465 = vmatpush1.xpose.msra.mxu0 0.0
  %2466 = vmatprep.subr.mxu0 0.0
  %2467 = vmatpush1.xpose.msra.mxu0 0.0
  %2468 = vmatprep.subr.mxu0 0.0
  %2469 = vmatpush1.xpose.msra.mxu0 0.0
  %2470 = vmatprep.subr.mxu0 0.0
  %2471 = vmatpush1.xpose.msra.mxu0 0.0
  %2472 = vmatprep.subr.mxu0 0.0
  %2473 = vmatpush1.xpose.msra.mxu0 0.0
  %2474 = vmatprep.subr.mxu0 0.0
  %2475 = vmatpush1.xpose.msra.mxu0 0.0
  %2476 = vmatprep.subr.mxu0 0.0
  %2477 = vmatpush1.xpose.msra.mxu0 0.0
  %2478 = vmatprep.subr.mxu0 0.0
  %2479 = vmatpush1.xpose.msra.mxu0 0.0
  %2480 = vmatprep.subr.mxu0 0.0
  %2481 = vmatpush1.xpose.msra.mxu0 0.0
  %2482 = vmatprep.subr.mxu0 0.0
  %2483 = vmatpush1.xpose.msra.mxu0 0.0
  %2484 = vmatprep.subr.mxu0 0.0
  %2485 = vmatpush1.xpose.msra.mxu0 0.0
  %2486 = vmatprep.subr.mxu0 0.0
  %2487 = vmatpush1.xpose.msra.mxu0 0.0
  %2488 = vmatprep.subr.mxu0 0.0
  %2489 = vmatpush1.xpose.msra.mxu0 0.0
  %2490 = vmatprep.subr.mxu0 0.0
  %2491 = vmatpush1.xpose.msra.mxu0 0.0
  %2492 = vmatprep.subr.mxu0 0.0
  %2493 = vmatpush1.xpose.msra.mxu0 0.0
  %2494 = vmatprep.subr.mxu0 0.0
  %2495 = vmatpush1.xpose.msra.mxu0 0.0
  %2496 = vmatprep.subr.mxu0 0.0
  %2497 = vmatpush1.xpose.msra.mxu0 0.0
  %2498 = vmatprep.subr.mxu0 0.0
  %2499 = vmatpush1.xpose.msra.mxu0 0.0
  %2500 = vmatprep.subr.mxu0 0.0
  %2501 = vmatpush1.xpose.msra.mxu0 0.0
  %2502 = vmatprep.subr.mxu0 0.0
  %2503 = vmatpush1.xpose.msra.mxu0 0.0
  %2504 = vmatprep.mubr.f32.mxu0 0.0
  %2505 = vmatmul.mubr.f32.gmra.mrb[0].mxu0 %v2429
  %v2506 = vpop.f32.mrb[0].mxu0
  %v2507 = vadd.f32 %v2172, %v2506
  %v2508 = vpop.f32.mrb[0].mxu0
  %2509 = vmatprep.mubr.f32.mxu0 0.0
  %2510 = vmatmul.mubr.f32.gmra.mrb[0].mxu0 %v2432
  %v2511 = vpop.f32.mrb[0].mxu0
  %v2512 = vadd.f32 %v2173, %v2511
  %v2513 = vpop.f32.mrb[0].mxu0
  %2514 = vdwg.mxu0
  %v2516 = vsel %vm258, %v2422, 0
  %v2519 = vsel %vm258, %v2423, 0
  %2521 = vmatprep.subr.mxu0 0.0
  %2522 = vmatpush1.xpose.msra.mxu0 %v2435
  %2523 = vmatprep.subr.mxu0 0.0
  %2524 = vmatpush1.xpose.msra.mxu0 %v2438
  %2525 = vmatprep.subr.mxu0 0.0
  %2526 = vmatpush1.xpose.msra.mxu0 0.0
  %2527 = vmatprep.subr.mxu0 0.0
  %2528 = vmatpush1.xpose.msra.mxu0 0.0
  %2529 = vmatprep.subr.mxu0 0.0
  %2530 = vmatpush1.xpose.msra.mxu0 0.0
  %2531 = vmatprep.subr.mxu0 0.0
  %2532 = vmatpush1.xpose.msra.mxu0 0.0
  %2533 = vmatprep.subr.mxu0 0.0
  %2534 = vmatpush1.xpose.msra.mxu0 0.0
  %2535 = vmatprep.subr.mxu0 0.0
  %2536 = vmatpush1.xpose.msra.mxu0 0.0
  %2537 = vmatprep.subr.mxu0 0.0
  %2538 = vmatpush1.xpose.msra.mxu0 0.0
  %2539 = vmatprep.subr.mxu0 0.0
  %2540 = vmatpush1.xpose.msra.mxu0 0.0
  %2541 = vmatprep.subr.mxu0 0.0
  %2542 = vmatpush1.xpose.msra.mxu0 0.0
  %2543 = vmatprep.subr.mxu0 0.0
  %2544 = vmatpush1.xpose.msra.mxu0 0.0
  %2545 = vmatprep.subr.mxu0 0.0
  %2546 = vmatpush1.xpose.msra.mxu0 0.0
  %2547 = vmatprep.subr.mxu0 0.0
  %2548 = vmatpush1.xpose.msra.mxu0 0.0
  %2549 = vmatprep.subr.mxu0 0.0
  %2550 = vmatpush1.xpose.msra.mxu0 0.0
  %2551 = vmatprep.subr.mxu0 0.0
  %2552 = vmatpush1.xpose.msra.mxu0 0.0
  %2553 = vmatprep.subr.mxu0 0.0
  %2554 = vmatpush1.xpose.msra.mxu0 0.0
  %2555 = vmatprep.subr.mxu0 0.0
  %2556 = vmatpush1.xpose.msra.mxu0 0.0
  %2557 = vmatprep.subr.mxu0 0.0
  %2558 = vmatpush1.xpose.msra.mxu0 0.0
  %2559 = vmatprep.subr.mxu0 0.0
  %2560 = vmatpush1.xpose.msra.mxu0 0.0
  %2561 = vmatprep.subr.mxu0 0.0
  %2562 = vmatpush1.xpose.msra.mxu0 0.0
  %2563 = vmatprep.subr.mxu0 0.0
  %2564 = vmatpush1.xpose.msra.mxu0 0.0
  %2565 = vmatprep.subr.mxu0 0.0
  %2566 = vmatpush1.xpose.msra.mxu0 0.0
  %2567 = vmatprep.subr.mxu0 0.0
  %2568 = vmatpush1.xpose.msra.mxu0 0.0
  %2569 = vmatprep.subr.mxu0 0.0
  %2570 = vmatpush1.xpose.msra.mxu0 0.0
  %2571 = vmatprep.subr.mxu0 0.0
  %2572 = vmatpush1.xpose.msra.mxu0 0.0
  %2573 = vmatprep.subr.mxu0 0.0
  %2574 = vmatpush1.xpose.msra.mxu0 0.0
  %2575 = vmatprep.subr.mxu0 0.0
  %2576 = vmatpush1.xpose.msra.mxu0 0.0
  %2577 = vmatprep.subr.mxu0 0.0
  %2578 = vmatpush1.xpose.msra.mxu0 0.0
  %2579 = vmatprep.subr.mxu0 0.0
  %2580 = vmatpush1.xpose.msra.mxu0 0.0
  %2581 = vmatprep.subr.mxu0 0.0
  %2582 = vmatpush1.xpose.msra.mxu0 0.0
  %2583 = vmatprep.subr.mxu0 0.0
  %2584 = vmatpush1.xpose.msra.mxu0 0.0
  %2585 = vmatprep.mubr.f32.mxu0 0.0
  %2586 = vmatmul.mubr.f32.gmra.mrb[0].mxu0 %v2516
  %v2587 = vpop.f32.mrb[0].mxu0
  %v2588 = vadd.f32 %v2172, %v2587
  %v2589 = vpop.f32.mrb[0].mxu0
  %2590 = vmatprep.mubr.f32.mxu0 0.0
  %2591 = vmatmul.mubr.f32.gmra.mrb[0].mxu0 %v2519
  %v2592 = vpop.f32.mrb[0].mxu0
  %v2593 = vadd.f32 %v2173, %v2592
  %v2594 = vpop.f32.mrb[0].mxu0
  %2595 = vdwg.mxu0
  %v2597 = vsel %vm258, %v2424, 0
  %v2600 = vsel %vm258, %v2425, 0
  %2602 = vmatprep.subr.mxu0 0.0
  %2603 = vmatpush1.xpose.msra.mxu0 %v2435
  %2604 = vmatprep.subr.mxu0 0.0
  %2605 = vmatpush1.xpose.msra.mxu0 %v2438
  %2606 = vmatprep.subr.mxu0 0.0
  %2607 = vmatpush1.xpose.msra.mxu0 0.0
  %2608 = vmatprep.subr.mxu0 0.0
  %2609 = vmatpush1.xpose.msra.mxu0 0.0
  %2610 = vmatprep.subr.mxu0 0.0
  %2611 = vmatpush1.xpose.msra.mxu0 0.0
  %2612 = vmatprep.subr.mxu0 0.0
  %2613 = vmatpush1.xpose.msra.mxu0 0.0
  %2614 = vmatprep.subr.mxu0 0.0
  %2615 = vmatpush1.xpose.msra.mxu0 0.0
  %2616 = vmatprep.subr.mxu0 0.0
  %2617 = vmatpush1.xpose.msra.mxu0 0.0
  %2618 = vmatprep.subr.mxu0 0.0
  %2619 = vmatpush1.xpose.msra.mxu0 0.0
  %2620 = vmatprep.subr.mxu0 0.0
  %2621 = vmatpush1.xpose.msra.mxu0 0.0
  %2622 = vmatprep.subr.mxu0 0.0
  %2623 = vmatpush1.xpose.msra.mxu0 0.0
  %2624 = vmatprep.subr.mxu0 0.0
  %2625 = vmatpush1.xpose.msra.mxu0 0.0
  %2626 = vmatprep.subr.mxu0 0.0
  %2627 = vmatpush1.xpose.msra.mxu0 0.0
  %2628 = vmatprep.subr.mxu0 0.0
  %2629 = vmatpush1.xpose.msra.mxu0 0.0
  %2630 = vmatprep.subr.mxu0 0.0
  %2631 = vmatpush1.xpose.msra.mxu0 0.0
  %2632 = vmatprep.subr.mxu0 0.0
  %2633 = vmatpush1.xpose.msra.mxu0 0.0
  %2634 = vmatprep.subr.mxu0 0.0
  %2635 = vmatpush1.xpose.msra.mxu0 0.0
  %2636 = vmatprep.subr.mxu0 0.0
  %2637 = vmatpush1.xpose.msra.mxu0 0.0
  %2638 = vmatprep.subr.mxu0 0.0
  %2639 = vmatpush1.xpose.msra.mxu0 0.0
  %2640 = vmatprep.subr.mxu0 0.0
  %2641 = vmatpush1.xpose.msra.mxu0 0.0
  %2642 = vmatprep.subr.mxu0 0.0
  %2643 = vmatpush1.xpose.msra.mxu0 0.0
  %2644 = vmatprep.subr.mxu0 0.0
  %2645 = vmatpush1.xpose.msra.mxu0 0.0
  %2646 = vmatprep.subr.mxu0 0.0
  %2647 = vmatpush1.xpose.msra.mxu0 0.0
  %2648 = vmatprep.subr.mxu0 0.0
  %2649 = vmatpush1.xpose.msra.mxu0 0.0
  %2650 = vmatprep.subr.mxu0 0.0
  %2651 = vmatpush1.xpose.msra.mxu0 0.0
  %2652 = vmatprep.subr.mxu0 0.0
  %2653 = vmatpush1.xpose.msra.mxu0 0.0
  %2654 = vmatprep.subr.mxu0 0.0
  %2655 = vmatpush1.xpose.msra.mxu0 0.0
  %2656 = vmatprep.subr.mxu0 0.0
  %2657 = vmatpush1.xpose.msra.mxu0 0.0
  %2658 = vmatprep.subr.mxu0 0.0
  %2659 = vmatpush1.xpose.msra.mxu0 0.0
  %2660 = vmatprep.subr.mxu0 0.0
  %2661 = vmatpush1.xpose.msra.mxu0 0.0
  %2662 = vmatprep.subr.mxu0 0.0
  %2663 = vmatpush1.xpose.msra.mxu0 0.0
  %2664 = vmatprep.subr.mxu0 0.0
  %2665 = vmatpush1.xpose.msra.mxu0 0.0
  %2666 = vmatprep.mubr.f32.mxu0 0.0
  %2667 = vmatmul.mubr.f32.gmra.mrb[0].mxu0 %v2597
  %v2668 = vpop.f32.mrb[0].mxu0
  %v2669 = vadd.f32 %v2172, %v2668
  %v2670 = vpop.f32.mrb[0].mxu0
  %2671 = vmatprep.mubr.f32.mxu0 0.0
  %2672 = vmatmul.mubr.f32.gmra.mrb[0].mxu0 %v2600
  %v2673 = vpop.f32.mrb[0].mxu0
  %v2674 = vadd.f32 %v2173, %v2673
  %v2675 = vpop.f32.mrb[0].mxu0
  %2676 = vdwg.mxu0
  %v2678 = vsel %vm258, %v2426, 0
  %v2681 = vsel %vm258, %v2427, 0
  %2683 = vmatprep.subr.mxu0 0.0
  %2684 = vmatpush1.xpose.msra.mxu0 %v2435
  %2685 = vmatprep.subr.mxu0 0.0
  %2686 = vmatpush1.xpose.msra.mxu0 %v2438
  %2687 = vmatprep.subr.mxu0 0.0
  %2688 = vmatpush1.xpose.msra.mxu0 0.0
  %2689 = vmatprep.subr.mxu0 0.0
  %2690 = vmatpush1.xpose.msra.mxu0 0.0
  %2691 = vmatprep.subr.mxu0 0.0
  %2692 = vmatpush1.xpose.msra.mxu0 0.0
  %2693 = vmatprep.subr.mxu0 0.0
  %2694 = vmatpush1.xpose.msra.mxu0 0.0
  %2695 = vmatprep.subr.mxu0 0.0
  %2696 = vmatpush1.xpose.msra.mxu0 0.0
  %2697 = vmatprep.subr.mxu0 0.0
  %2698 = vmatpush1.xpose.msra.mxu0 0.0
  %2699 = vmatprep.subr.mxu0 0.0
  %2700 = vmatpush1.xpose.msra.mxu0 0.0
  %2701 = vmatprep.subr.mxu0 0.0
  %2702 = vmatpush1.xpose.msra.mxu0 0.0
  %2703 = vmatprep.subr.mxu0 0.0
  %2704 = vmatpush1.xpose.msra.mxu0 0.0
  %2705 = vmatprep.subr.mxu0 0.0
  %2706 = vmatpush1.xpose.msra.mxu0 0.0
  %2707 = vmatprep.subr.mxu0 0.0
  %2708 = vmatpush1.xpose.msra.mxu0 0.0
  %2709 = vmatprep.subr.mxu0 0.0
  %2710 = vmatpush1.xpose.msra.mxu0 0.0
  %2711 = vmatprep.subr.mxu0 0.0
  %2712 = vmatpush1.xpose.msra.mxu0 0.0
  %2713 = vmatprep.subr.mxu0 0.0
  %2714 = vmatpush1.xpose.msra.mxu0 0.0
  %2715 = vmatprep.subr.mxu0 0.0
  %2716 = vmatpush1.xpose.msra.mxu0 0.0
  %2717 = vmatprep.subr.mxu0 0.0
  %2718 = vmatpush1.xpose.msra.mxu0 0.0
  %2719 = vmatprep.subr.mxu0 0.0
  %2720 = vmatpush1.xpose.msra.mxu0 0.0
  %2721 = vmatprep.subr.mxu0 0.0
  %2722 = vmatpush1.xpose.msra.mxu0 0.0
  %2723 = vmatprep.subr.mxu0 0.0
  %2724 = vmatpush1.xpose.msra.mxu0 0.0
  %2725 = vmatprep.subr.mxu0 0.0
  %2726 = vmatpush1.xpose.msra.mxu0 0.0
  %2727 = vmatprep.subr.mxu0 0.0
  %2728 = vmatpush1.xpose.msra.mxu0 0.0
  %2729 = vmatprep.subr.mxu0 0.0
  %2730 = vmatpush1.xpose.msra.mxu0 0.0
  %2731 = vmatprep.subr.mxu0 0.0
  %2732 = vmatpush1.xpose.msra.mxu0 0.0
  %2733 = vmatprep.subr.mxu0 0.0
  %2734 = vmatpush1.xpose.msra.mxu0 0.0
  %2735 = vmatprep.subr.mxu0 0.0
  %2736 = vmatpush1.xpose.msra.mxu0 0.0
  %2737 = vmatprep.subr.mxu0 0.0
  %2738 = vmatpush1.xpose.msra.mxu0 0.0
  %2739 = vmatprep.subr.mxu0 0.0
  %2740 = vmatpush1.xpose.msra.mxu0 0.0
  %2741 = vmatprep.subr.mxu0 0.0
  %2742 = vmatpush1.xpose.msra.mxu0 0.0
  %2743 = vmatprep.subr.mxu0 0.0
  %2744 = vmatpush1.xpose.msra.mxu0 0.0
  %2745 = vmatprep.subr.mxu0 0.0
  %2746 = vmatpush1.xpose.msra.mxu0 0.0
  %2747 = vmatprep.mubr.f32.mxu0 0.0
  %2748 = vmatmul.mubr.f32.gmra.mrb[0].mxu0 %v2678
  %v2749 = vpop.f32.mrb[0].mxu0
  %v2750 = vadd.f32 %v2172, %v2749
  %v2751 = vpop.f32.mrb[0].mxu0
  %2752 = vmatprep.mubr.f32.mxu0 0.0
  %2753 = vmatmul.mubr.f32.gmra.mrb[0].mxu0 %v2681
  %v2754 = vpop.f32.mrb[0].mxu0
  %v2755 = vadd.f32 %v2173, %v2754
  %v2756 = vpop.f32.mrb[0].mxu0
  %2757 = vdwg.mxu0
  %vm2758 = vcmask 130048
  %v2759 = vsel %vm2758, %v2507, -inf
  %2760 = vmax.xlane.f32.xlu0 %v2759
  %v2761 = vpop.xlane.xlu0 %2760
  %v2762 = vsel %vm2758, %v2512, -inf
  %2763 = vmax.xlane.f32.xlu0 %v2762
  %v2764 = vpop.xlane.xlu0 %2763
  %v2765 = vsel %vm2758, %v2588, -inf
  %2766 = vmax.xlane.f32.xlu0 %v2765
  %v2767 = vpop.xlane.xlu0 %2766
  %v2768 = vsel %vm2758, %v2593, -inf
  %2769 = vmax.xlane.f32.xlu0 %v2768
  %v2770 = vpop.xlane.xlu0 %2769
  %v2771 = vsel %vm2758, %v2669, -inf
  %2772 = vmax.xlane.f32.xlu0 %v2771
  %v2773 = vpop.xlane.xlu0 %2772
  %v2774 = vsel %vm2758, %v2674, -inf
  %2775 = vmax.xlane.f32.xlu0 %v2774
  %v2776 = vpop.xlane.xlu0 %2775
  %v2777 = vsel %vm2758, %v2750, -inf
  %2778 = vmax.xlane.f32.xlu0 %v2777
  %v2779 = vpop.xlane.xlu0 %2778
  %v2780 = vsel %vm2758, %v2755, -inf
  %2781 = vmax.xlane.f32.xlu0 %v2780
  %v2782 = vpop.xlane.xlu0 %2781
  %v2783 = vsub.f32 %v2507, %v2761
  %v2784 = vsub.f32 %v2512, %v2764
  %v2785 = vsub.f32 %v2588, %v2767
  %v2786 = vsub.f32 %v2593, %v2770
  %v2787 = vsub.f32 %v2669, %v2773
  %v2788 = vsub.f32 %v2674, %v2776
  %v2789 = vsub.f32 %v2750, %v2779
  %v2790 = vsub.f32 %v2755, %v2782
  %v2791 = vmul.f32 %v2783, 1.442695
  %v2792 = vpow.pop %v2791
  %v2793 = vmul.f32 %v2784, 1.442695
  %v2794 = vpow.pop %v2793
  %v2795 = vmul.f32 %v2785, 1.442695
  %v2796 = vpow.pop %v2795
  %v2797 = vmul.f32 %v2786, 1.442695
  %v2798 = vpow.pop %v2797
  %v2799 = vmul.f32 %v2787, 1.442695
  %v2800 = vpow.pop %v2799
  %v2801 = vmul.f32 %v2788, 1.442695
  %v2802 = vpow.pop %v2801
  %v2803 = vmul.f32 %v2789, 1.442695
  %v2804 = vpow.pop %v2803
  %v2805 = vmul.f32 %v2790, 1.442695
  %v2806 = vpow.pop %v2805
  %v2807 = vsel %vm2758, %v2792, 0.0
  %2808 = vadd.xlane.f32.xlu0 %v2807
  %v2809 = vpop.xlane.xlu0 %2808
  %v2810 = vsel %vm2758, %v2794, 0.0
  %2811 = vadd.xlane.f32.xlu0 %v2810
  %v2812 = vpop.xlane.xlu0 %2811
  %v2813 = vsel %vm2758, %v2796, 0.0
  %2814 = vadd.xlane.f32.xlu0 %v2813
  %v2815 = vpop.xlane.xlu0 %2814
  %v2816 = vsel %vm2758, %v2798, 0.0
  %2817 = vadd.xlane.f32.xlu0 %v2816
  %v2818 = vpop.xlane.xlu0 %2817
  %v2819 = vsel %vm2758, %v2800, 0.0
  %2820 = vadd.xlane.f32.xlu0 %v2819
  %v2821 = vpop.xlane.xlu0 %2820
  %v2822 = vsel %vm2758, %v2802, 0.0
  %2823 = vadd.xlane.f32.xlu0 %v2822
  %v2824 = vpop.xlane.xlu0 %2823
  %v2825 = vsel %vm2758, %v2804, 0.0
  %2826 = vadd.xlane.f32.xlu0 %v2825
  %v2827 = vpop.xlane.xlu0 %2826
  %v2828 = vsel %vm2758, %v2806, 0.0
  %2829 = vadd.xlane.f32.xlu0 %v2828
  %v2830 = vpop.xlane.xlu0 %2829
  %v2831 = vrcp.pop %v2809
  %v2832 = vrcp.pop %v2812
  %v2833 = vrcp.pop %v2815
  %v2834 = vrcp.pop %v2818
  %v2835 = vrcp.pop %v2821
  %v2836 = vrcp.pop %v2824
  %v2837 = vrcp.pop %v2827
  %v2838 = vrcp.pop %v2830
  %v2839 = vmul.f32 %v2792, %v2831
  %v2840 = vmul.f32 %v2794, %v2832
  %v2841 = vmul.f32 %v2796, %v2833
  %v2842 = vmul.f32 %v2798, %v2834
  %v2843 = vmul.f32 %v2800, %v2835
  %v2844 = vmul.f32 %v2802, %v2836
  %v2845 = vmul.f32 %v2804, %v2837
  %v2846 = vmul.f32 %v2806, %v2838
  %v2847 = vmul.f32 %v2412, %v1060
  %v2848 = vmul.f32 %v2417, %v1060
  %v2849 = vmul.f32 %v2412, %v1064
  %v2850 = vmul.f32 %v2417, %v1064
  %v2851 = vmul.f32 %v2412, %v1068
  %v2852 = vmul.f32 %v2417, %v1068
  %v2853 = vmul.f32 %v2412, %v1072
  %v2854 = vmul.f32 %v2417, %v1072
  %v2856 = vsel %vm2758, %v2839, 0
  %v2859 = vsel %vm2758, %v2840, 0
  %2861 = vmatprep.subr.mxu0 0.0
  %2862 = vmatpush1.msra.mxu0 %v2847
  %2863 = vmatprep.subr.mxu0 0.0
  %2864 = vmatpush1.msra.mxu0 %v2848
  %2865 = vmatprep.subr.mxu0 0.0
  %2866 = vmatpush1.msra.mxu0 0.0
  %2867 = vmatprep.subr.mxu0 0.0
  %2868 = vmatpush1.msra.mxu0 0.0
  %2869 = vmatprep.subr.mxu0 0.0
  %2870 = vmatpush1.msra.mxu0 0.0
  %2871 = vmatprep.subr.mxu0 0.0
  %2872 = vmatpush1.msra.mxu0 0.0
  %2873 = vmatprep.subr.mxu0 0.0
  %2874 = vmatpush1.msra.mxu0 0.0
  %2875 = vmatprep.subr.mxu0 0.0
  %2876 = vmatpush1.msra.mxu0 0.0
  %2877 = vmatprep.subr.mxu0 0.0
  %2878 = vmatpush1.msra.mxu0 0.0
  %2879 = vmatprep.subr.mxu0 0.0
  %2880 = vmatpush1.msra.mxu0 0.0
  %2881 = vmatprep.subr.mxu0 0.0
  %2882 = vmatpush1.msra.mxu0 0.0
  %2883 = vmatprep.subr.mxu0 0.0
  %2884 = vmatpush1.msra.mxu0 0.0
  %2885 = vmatprep.subr.mxu0 0.0
  %2886 = vmatpush1.msra.mxu0 0.0
  %2887 = vmatprep.subr.mxu0 0.0
  %2888 = vmatpush1.msra.mxu0 0.0
  %2889 = vmatprep.subr.mxu0 0.0
  %2890 = vmatpush1.msra.mxu0 0.0
  %2891 = vmatprep.subr.mxu0 0.0
  %2892 = vmatpush1.msra.mxu0 0.0
  %2893 = vmatprep.subr.mxu0 0.0
  %2894 = vmatpush1.msra.mxu0 0.0
  %2895 = vmatprep.subr.mxu0 0.0
  %2896 = vmatpush1.msra.mxu0 0.0
  %2897 = vmatprep.subr.mxu0 0.0
  %2898 = vmatpush1.msra.mxu0 0.0
  %2899 = vmatprep.subr.mxu0 0.0
  %2900 = vmatpush1.msra.mxu0 0.0
  %2901 = vmatprep.subr.mxu0 0.0
  %2902 = vmatpush1.msra.mxu0 0.0
  %2903 = vmatprep.subr.mxu0 0.0
  %2904 = vmatpush1.msra.mxu0 0.0
  %2905 = vmatprep.subr.mxu0 0.0
  %2906 = vmatpush1.msra.mxu0 0.0
  %2907 = vmatprep.subr.mxu0 0.0
  %2908 = vmatpush1.msra.mxu0 0.0
  %2909 = vmatprep.subr.mxu0 0.0
  %2910 = vmatpush1.msra.mxu0 0.0
  %2911 = vmatprep.subr.mxu0 0.0
  %2912 = vmatpush1.msra.mxu0 0.0
  %2913 = vmatprep.subr.mxu0 0.0
  %2914 = vmatpush1.msra.mxu0 0.0
  %2915 = vmatprep.subr.mxu0 0.0
  %2916 = vmatpush1.msra.mxu0 0.0
  %2917 = vmatprep.subr.mxu0 0.0
  %2918 = vmatpush1.msra.mxu0 0.0
  %2919 = vmatprep.subr.mxu0 0.0
  %2920 = vmatpush1.msra.mxu0 0.0
  %2921 = vmatprep.subr.mxu0 0.0
  %2922 = vmatpush1.msra.mxu0 0.0
  %2923 = vmatprep.subr.mxu0 0.0
  %2924 = vmatpush1.msra.mxu0 0.0
  %2925 = vmatprep.mubr.f32.mxu0 0.0
  %2926 = vmatmul.mubr.f32.gmra.mrb[0].mxu0 %v2856
  %v2927 = vpop.f32.mrb[0].mxu0
  %v2928 = vadd.f32 0.0, %v2927
  %v2929 = vpop.f32.mrb[0].mxu0
  %2930 = vmatprep.mubr.f32.mxu0 0.0
  %2931 = vmatmul.mubr.f32.gmra.mrb[0].mxu0 %v2859
  %v2932 = vpop.f32.mrb[0].mxu0
  %v2933 = vadd.f32 0.0, %v2932
  %v2934 = vpop.f32.mrb[0].mxu0
  %2935 = vdwg.mxu0
  %v2937 = vsel %vm2758, %v2841, 0
  %v2940 = vsel %vm2758, %v2842, 0
  %2942 = vmatprep.subr.mxu0 0.0
  %2943 = vmatpush1.msra.mxu0 %v2849
  %2944 = vmatprep.subr.mxu0 0.0
  %2945 = vmatpush1.msra.mxu0 %v2850
  %2946 = vmatprep.subr.mxu0 0.0
  %2947 = vmatpush1.msra.mxu0 0.0
  %2948 = vmatprep.subr.mxu0 0.0
  %2949 = vmatpush1.msra.mxu0 0.0
  %2950 = vmatprep.subr.mxu0 0.0
  %2951 = vmatpush1.msra.mxu0 0.0
  %2952 = vmatprep.subr.mxu0 0.0
  %2953 = vmatpush1.msra.mxu0 0.0
  %2954 = vmatprep.subr.mxu0 0.0
  %2955 = vmatpush1.msra.mxu0 0.0
  %2956 = vmatprep.subr.mxu0 0.0
  %2957 = vmatpush1.msra.mxu0 0.0
  %2958 = vmatprep.subr.mxu0 0.0
  %2959 = vmatpush1.msra.mxu0 0.0
  %2960 = vmatprep.subr.mxu0 0.0
  %2961 = vmatpush1.msra.mxu0 0.0
  %2962 = vmatprep.subr.mxu0 0.0
  %2963 = vmatpush1.msra.mxu0 0.0
  %2964 = vmatprep.subr.mxu0 0.0
  %2965 = vmatpush1.msra.mxu0 0.0
  %2966 = vmatprep.subr.mxu0 0.0
  %2967 = vmatpush1.msra.mxu0 0.0
  %2968 = vmatprep.subr.mxu0 0.0
  %2969 = vmatpush1.msra.mxu0 0.0
  %2970 = vmatprep.subr.mxu0 0.0
  %2971 = vmatpush1.msra.mxu0 0.0
  %2972 = vmatprep.subr.mxu0 0.0
  %2973 = vmatpush1.msra.mxu0 0.0
  %2974 = vmatprep.subr.mxu0 0.0
  %2975 = vmatpush1.msra.mxu0 0.0
  %2976 = vmatprep.subr.mxu0 0.0
  %2977 = vmatpush1.msra.mxu0 0.0
  %2978 = vmatprep.subr.mxu0 0.0
  %2979 = vmatpush1.msra.mxu0 0.0
  %2980 = vmatprep.subr.mxu0 0.0
  %2981 = vmatpush1.msra.mxu0 0.0
  %2982 = vmatprep.subr.mxu0 0.0
  %2983 = vmatpush1.msra.mxu0 0.0
  %2984 = vmatprep.subr.mxu0 0.0
  %2985 = vmatpush1.msra.mxu0 0.0
  %2986 = vmatprep.subr.mxu0 0.0
  %2987 = vmatpush1.msra.mxu0 0.0
  %2988 = vmatprep.subr.mxu0 0.0
  %2989 = vmatpush1.msra.mxu0 0.0
  %2990 = vmatprep.subr.mxu0 0.0
  %2991 = vmatpush1.msra.mxu0 0.0
  %2992 = vmatprep.subr.mxu0 0.0
  %2993 = vmatpush1.msra.mxu0 0.0
  %2994 = vmatprep.subr.mxu0 0.0
  %2995 = vmatpush1.msra.mxu0 0.0
  %2996 = vmatprep.subr.mxu0 0.0
  %2997 = vmatpush1.msra.mxu0 0.0
  %2998 = vmatprep.subr.mxu0 0.0
  %2999 = vmatpush1.msra.mxu0 0.0
  %3000 = vmatprep.subr.mxu0 0.0
  %3001 = vmatpush1.msra.mxu0 0.0
  %3002 = vmatprep.subr.mxu0 0.0
  %3003 = vmatpush1.msra.mxu0 0.0
  %3004 = vmatprep.subr.mxu0 0.0
  %3005 = vmatpush1.msra.mxu0 0.0
  %3006 = vmatprep.mubr.f32.mxu0 0.0
  %3007 = vmatmul.mubr.f32.gmra.mrb[0].mxu0 %v2937
  %v3008 = vpop.f32.mrb[0].mxu0
  %v3009 = vadd.f32 0.0, %v3008
  %v3010 = vpop.f32.mrb[0].mxu0
  %3011 = vmatprep.mubr.f32.mxu0 0.0
  %3012 = vmatmul.mubr.f32.gmra.mrb[0].mxu0 %v2940
  %v3013 = vpop.f32.mrb[0].mxu0
  %v3014 = vadd.f32 0.0, %v3013
  %v3015 = vpop.f32.mrb[0].mxu0
  %3016 = vdwg.mxu0
  %v3018 = vsel %vm2758, %v2843, 0
  %v3021 = vsel %vm2758, %v2844, 0
  %3023 = vmatprep.subr.mxu0 0.0
  %3024 = vmatpush1.msra.mxu0 %v2851
  %3025 = vmatprep.subr.mxu0 0.0
  %3026 = vmatpush1.msra.mxu0 %v2852
  %3027 = vmatprep.subr.mxu0 0.0
  %3028 = vmatpush1.msra.mxu0 0.0
  %3029 = vmatprep.subr.mxu0 0.0
  %3030 = vmatpush1.msra.mxu0 0.0
  %3031 = vmatprep.subr.mxu0 0.0
  %3032 = vmatpush1.msra.mxu0 0.0
  %3033 = vmatprep.subr.mxu0 0.0
  %3034 = vmatpush1.msra.mxu0 0.0
  %3035 = vmatprep.subr.mxu0 0.0
  %3036 = vmatpush1.msra.mxu0 0.0
  %3037 = vmatprep.subr.mxu0 0.0
  %3038 = vmatpush1.msra.mxu0 0.0
  %3039 = vmatprep.subr.mxu0 0.0
  %3040 = vmatpush1.msra.mxu0 0.0
  %3041 = vmatprep.subr.mxu0 0.0
  %3042 = vmatpush1.msra.mxu0 0.0
  %3043 = vmatprep.subr.mxu0 0.0
  %3044 = vmatpush1.msra.mxu0 0.0
  %3045 = vmatprep.subr.mxu0 0.0
  %3046 = vmatpush1.msra.mxu0 0.0
  %3047 = vmatprep.subr.mxu0 0.0
  %3048 = vmatpush1.msra.mxu0 0.0
  %3049 = vmatprep.subr.mxu0 0.0
  %3050 = vmatpush1.msra.mxu0 0.0
  %3051 = vmatprep.subr.mxu0 0.0
  %3052 = vmatpush1.msra.mxu0 0.0
  %3053 = vmatprep.subr.mxu0 0.0
  %3054 = vmatpush1.msra.mxu0 0.0
  %3055 = vmatprep.subr.mxu0 0.0
  %3056 = vmatpush1.msra.mxu0 0.0
  %3057 = vmatprep.subr.mxu0 0.0
  %3058 = vmatpush1.msra.mxu0 0.0
  %3059 = vmatprep.subr.mxu0 0.0
  %3060 = vmatpush1.msra.mxu0 0.0
  %3061 = vmatprep.subr.mxu0 0.0
  %3062 = vmatpush1.msra.mxu0 0.0
  %3063 = vmatprep.subr.mxu0 0.0
  %3064 = vmatpush1.msra.mxu0 0.0
  %3065 = vmatprep.subr.mxu0 0.0
  %3066 = vmatpush1.msra.mxu0 0.0
  %3067 = vmatprep.subr.mxu0 0.0
  %3068 = vmatpush1.msra.mxu0 0.0
  %3069 = vmatprep.subr.mxu0 0.0
  %3070 = vmatpush1.msra.mxu0 0.0
  %3071 = vmatprep.subr.mxu0 0.0
  %3072 = vmatpush1.msra.mxu0 0.0
  %3073 = vmatprep.subr.mxu0 0.0
  %3074 = vmatpush1.msra.mxu0 0.0
  %3075 = vmatprep.subr.mxu0 0.0
  %3076 = vmatpush1.msra.mxu0 0.0
  %3077 = vmatprep.subr.mxu0 0.0
  %3078 = vmatpush1.msra.mxu0 0.0
  %3079 = vmatprep.subr.mxu0 0.0
  %3080 = vmatpush1.msra.mxu0 0.0
  %3081 = vmatprep.subr.mxu0 0.0
  %3082 = vmatpush1.msra.mxu0 0.0
  %3083 = vmatprep.subr.mxu0 0.0
  %3084 = vmatpush1.msra.mxu0 0.0
  %3085 = vmatprep.subr.mxu0 0.0
  %3086 = vmatpush1.msra.mxu0 0.0
  %3087 = vmatprep.mubr.f32.mxu0 0.0
  %3088 = vmatmul.mubr.f32.gmra.mrb[0].mxu0 %v3018
  %v3089 = vpop.f32.mrb[0].mxu0
  %v3090 = vadd.f32 0.0, %v3089
  %v3091 = vpop.f32.mrb[0].mxu0
  %3092 = vmatprep.mubr.f32.mxu0 0.0
  %3093 = vmatmul.mubr.f32.gmra.mrb[0].mxu0 %v3021
  %v3094 = vpop.f32.mrb[0].mxu0
  %v3095 = vadd.f32 0.0, %v3094
  %v3096 = vpop.f32.mrb[0].mxu0
  %3097 = vdwg.mxu0
  %v3099 = vsel %vm2758, %v2845, 0
  %v3102 = vsel %vm2758, %v2846, 0
  %3104 = vmatprep.subr.mxu0 0.0
  %3105 = vmatpush1.msra.mxu0 %v2853
  %3106 = vmatprep.subr.mxu0 0.0
  %3107 = vmatpush1.msra.mxu0 %v2854
  %3108 = vmatprep.subr.mxu0 0.0
  %3109 = vmatpush1.msra.mxu0 0.0
  %3110 = vmatprep.subr.mxu0 0.0
  %3111 = vmatpush1.msra.mxu0 0.0
  %3112 = vmatprep.subr.mxu0 0.0
  %3113 = vmatpush1.msra.mxu0 0.0
  %3114 = vmatprep.subr.mxu0 0.0
  %3115 = vmatpush1.msra.mxu0 0.0
  %3116 = vmatprep.subr.mxu0 0.0
  %3117 = vmatpush1.msra.mxu0 0.0
  %3118 = vmatprep.subr.mxu0 0.0
  %3119 = vmatpush1.msra.mxu0 0.0
  %3120 = vmatprep.subr.mxu0 0.0
  %3121 = vmatpush1.msra.mxu0 0.0
  %3122 = vmatprep.subr.mxu0 0.0
  %3123 = vmatpush1.msra.mxu0 0.0
  %3124 = vmatprep.subr.mxu0 0.0
  %3125 = vmatpush1.msra.mxu0 0.0
  %3126 = vmatprep.subr.mxu0 0.0
  %3127 = vmatpush1.msra.mxu0 0.0
  %3128 = vmatprep.subr.mxu0 0.0
  %3129 = vmatpush1.msra.mxu0 0.0
  %3130 = vmatprep.subr.mxu0 0.0
  %3131 = vmatpush1.msra.mxu0 0.0
  %3132 = vmatprep.subr.mxu0 0.0
  %3133 = vmatpush1.msra.mxu0 0.0
  %3134 = vmatprep.subr.mxu0 0.0
  %3135 = vmatpush1.msra.mxu0 0.0
  %3136 = vmatprep.subr.mxu0 0.0
  %3137 = vmatpush1.msra.mxu0 0.0
  %3138 = vmatprep.subr.mxu0 0.0
  %3139 = vmatpush1.msra.mxu0 0.0
  %3140 = vmatprep.subr.mxu0 0.0
  %3141 = vmatpush1.msra.mxu0 0.0
  %3142 = vmatprep.subr.mxu0 0.0
  %3143 = vmatpush1.msra.mxu0 0.0
  %3144 = vmatprep.subr.mxu0 0.0
  %3145 = vmatpush1.msra.mxu0 0.0
  %3146 = vmatprep.subr.mxu0 0.0
  %3147 = vmatpush1.msra.mxu0 0.0
  %3148 = vmatprep.subr.mxu0 0.0
  %3149 = vmatpush1.msra.mxu0 0.0
  %3150 = vmatprep.subr.mxu0 0.0
  %3151 = vmatpush1.msra.mxu0 0.0
  %3152 = vmatprep.subr.mxu0 0.0
  %3153 = vmatpush1.msra.mxu0 0.0
  %3154 = vmatprep.subr.mxu0 0.0
  %3155 = vmatpush1.msra.mxu0 0.0
  %3156 = vmatprep.subr.mxu0 0.0
  %3157 = vmatpush1.msra.mxu0 0.0
  %3158 = vmatprep.subr.mxu0 0.0
  %3159 = vmatpush1.msra.mxu0 0.0
  %3160 = vmatprep.subr.mxu0 0.0
  %3161 = vmatpush1.msra.mxu0 0.0
  %3162 = vmatprep.subr.mxu0 0.0
  %3163 = vmatpush1.msra.mxu0 0.0
  %3164 = vmatprep.subr.mxu0 0.0
  %3165 = vmatpush1.msra.mxu0 0.0
  %3166 = vmatprep.subr.mxu0 0.0
  %3167 = vmatpush1.msra.mxu0 0.0
  %3168 = vmatprep.mubr.f32.mxu0 0.0
  %3169 = vmatmul.mubr.f32.gmra.mrb[0].mxu0 %v3099
  %v3170 = vpop.f32.mrb[0].mxu0
  %v3171 = vadd.f32 0.0, %v3170
  %v3172 = vpop.f32.mrb[0].mxu0
  %3173 = vmatprep.mubr.f32.mxu0 0.0
  %3174 = vmatmul.mubr.f32.gmra.mrb[0].mxu0 %v3102
  %v3175 = vpop.f32.mrb[0].mxu0
  %v3176 = vadd.f32 0.0, %v3175
  %v3177 = vpop.f32.mrb[0].mxu0
  %3178 = vdwg.mxu0
  %v3179 = vsel %vm258, %v2928, 0.0
  %v3180 = vsel %vm258, %v3009, 0.0
  %v3181 = vadd.f32 %v3179, %v3180
  %v3182 = vsel %vm258, %v3090, 0.0
  %v3183 = vadd.f32 %v3181, %v3182
  %v3184 = vsel %vm258, %v3171, 0.0
  %v3185 = vadd.f32 %v3183, %v3184
  %v3186 = vsel %vm258, %v2933, 0.0
  %v3187 = vsel %vm258, %v3014, 0.0
  %v3188 = vadd.f32 %v3186, %v3187
  %v3189 = vsel %vm258, %v3095, 0.0
  %v3190 = vadd.f32 %v3188, %v3189
  %v3191 = vsel %vm258, %v3176, 0.0
  %v3192 = vadd.f32 %v3190, %v3191
  %v3193 = vld [vmem:[%s8 + $0x58] sm:$0xff]
  %v3194 = vld [vmem:[%s8 + $0x100] sm:$0xff]
  %v3195 = vld [vmem:[%s8 + $0x1a8] sm:$0xff]
  %v3196 = vld [vmem:[%s8 + $0x250] sm:$0xff]
  %v3197 = vld [vmem:[%s10 + $0x41] ss:$0 sm:$0xff]
  %v3199 = vsel %vm258, %v3185, 0
  %v3202 = vsel %vm258, %v3192, 0
  %3204 = vmatprep.subr.mxu0 0.0
  %3205 = vmatpush1.msra.mxu0 %v3193
  %3206 = vmatprep.subr.mxu0 0.0
  %3207 = vmatpush1.msra.mxu0 %v3194
  %3208 = vmatprep.subr.mxu0 0.0
  %3209 = vmatpush1.msra.mxu0 %v3195
  %3210 = vmatprep.subr.mxu0 0.0
  %3211 = vmatpush1.msra.mxu0 %v3196
  %3212 = vmatprep.subr.mxu0 0.0
  %3213 = vmatpush1.msra.mxu0 0.0
  %3214 = vmatprep.subr.mxu0 0.0
  %3215 = vmatpush1.msra.mxu0 0.0
  %3216 = vmatprep.subr.mxu0 0.0
  %3217 = vmatpush1.msra.mxu0 0.0
  %3218 = vmatprep.subr.mxu0 0.0
  %3219 = vmatpush1.msra.mxu0 0.0
  %3220 = vmatprep.subr.mxu0 0.0
  %3221 = vmatpush1.msra.mxu0 0.0
  %3222 = vmatprep.subr.mxu0 0.0
  %3223 = vmatpush1.msra.mxu0 0.0
  %3224 = vmatprep.subr.mxu0 0.0
  %3225 = vmatpush1.msra.mxu0 0.0
  %3226 = vmatprep.subr.mxu0 0.0
  %3227 = vmatpush1.msra.mxu0 0.0
  %3228 = vmatprep.subr.mxu0 0.0
  %3229 = vmatpush1.msra.mxu0 0.0
  %3230 = vmatprep.subr.mxu0 0.0
  %3231 = vmatpush1.msra.mxu0 0.0
  %3232 = vmatprep.subr.mxu0 0.0
  %3233 = vmatpush1.msra.mxu0 0.0
  %3234 = vmatprep.subr.mxu0 0.0
  %3235 = vmatpush1.msra.mxu0 0.0
  %3236 = vmatprep.subr.mxu0 0.0
  %3237 = vmatpush1.msra.mxu0 0.0
  %3238 = vmatprep.subr.mxu0 0.0
  %3239 = vmatpush1.msra.mxu0 0.0
  %3240 = vmatprep.subr.mxu0 0.0
  %3241 = vmatpush1.msra.mxu0 0.0
  %3242 = vmatprep.subr.mxu0 0.0
  %3243 = vmatpush1.msra.mxu0 0.0
  %3244 = vmatprep.subr.mxu0 0.0
  %3245 = vmatpush1.msra.mxu0 0.0
  %3246 = vmatprep.subr.mxu0 0.0
  %3247 = vmatpush1.msra.mxu0 0.0
  %3248 = vmatprep.subr.mxu0 0.0
  %3249 = vmatpush1.msra.mxu0 0.0
  %3250 = vmatprep.subr.mxu0 0.0
  %3251 = vmatpush1.msra.mxu0 0.0
  %3252 = vmatprep.subr.mxu0 0.0
  %3253 = vmatpush1.msra.mxu0 0.0
  %3254 = vmatprep.subr.mxu0 0.0
  %3255 = vmatpush1.msra.mxu0 0.0
  %3256 = vmatprep.subr.mxu0 0.0
  %3257 = vmatpush1.msra.mxu0 0.0
  %3258 = vmatprep.subr.mxu0 0.0
  %3259 = vmatpush1.msra.mxu0 0.0
  %3260 = vmatprep.subr.mxu0 0.0
  %3261 = vmatpush1.msra.mxu0 0.0
  %3262 = vmatprep.subr.mxu0 0.0
  %3263 = vmatpush1.msra.mxu0 0.0
  %3264 = vmatprep.subr.mxu0 0.0
  %3265 = vmatpush1.msra.mxu0 0.0
  %3266 = vmatprep.subr.mxu0 0.0
  %3267 = vmatpush1.msra.mxu0 0.0
  %3268 = vmatprep.mubr.f32.mxu0 0.0
  %3269 = vmatmul.mubr.f32.gmra.mrb[0].mxu0 %v3199
  %v3270 = vpop.f32.mrb[0].mxu0
  %v3271 = vadd.f32 %v3197, %v3270
  %v3272 = vpop.f32.mrb[0].mxu0
  %3273 = vmatprep.mubr.f32.mxu0 0.0
  %3274 = vmatmul.mubr.f32.gmra.mrb[0].mxu0 %v3202
  %v3275 = vpop.f32.mrb[0].mxu0
  %v3276 = vadd.f32 %v3197, %v3275
  %v3277 = vpop.f32.mrb[0].mxu0
  %3278 = vdwg.mxu0
  %v3279 = vadd.f32 %v248, %v3271
  %v3280 = vadd.f32 %v249, %v3276
  %v3281 = vsel %vm258, %v3279, 0.0
  %3282 = vadd.xlane.f32.xlu0 %v3281
  %v3283 = vpop.xlane.xlu0 %3282
  %v3284 = vsel %vm258, %v3280, 0.0
  %3285 = vadd.xlane.f32.xlu0 %v3284
  %v3286 = vpop.xlane.xlu0 %3285
  %v3287 = vmul.f32 %v3283, %v1585
  %v3288 = vmul.f32 %v3286, %v1585
  %v3289 = vsub.f32 %v3279, %v3287
  %v3290 = vsub.f32 %v3280, %v3288
  %v3291 = vmul.f32 %v3289, %v3289
  %v3292 = vmul.f32 %v3290, %v3290
  %v3293 = vsel %vm258, %v3291, 0.0
  %3294 = vadd.xlane.f32.xlu0 %v3293
  %v3295 = vpop.xlane.xlu0 %3294
  %v3296 = vsel %vm258, %v3292, 0.0
  %3297 = vadd.xlane.f32.xlu0 %v3296
  %v3298 = vpop.xlane.xlu0 %3297
  %v3299 = vmul.f32 %v3295, %v1585
  %v3300 = vmul.f32 %v3298, %v1585
  %v3301 = vadd.f32 %v3299, 1e-05
  %v3302 = vadd.f32 %v3300, 1e-05
  %v3303 = vrsqrt.pop %v3301
  %v3304 = vrsqrt.pop %v3302
  %v3305 = vmul.f32 %v3289, %v3303
  %v3306 = vmul.f32 %v3290, %v3304
  %v3307 = vld [vmem:[%s10 + $0x44] ss:$0 sm:$0xff]
  %v3308 = vmul.f32 %v3305, %v3307
  %v3309 = vmul.f32 %v3306, %v3307
  %v3310 = vld [vmem:[%s10 + $0x45] ss:$0 sm:$0xff]
  %v3311 = vadd.f32 %v3308, %v3310
  %v3312 = vadd.f32 %v3309, %v3310
  %v3313 = vld [vmem:[%s7] sm:$0xff]
  %v3314 = vld [vmem:[%s7 + $0x8] sm:$0xff]
  %v3315 = vld [vmem:[%s8 + $0x80] sm:$0xff]
  %v3316 = vld [vmem:[%s8 + $0x128] sm:$0xff]
  %v3317 = vld [vmem:[%s8 + $0x1d0] sm:$0xff]
  %v3318 = vld [vmem:[%s8 + $0x278] sm:$0xff]
  %v3319 = vld [vmem:[%s10 + $0x64] ss:$0 sm:$0xff]
  %v3321 = vsel %vm258, %v3311, 0
  %v3324 = vsel %vm258, %v3312, 0
  %3326 = vmatprep.subr.mxu0 0.0
  %3327 = vmatpush1.msra.mxu0 %v3315
  %3328 = vmatprep.subr.mxu0 0.0
  %3329 = vmatpush1.msra.mxu0 %v3316
  %3330 = vmatprep.subr.mxu0 0.0
  %3331 = vmatpush1.msra.mxu0 %v3317
  %3332 = vmatprep.subr.mxu0 0.0
  %3333 = vmatpush1.msra.mxu0 %v3318
  %3334 = vmatprep.subr.mxu0 0.0
  %3335 = vmatpush1.msra.mxu0 0.0
  %3336 = vmatprep.subr.mxu0 0.0
  %3337 = vmatpush1.msra.mxu0 0.0
  %3338 = vmatprep.subr.mxu0 0.0
  %3339 = vmatpush1.msra.mxu0 0.0
  %3340 = vmatprep.subr.mxu0 0.0
  %3341 = vmatpush1.msra.mxu0 0.0
  %3342 = vmatprep.subr.mxu0 0.0
  %3343 = vmatpush1.msra.mxu0 0.0
  %3344 = vmatprep.subr.mxu0 0.0
  %3345 = vmatpush1.msra.mxu0 0.0
  %3346 = vmatprep.subr.mxu0 0.0
  %3347 = vmatpush1.msra.mxu0 0.0
  %3348 = vmatprep.subr.mxu0 0.0
  %3349 = vmatpush1.msra.mxu0 0.0
  %3350 = vmatprep.subr.mxu0 0.0
  %3351 = vmatpush1.msra.mxu0 0.0
  %3352 = vmatprep.subr.mxu0 0.0
  %3353 = vmatpush1.msra.mxu0 0.0
  %3354 = vmatprep.subr.mxu0 0.0
  %3355 = vmatpush1.msra.mxu0 0.0
  %3356 = vmatprep.subr.mxu0 0.0
  %3357 = vmatpush1.msra.mxu0 0.0
  %3358 = vmatprep.subr.mxu0 0.0
  %3359 = vmatpush1.msra.mxu0 0.0
  %3360 = vmatprep.subr.mxu0 0.0
  %3361 = vmatpush1.msra.mxu0 0.0
  %3362 = vmatprep.subr.mxu0 0.0
  %3363 = vmatpush1.msra.mxu0 0.0
  %3364 = vmatprep.subr.mxu0 0.0
  %3365 = vmatpush1.msra.mxu0 0.0
  %3366 = vmatprep.subr.mxu0 0.0
  %3367 = vmatpush1.msra.mxu0 0.0
  %3368 = vmatprep.subr.mxu0 0.0
  %3369 = vmatpush1.msra.mxu0 0.0
  %3370 = vmatprep.subr.mxu0 0.0
  %3371 = vmatpush1.msra.mxu0 0.0
  %3372 = vmatprep.subr.mxu0 0.0
  %3373 = vmatpush1.msra.mxu0 0.0
  %3374 = vmatprep.subr.mxu0 0.0
  %3375 = vmatpush1.msra.mxu0 0.0
  %3376 = vmatprep.subr.mxu0 0.0
  %3377 = vmatpush1.msra.mxu0 0.0
  %3378 = vmatprep.subr.mxu0 0.0
  %3379 = vmatpush1.msra.mxu0 0.0
  %3380 = vmatprep.subr.mxu0 0.0
  %3381 = vmatpush1.msra.mxu0 0.0
  %3382 = vmatprep.subr.mxu0 0.0
  %3383 = vmatpush1.msra.mxu0 0.0
  %3384 = vmatprep.subr.mxu0 0.0
  %3385 = vmatpush1.msra.mxu0 0.0
  %3386 = vmatprep.subr.mxu0 0.0
  %3387 = vmatpush1.msra.mxu0 0.0
  %3388 = vmatprep.subr.mxu0 0.0
  %3389 = vmatpush1.msra.mxu0 0.0
  %3390 = vmatprep.mubr.f32.mxu0 0.0
  %3391 = vmatmul.mubr.f32.gmra.mrb[0].mxu0 %v3321
  %v3392 = vpop.f32.mrb[0].mxu0
  %v3393 = vadd.f32 %v3319, %v3392
  %v3394 = vpop.f32.mrb[0].mxu0
  %3395 = vmatprep.mubr.f32.mxu0 0.0
  %3396 = vmatmul.mubr.f32.gmra.mrb[0].mxu0 %v3324
  %v3397 = vpop.f32.mrb[0].mxu0
  %v3398 = vadd.f32 %v3319, %v3397
  %v3399 = vpop.f32.mrb[0].mxu0
  %3400 = vdwg.mxu0
  %v3401 = vld [vmem:[%s8 + $0x88] sm:$0xff]
  %v3402 = vld [vmem:[%s8 + $0x130] sm:$0xff]
  %v3403 = vld [vmem:[%s8 + $0x1d8] sm:$0xff]
  %v3404 = vld [vmem:[%s8 + $0x280] sm:$0xff]
  %v3405 = vld [vmem:[%s10 + $0x65] ss:$0 sm:$0xff]
  %v3407 = vsel %vm258, %v2169, 0
  %v3410 = vsel %vm258, %v2170, 0
  %v3413 = vsel %vm258, %v2171, 0
  %3415 = vmatprep.subr.mxu0 0.0
  %3416 = vmatpush1.msra.mxu0 %v3401
  %3417 = vmatprep.subr.mxu0 0.0
  %3418 = vmatpush1.msra.mxu0 %v3402
  %3419 = vmatprep.subr.mxu0 0.0
  %3420 = vmatpush1.msra.mxu0 %v3403
  %3421 = vmatprep.subr.mxu0 0.0
  %3422 = vmatpush1.msra.mxu0 %v3404
  %3423 = vmatprep.subr.mxu0 0.0
  %3424 = vmatpush1.msra.mxu0 0.0
  %3425 = vmatprep.subr.mxu0 0.0
  %3426 = vmatpush1.msra.mxu0 0.0
  %3427 = vmatprep.subr.mxu0 0.0
  %3428 = vmatpush1.msra.mxu0 0.0
  %3429 = vmatprep.subr.mxu0 0.0
  %3430 = vmatpush1.msra.mxu0 0.0
  %3431 = vmatprep.subr.mxu0 0.0
  %3432 = vmatpush1.msra.mxu0 0.0
  %3433 = vmatprep.subr.mxu0 0.0
  %3434 = vmatpush1.msra.mxu0 0.0
  %3435 = vmatprep.subr.mxu0 0.0
  %3436 = vmatpush1.msra.mxu0 0.0
  %3437 = vmatprep.subr.mxu0 0.0
  %3438 = vmatpush1.msra.mxu0 0.0
  %3439 = vmatprep.subr.mxu0 0.0
  %3440 = vmatpush1.msra.mxu0 0.0
  %3441 = vmatprep.subr.mxu0 0.0
  %3442 = vmatpush1.msra.mxu0 0.0
  %3443 = vmatprep.subr.mxu0 0.0
  %3444 = vmatpush1.msra.mxu0 0.0
  %3445 = vmatprep.subr.mxu0 0.0
  %3446 = vmatpush1.msra.mxu0 0.0
  %3447 = vmatprep.subr.mxu0 0.0
  %3448 = vmatpush1.msra.mxu0 0.0
  %3449 = vmatprep.subr.mxu0 0.0
  %3450 = vmatpush1.msra.mxu0 0.0
  %3451 = vmatprep.subr.mxu0 0.0
  %3452 = vmatpush1.msra.mxu0 0.0
  %3453 = vmatprep.subr.mxu0 0.0
  %3454 = vmatpush1.msra.mxu0 0.0
  %3455 = vmatprep.subr.mxu0 0.0
  %3456 = vmatpush1.msra.mxu0 0.0
  %3457 = vmatprep.subr.mxu0 0.0
  %3458 = vmatpush1.msra.mxu0 0.0
  %3459 = vmatprep.subr.mxu0 0.0
  %3460 = vmatpush1.msra.mxu0 0.0
  %3461 = vmatprep.subr.mxu0 0.0
  %3462 = vmatpush1.msra.mxu0 0.0
  %3463 = vmatprep.subr.mxu0 0.0
  %3464 = vmatpush1.msra.mxu0 0.0
  %3465 = vmatprep.subr.mxu0 0.0
  %3466 = vmatpush1.msra.mxu0 0.0
  %3467 = vmatprep.subr.mxu0 0.0
  %3468 = vmatpush1.msra.mxu0 0.0
  %3469 = vmatprep.subr.mxu0 0.0
  %3470 = vmatpush1.msra.mxu0 0.0
  %3471 = vmatprep.subr.mxu0 0.0
  %3472 = vmatpush1.msra.mxu0 0.0
  %3473 = vmatprep.subr.mxu0 0.0
  %3474 = vmatpush1.msra.mxu0 0.0
  %3475 = vmatprep.subr.mxu0 0.0
  %3476 = vmatpush1.msra.mxu0 0.0
  %3477 = vmatprep.subr.mxu0 0.0
  %3478 = vmatpush1.msra.mxu0 0.0
  %3479 = vmatprep.mubr.f32.mxu0 0.0
  %3480 = vmatmul.mubr.f32.gmra.mrb[0].mxu0 %v3407
  %v3481 = vpop.f32.mrb[0].mxu0
  %v3482 = vadd.f32 %v3405, %v3481
  %v3483 = vpop.f32.mrb[0].mxu0
  %3484 = vmatprep.mubr.f32.mxu0 0.0
  %3485 = vmatmul.mubr.f32.gmra.mrb[0].mxu0 %v3410
  %v3486 = vpop.f32.mrb[0].mxu0
  %v3487 = vadd.f32 %v3405, %v3486
  %v3488 = vpop.f32.mrb[0].mxu0
  %3489 = vmatprep.mubr.f32.mxu0 0.0
  %3490 = vmatmul.mubr.f32.gmra.mrb[0].mxu0 %v3413
  %v3491 = vpop.f32.mrb[0].mxu0
  %v3492 = vadd.f32 %v3405, %v3491
  %v3493 = vpop.f32.mrb[0].mxu0
  %3494 = vdwg.mxu0
  %v3495 = vld [vmem:[%s8 + $0x90] sm:$0xff]
  %v3496 = vld [vmem:[%s8 + $0x138] sm:$0xff]
  %v3497 = vld [vmem:[%s8 + $0x1e0] sm:$0xff]
  %v3498 = vld [vmem:[%s8 + $0x288] sm:$0xff]
  %v3499 = vld [vmem:[%s10 + $0x66] ss:$0 sm:$0xff]
  %3500 = vmatprep.subr.mxu0 0.0
  %3501 = vmatpush1.msra.mxu0 %v3495
  %3502 = vmatprep.subr.mxu0 0.0
  %3503 = vmatpush1.msra.mxu0 %v3496
  %3504 = vmatprep.subr.mxu0 0.0
  %3505 = vmatpush1.msra.mxu0 %v3497
  %3506 = vmatprep.subr.mxu0 0.0
  %3507 = vmatpush1.msra.mxu0 %v3498
  %3508 = vmatprep.subr.mxu0 0.0
  %3509 = vmatpush1.msra.mxu0 0.0
  %3510 = vmatprep.subr.mxu0 0.0
  %3511 = vmatpush1.msra.mxu0 0.0
  %3512 = vmatprep.subr.mxu0 0.0
  %3513 = vmatpush1.msra.mxu0 0.0
  %3514 = vmatprep.subr.mxu0 0.0
  %3515 = vmatpush1.msra.mxu0 0.0
  %3516 = vmatprep.subr.mxu0 0.0
  %3517 = vmatpush1.msra.mxu0 0.0
  %3518 = vmatprep.subr.mxu0 0.0
  %3519 = vmatpush1.msra.mxu0 0.0
  %3520 = vmatprep.subr.mxu0 0.0
  %3521 = vmatpush1.msra.mxu0 0.0
  %3522 = vmatprep.subr.mxu0 0.0
  %3523 = vmatpush1.msra.mxu0 0.0
  %3524 = vmatprep.subr.mxu0 0.0
  %3525 = vmatpush1.msra.mxu0 0.0
  %3526 = vmatprep.subr.mxu0 0.0
  %3527 = vmatpush1.msra.mxu0 0.0
  %3528 = vmatprep.subr.mxu0 0.0
  %3529 = vmatpush1.msra.mxu0 0.0
  %3530 = vmatprep.subr.mxu0 0.0
  %3531 = vmatpush1.msra.mxu0 0.0
  %3532 = vmatprep.subr.mxu0 0.0
  %3533 = vmatpush1.msra.mxu0 0.0
  %3534 = vmatprep.subr.mxu0 0.0
  %3535 = vmatpush1.msra.mxu0 0.0
  %3536 = vmatprep.subr.mxu0 0.0
  %3537 = vmatpush1.msra.mxu0 0.0
  %3538 = vmatprep.subr.mxu0 0.0
  %3539 = vmatpush1.msra.mxu0 0.0
  %3540 = vmatprep.subr.mxu0 0.0
  %3541 = vmatpush1.msra.mxu0 0.0
  %3542 = vmatprep.subr.mxu0 0.0
  %3543 = vmatpush1.msra.mxu0 0.0
  %3544 = vmatprep.subr.mxu0 0.0
  %3545 = vmatpush1.msra.mxu0 0.0
  %3546 = vmatprep.subr.mxu0 0.0
  %3547 = vmatpush1.msra.mxu0 0.0
  %3548 = vmatprep.subr.mxu0 0.0
  %3549 = vmatpush1.msra.mxu0 0.0
  %3550 = vmatprep.subr.mxu0 0.0
  %3551 = vmatpush1.msra.mxu0 0.0
  %3552 = vmatprep.subr.mxu0 0.0
  %3553 = vmatpush1.msra.mxu0 0.0
  %3554 = vmatprep.subr.mxu0 0.0
  %3555 = vmatpush1.msra.mxu0 0.0
  %3556 = vmatprep.subr.mxu0 0.0
  %3557 = vmatpush1.msra.mxu0 0.0
  %3558 = vmatprep.subr.mxu0 0.0
  %3559 = vmatpush1.msra.mxu0 0.0
  %3560 = vmatprep.subr.mxu0 0.0
  %3561 = vmatpush1.msra.mxu0 0.0
  %3562 = vmatprep.subr.mxu0 0.0
  %3563 = vmatpush1.msra.mxu0 0.0
  %3564 = vmatprep.mubr.f32.mxu0 0.0
  %3565 = vmatmul.mubr.f32.gmra.mrb[0].mxu0 %v3407
  %v3566 = vpop.f32.mrb[0].mxu0
  %v3567 = vadd.f32 %v3499, %v3566
  %v3568 = vpop.f32.mrb[0].mxu0
  %3569 = vmatprep.mubr.f32.mxu0 0.0
  %3570 = vmatmul.mubr.f32.gmra.mrb[0].mxu0 %v3410
  %v3571 = vpop.f32.mrb[0].mxu0
  %v3572 = vadd.f32 %v3499, %v3571
  %v3573 = vpop.f32.mrb[0].mxu0
  %3574 = vmatprep.mubr.f32.mxu0 0.0
  %3575 = vmatmul.mubr.f32.gmra.mrb[0].mxu0 %v3413
  %v3576 = vpop.f32.mrb[0].mxu0
  %v3577 = vadd.f32 %v3499, %v3576
  %v3578 = vpop.f32.mrb[0].mxu0
  %3579 = vdwg.mxu0
  %v3580 = vmul.f32 %v3393, %v525
  %v3581 = vmul.f32 %v3398, %v525
  %v3582 = vmul.f32 %v3393, %v529
  %v3583 = vmul.f32 %v3398, %v529
  %v3584 = vmul.f32 %v3393, %v533
  %v3585 = vmul.f32 %v3398, %v533
  %v3586 = vmul.f32 %v3393, %v537
  %v3587 = vmul.f32 %v3398, %v537
  %v3589 = vsel %vm258, %v3580, 0
  %v3592 = vsel %vm258, %v3581, 0
  %v3595 = vsel %vm258, %v3482, 0
  %v3598 = vsel %vm258, %v3487, 0
  %v3601 = vsel %vm258, %v3492, 0
  %3603 = vmatprep.subr.mxu0 0.0
  %3604 = vmatpush1.xpose.msra.mxu0 %v3595
  %3605 = vmatprep.subr.mxu0 0.0
  %3606 = vmatpush1.xpose.msra.mxu0 %v3598
  %3607 = vmatprep.subr.mxu0 0.0
  %3608 = vmatpush1.xpose.msra.mxu0 %v3601
  %3609 = vmatprep.subr.mxu0 0.0
  %3610 = vmatpush1.xpose.msra.mxu0 0.0
  %3611 = vmatprep.subr.mxu0 0.0
  %3612 = vmatpush1.xpose.msra.mxu0 0.0
  %3613 = vmatprep.subr.mxu0 0.0
  %3614 = vmatpush1.xpose.msra.mxu0 0.0
  %3615 = vmatprep.subr.mxu0 0.0
  %3616 = vmatpush1.xpose.msra.mxu0 0.0
  %3617 = vmatprep.subr.mxu0 0.0
  %3618 = vmatpush1.xpose.msra.mxu0 0.0
  %3619 = vmatprep.subr.mxu0 0.0
  %3620 = vmatpush1.xpose.msra.mxu0 0.0
  %3621 = vmatprep.subr.mxu0 0.0
  %3622 = vmatpush1.xpose.msra.mxu0 0.0
  %3623 = vmatprep.subr.mxu0 0.0
  %3624 = vmatpush1.xpose.msra.mxu0 0.0
  %3625 = vmatprep.subr.mxu0 0.0
  %3626 = vmatpush1.xpose.msra.mxu0 0.0
  %3627 = vmatprep.subr.mxu0 0.0
  %3628 = vmatpush1.xpose.msra.mxu0 0.0
  %3629 = vmatprep.subr.mxu0 0.0
  %3630 = vmatpush1.xpose.msra.mxu0 0.0
  %3631 = vmatprep.subr.mxu0 0.0
  %3632 = vmatpush1.xpose.msra.mxu0 0.0
  %3633 = vmatprep.subr.mxu0 0.0
  %3634 = vmatpush1.xpose.msra.mxu0 0.0
  %3635 = vmatprep.subr.mxu0 0.0
  %3636 = vmatpush1.xpose.msra.mxu0 0.0
  %3637 = vmatprep.subr.mxu0 0.0
  %3638 = vmatpush1.xpose.msra.mxu0 0.0
  %3639 = vmatprep.subr.mxu0 0.0
  %3640 = vmatpush1.xpose.msra.mxu0 0.0
  %3641 = vmatprep.subr.mxu0 0.0
  %3642 = vmatpush1.xpose.msra.mxu0 0.0
  %3643 = vmatprep.subr.mxu0 0.0
  %3644 = vmatpush1.xpose.msra.mxu0 0.0
  %3645 = vmatprep.subr.mxu0 0.0
  %3646 = vmatpush1.xpose.msra.mxu0 0.0
  %3647 = vmatprep.subr.mxu0 0.0
  %3648 = vmatpush1.xpose.msra.mxu0 0.0
  %3649 = vmatprep.subr.mxu0 0.0
  %3650 = vmatpush1.xpose.msra.mxu0 0.0
  %3651 = vmatprep.subr.mxu0 0.0
  %3652 = vmatpush1.xpose.msra.mxu0 0.0
  %3653 = vmatprep.subr.mxu0 0.0
  %3654 = vmatpush1.xpose.msra.mxu0 0.0
  %3655 = vmatprep.subr.mxu0 0.0
  %3656 = vmatpush1.xpose.msra.mxu0 0.0
  %3657 = vmatprep.subr.mxu0 0.0
  %3658 = vmatpush1.xpose.msra.mxu0 0.0
  %3659 = vmatprep.subr.mxu0 0.0
  %3660 = vmatpush1.xpose.msra.mxu0 0.0
  %3661 = vmatprep.subr.mxu0 0.0
  %3662 = vmatpush1.xpose.msra.mxu0 0.0
  %3663 = vmatprep.subr.mxu0 0.0
  %3664 = vmatpush1.xpose.msra.mxu0 0.0
  %3665 = vmatprep.subr.mxu0 0.0
  %3666 = vmatpush1.xpose.msra.mxu0 0.0
  %3667 = vmatprep.mubr.f32.mxu0 0.0
  %3668 = vmatmul.mubr.f32.gmra.mrb[0].mxu0 %v3589
  %v3669 = vpop.f32.mrb[0].mxu0
  %v3670 = vadd.f32 %v3313, %v3669
  %v3671 = vpop.f32.mrb[0].mxu0
  %3672 = vmatprep.mubr.f32.mxu0 0.0
  %3673 = vmatmul.mubr.f32.gmra.mrb[0].mxu0 %v3592
  %v3674 = vpop.f32.mrb[0].mxu0
  %v3675 = vadd.f32 %v3314, %v3674
  %v3676 = vpop.f32.mrb[0].mxu0
  %3677 = vdwg.mxu0
  %v3679 = vsel %vm258, %v3582, 0
  %v3682 = vsel %vm258, %v3583, 0
  %3684 = vmatprep.subr.mxu0 0.0
  %3685 = vmatpush1.xpose.msra.mxu0 %v3595
  %3686 = vmatprep.subr.mxu0 0.0
  %3687 = vmatpush1.xpose.msra.mxu0 %v3598
  %3688 = vmatprep.subr.mxu0 0.0
  %3689 = vmatpush1.xpose.msra.mxu0 %v3601
  %3690 = vmatprep.subr.mxu0 0.0
  %3691 = vmatpush1.xpose.msra.mxu0 0.0
  %3692 = vmatprep.subr.mxu0 0.0
  %3693 = vmatpush1.xpose.msra.mxu0 0.0
  %3694 = vmatprep.subr.mxu0 0.0
  %3695 = vmatpush1.xpose.msra.mxu0 0.0
  %3696 = vmatprep.subr.mxu0 0.0
  %3697 = vmatpush1.xpose.msra.mxu0 0.0
  %3698 = vmatprep.subr.mxu0 0.0
  %3699 = vmatpush1.xpose.msra.mxu0 0.0
  %3700 = vmatprep.subr.mxu0 0.0
  %3701 = vmatpush1.xpose.msra.mxu0 0.0
  %3702 = vmatprep.subr.mxu0 0.0
  %3703 = vmatpush1.xpose.msra.mxu0 0.0
  %3704 = vmatprep.subr.mxu0 0.0
  %3705 = vmatpush1.xpose.msra.mxu0 0.0
  %3706 = vmatprep.subr.mxu0 0.0
  %3707 = vmatpush1.xpose.msra.mxu0 0.0
  %3708 = vmatprep.subr.mxu0 0.0
  %3709 = vmatpush1.xpose.msra.mxu0 0.0
  %3710 = vmatprep.subr.mxu0 0.0
  %3711 = vmatpush1.xpose.msra.mxu0 0.0
  %3712 = vmatprep.subr.mxu0 0.0
  %3713 = vmatpush1.xpose.msra.mxu0 0.0
  %3714 = vmatprep.subr.mxu0 0.0
  %3715 = vmatpush1.xpose.msra.mxu0 0.0
  %3716 = vmatprep.subr.mxu0 0.0
  %3717 = vmatpush1.xpose.msra.mxu0 0.0
  %3718 = vmatprep.subr.mxu0 0.0
  %3719 = vmatpush1.xpose.msra.mxu0 0.0
  %3720 = vmatprep.subr.mxu0 0.0
  %3721 = vmatpush1.xpose.msra.mxu0 0.0
  %3722 = vmatprep.subr.mxu0 0.0
  %3723 = vmatpush1.xpose.msra.mxu0 0.0
  %3724 = vmatprep.subr.mxu0 0.0
  %3725 = vmatpush1.xpose.msra.mxu0 0.0
  %3726 = vmatprep.subr.mxu0 0.0
  %3727 = vmatpush1.xpose.msra.mxu0 0.0
  %3728 = vmatprep.subr.mxu0 0.0
  %3729 = vmatpush1.xpose.msra.mxu0 0.0
  %3730 = vmatprep.subr.mxu0 0.0
  %3731 = vmatpush1.xpose.msra.mxu0 0.0
  %3732 = vmatprep.subr.mxu0 0.0
  %3733 = vmatpush1.xpose.msra.mxu0 0.0
  %3734 = vmatprep.subr.mxu0 0.0
  %3735 = vmatpush1.xpose.msra.mxu0 0.0
  %3736 = vmatprep.subr.mxu0 0.0
  %3737 = vmatpush1.xpose.msra.mxu0 0.0
  %3738 = vmatprep.subr.mxu0 0.0
  %3739 = vmatpush1.xpose.msra.mxu0 0.0
  %3740 = vmatprep.subr.mxu0 0.0
  %3741 = vmatpush1.xpose.msra.mxu0 0.0
  %3742 = vmatprep.subr.mxu0 0.0
  %3743 = vmatpush1.xpose.msra.mxu0 0.0
  %3744 = vmatprep.subr.mxu0 0.0
  %3745 = vmatpush1.xpose.msra.mxu0 0.0
  %3746 = vmatprep.subr.mxu0 0.0
  %3747 = vmatpush1.xpose.msra.mxu0 0.0
  %3748 = vmatprep.mubr.f32.mxu0 0.0
  %3749 = vmatmul.mubr.f32.gmra.mrb[0].mxu0 %v3679
  %v3750 = vpop.f32.mrb[0].mxu0
  %v3751 = vadd.f32 %v3313, %v3750
  %v3752 = vpop.f32.mrb[0].mxu0
  %3753 = vmatprep.mubr.f32.mxu0 0.0
  %3754 = vmatmul.mubr.f32.gmra.mrb[0].mxu0 %v3682
  %v3755 = vpop.f32.mrb[0].mxu0
  %v3756 = vadd.f32 %v3314, %v3755
  %v3757 = vpop.f32.mrb[0].mxu0
  %3758 = vdwg.mxu0
  %v3760 = vsel %vm258, %v3584, 0
  %v3763 = vsel %vm258, %v3585, 0
  %3765 = vmatprep.subr.mxu0 0.0
  %3766 = vmatpush1.xpose.msra.mxu0 %v3595
  %3767 = vmatprep.subr.mxu0 0.0
  %3768 = vmatpush1.xpose.msra.mxu0 %v3598
  %3769 = vmatprep.subr.mxu0 0.0
  %3770 = vmatpush1.xpose.msra.mxu0 %v3601
  %3771 = vmatprep.subr.mxu0 0.0
  %3772 = vmatpush1.xpose.msra.mxu0 0.0
  %3773 = vmatprep.subr.mxu0 0.0
  %3774 = vmatpush1.xpose.msra.mxu0 0.0
  %3775 = vmatprep.subr.mxu0 0.0
  %3776 = vmatpush1.xpose.msra.mxu0 0.0
  %3777 = vmatprep.subr.mxu0 0.0
  %3778 = vmatpush1.xpose.msra.mxu0 0.0
  %3779 = vmatprep.subr.mxu0 0.0
  %3780 = vmatpush1.xpose.msra.mxu0 0.0
  %3781 = vmatprep.subr.mxu0 0.0
  %3782 = vmatpush1.xpose.msra.mxu0 0.0
  %3783 = vmatprep.subr.mxu0 0.0
  %3784 = vmatpush1.xpose.msra.mxu0 0.0
  %3785 = vmatprep.subr.mxu0 0.0
  %3786 = vmatpush1.xpose.msra.mxu0 0.0
  %3787 = vmatprep.subr.mxu0 0.0
  %3788 = vmatpush1.xpose.msra.mxu0 0.0
  %3789 = vmatprep.subr.mxu0 0.0
  %3790 = vmatpush1.xpose.msra.mxu0 0.0
  %3791 = vmatprep.subr.mxu0 0.0
  %3792 = vmatpush1.xpose.msra.mxu0 0.0
  %3793 = vmatprep.subr.mxu0 0.0
  %3794 = vmatpush1.xpose.msra.mxu0 0.0
  %3795 = vmatprep.subr.mxu0 0.0
  %3796 = vmatpush1.xpose.msra.mxu0 0.0
  %3797 = vmatprep.subr.mxu0 0.0
  %3798 = vmatpush1.xpose.msra.mxu0 0.0
  %3799 = vmatprep.subr.mxu0 0.0
  %3800 = vmatpush1.xpose.msra.mxu0 0.0
  %3801 = vmatprep.subr.mxu0 0.0
  %3802 = vmatpush1.xpose.msra.mxu0 0.0
  %3803 = vmatprep.subr.mxu0 0.0
  %3804 = vmatpush1.xpose.msra.mxu0 0.0
  %3805 = vmatprep.subr.mxu0 0.0
  %3806 = vmatpush1.xpose.msra.mxu0 0.0
  %3807 = vmatprep.subr.mxu0 0.0
  %3808 = vmatpush1.xpose.msra.mxu0 0.0
  %3809 = vmatprep.subr.mxu0 0.0
  %3810 = vmatpush1.xpose.msra.mxu0 0.0
  %3811 = vmatprep.subr.mxu0 0.0
  %3812 = vmatpush1.xpose.msra.mxu0 0.0
  %3813 = vmatprep.subr.mxu0 0.0
  %3814 = vmatpush1.xpose.msra.mxu0 0.0
  %3815 = vmatprep.subr.mxu0 0.0
  %3816 = vmatpush1.xpose.msra.mxu0 0.0
  %3817 = vmatprep.subr.mxu0 0.0
  %3818 = vmatpush1.xpose.msra.mxu0 0.0
  %3819 = vmatprep.subr.mxu0 0.0
  %3820 = vmatpush1.xpose.msra.mxu0 0.0
  %3821 = vmatprep.subr.mxu0 0.0
  %3822 = vmatpush1.xpose.msra.mxu0 0.0
  %3823 = vmatprep.subr.mxu0 0.0
  %3824 = vmatpush1.xpose.msra.mxu0 0.0
  %3825 = vmatprep.subr.mxu0 0.0
  %3826 = vmatpush1.xpose.msra.mxu0 0.0
  %3827 = vmatprep.subr.mxu0 0.0
  %3828 = vmatpush1.xpose.msra.mxu0 0.0
  %3829 = vmatprep.mubr.f32.mxu0 0.0
  %3830 = vmatmul.mubr.f32.gmra.mrb[0].mxu0 %v3760
  %v3831 = vpop.f32.mrb[0].mxu0
  %v3832 = vadd.f32 %v3313, %v3831
  %v3833 = vpop.f32.mrb[0].mxu0
  %3834 = vmatprep.mubr.f32.mxu0 0.0
  %3835 = vmatmul.mubr.f32.gmra.mrb[0].mxu0 %v3763
  %v3836 = vpop.f32.mrb[0].mxu0
  %v3837 = vadd.f32 %v3314, %v3836
  %v3838 = vpop.f32.mrb[0].mxu0
  %3839 = vdwg.mxu0
  %v3841 = vsel %vm258, %v3586, 0
  %v3844 = vsel %vm258, %v3587, 0
  %3846 = vmatprep.subr.mxu0 0.0
  %3847 = vmatpush1.xpose.msra.mxu0 %v3595
  %3848 = vmatprep.subr.mxu0 0.0
  %3849 = vmatpush1.xpose.msra.mxu0 %v3598
  %3850 = vmatprep.subr.mxu0 0.0
  %3851 = vmatpush1.xpose.msra.mxu0 %v3601
  %3852 = vmatprep.subr.mxu0 0.0
  %3853 = vmatpush1.xpose.msra.mxu0 0.0
  %3854 = vmatprep.subr.mxu0 0.0
  %3855 = vmatpush1.xpose.msra.mxu0 0.0
  %3856 = vmatprep.subr.mxu0 0.0
  %3857 = vmatpush1.xpose.msra.mxu0 0.0
  %3858 = vmatprep.subr.mxu0 0.0
  %3859 = vmatpush1.xpose.msra.mxu0 0.0
  %3860 = vmatprep.subr.mxu0 0.0
  %3861 = vmatpush1.xpose.msra.mxu0 0.0
  %3862 = vmatprep.subr.mxu0 0.0
  %3863 = vmatpush1.xpose.msra.mxu0 0.0
  %3864 = vmatprep.subr.mxu0 0.0
  %3865 = vmatpush1.xpose.msra.mxu0 0.0
  %3866 = vmatprep.subr.mxu0 0.0
  %3867 = vmatpush1.xpose.msra.mxu0 0.0
  %3868 = vmatprep.subr.mxu0 0.0
  %3869 = vmatpush1.xpose.msra.mxu0 0.0
  %3870 = vmatprep.subr.mxu0 0.0
  %3871 = vmatpush1.xpose.msra.mxu0 0.0
  %3872 = vmatprep.subr.mxu0 0.0
  %3873 = vmatpush1.xpose.msra.mxu0 0.0
  %3874 = vmatprep.subr.mxu0 0.0
  %3875 = vmatpush1.xpose.msra.mxu0 0.0
  %3876 = vmatprep.subr.mxu0 0.0
  %3877 = vmatpush1.xpose.msra.mxu0 0.0
  %3878 = vmatprep.subr.mxu0 0.0
  %3879 = vmatpush1.xpose.msra.mxu0 0.0
  %3880 = vmatprep.subr.mxu0 0.0
  %3881 = vmatpush1.xpose.msra.mxu0 0.0
  %3882 = vmatprep.subr.mxu0 0.0
  %3883 = vmatpush1.xpose.msra.mxu0 0.0
  %3884 = vmatprep.subr.mxu0 0.0
  %3885 = vmatpush1.xpose.msra.mxu0 0.0
  %3886 = vmatprep.subr.mxu0 0.0
  %3887 = vmatpush1.xpose.msra.mxu0 0.0
  %3888 = vmatprep.subr.mxu0 0.0
  %3889 = vmatpush1.xpose.msra.mxu0 0.0
  %3890 = vmatprep.subr.mxu0 0.0
  %3891 = vmatpush1.xpose.msra.mxu0 0.0
  %3892 = vmatprep.subr.mxu0 0.0
  %3893 = vmatpush1.xpose.msra.mxu0 0.0
  %3894 = vmatprep.subr.mxu0 0.0
  %3895 = vmatpush1.xpose.msra.mxu0 0.0
  %3896 = vmatprep.subr.mxu0 0.0
  %3897 = vmatpush1.xpose.msra.mxu0 0.0
  %3898 = vmatprep.subr.mxu0 0.0
  %3899 = vmatpush1.xpose.msra.mxu0 0.0
  %3900 = vmatprep.subr.mxu0 0.0
  %3901 = vmatpush1.xpose.msra.mxu0 0.0
  %3902 = vmatprep.subr.mxu0 0.0
  %3903 = vmatpush1.xpose.msra.mxu0 0.0
  %3904 = vmatprep.subr.mxu0 0.0
  %3905 = vmatpush1.xpose.msra.mxu0 0.0
  %3906 = vmatprep.subr.mxu0 0.0
  %3907 = vmatpush1.xpose.msra.mxu0 0.0
  %3908 = vmatprep.subr.mxu0 0.0
  %3909 = vmatpush1.xpose.msra.mxu0 0.0
  %3910 = vmatprep.mubr.f32.mxu0 0.0
  %3911 = vmatmul.mubr.f32.gmra.mrb[0].mxu0 %v3841
  %v3912 = vpop.f32.mrb[0].mxu0
  %v3913 = vadd.f32 %v3313, %v3912
  %v3914 = vpop.f32.mrb[0].mxu0
  %3915 = vmatprep.mubr.f32.mxu0 0.0
  %3916 = vmatmul.mubr.f32.gmra.mrb[0].mxu0 %v3844
  %v3917 = vpop.f32.mrb[0].mxu0
  %v3918 = vadd.f32 %v3314, %v3917
  %v3919 = vpop.f32.mrb[0].mxu0
  %3920 = vdwg.mxu0
  %v3921 = vsel %vm919, %v3670, -inf
  %3922 = vmax.xlane.f32.xlu0 %v3921
  %v3923 = vpop.xlane.xlu0 %3922
  %v3924 = vsel %vm919, %v3675, -inf
  %3925 = vmax.xlane.f32.xlu0 %v3924
  %v3926 = vpop.xlane.xlu0 %3925
  %v3927 = vsel %vm919, %v3751, -inf
  %3928 = vmax.xlane.f32.xlu0 %v3927
  %v3929 = vpop.xlane.xlu0 %3928
  %v3930 = vsel %vm919, %v3756, -inf
  %3931 = vmax.xlane.f32.xlu0 %v3930
  %v3932 = vpop.xlane.xlu0 %3931
  %v3933 = vsel %vm919, %v3832, -inf
  %3934 = vmax.xlane.f32.xlu0 %v3933
  %v3935 = vpop.xlane.xlu0 %3934
  %v3936 = vsel %vm919, %v3837, -inf
  %3937 = vmax.xlane.f32.xlu0 %v3936
  %v3938 = vpop.xlane.xlu0 %3937
  %v3939 = vsel %vm919, %v3913, -inf
  %3940 = vmax.xlane.f32.xlu0 %v3939
  %v3941 = vpop.xlane.xlu0 %3940
  %v3942 = vsel %vm919, %v3918, -inf
  %3943 = vmax.xlane.f32.xlu0 %v3942
  %v3944 = vpop.xlane.xlu0 %3943
  %v3945 = vsub.f32 %v3670, %v3923
  %v3946 = vsub.f32 %v3675, %v3926
  %v3947 = vsub.f32 %v3751, %v3929
  %v3948 = vsub.f32 %v3756, %v3932
  %v3949 = vsub.f32 %v3832, %v3935
  %v3950 = vsub.f32 %v3837, %v3938
  %v3951 = vsub.f32 %v3913, %v3941
  %v3952 = vsub.f32 %v3918, %v3944
  %v3953 = vmul.f32 %v3945, 1.442695
  %v3954 = vpow.pop %v3953
  %v3955 = vmul.f32 %v3946, 1.442695
  %v3956 = vpow.pop %v3955
  %v3957 = vmul.f32 %v3947, 1.442695
  %v3958 = vpow.pop %v3957
  %v3959 = vmul.f32 %v3948, 1.442695
  %v3960 = vpow.pop %v3959
  %v3961 = vmul.f32 %v3949, 1.442695
  %v3962 = vpow.pop %v3961
  %v3963 = vmul.f32 %v3950, 1.442695
  %v3964 = vpow.pop %v3963
  %v3965 = vmul.f32 %v3951, 1.442695
  %v3966 = vpow.pop %v3965
  %v3967 = vmul.f32 %v3952, 1.442695
  %v3968 = vpow.pop %v3967
  %v3969 = vsel %vm919, %v3954, 0.0
  %3970 = vadd.xlane.f32.xlu0 %v3969
  %v3971 = vpop.xlane.xlu0 %3970
  %v3972 = vsel %vm919, %v3956, 0.0
  %3973 = vadd.xlane.f32.xlu0 %v3972
  %v3974 = vpop.xlane.xlu0 %3973
  %v3975 = vsel %vm919, %v3958, 0.0
  %3976 = vadd.xlane.f32.xlu0 %v3975
  %v3977 = vpop.xlane.xlu0 %3976
  %v3978 = vsel %vm919, %v3960, 0.0
  %3979 = vadd.xlane.f32.xlu0 %v3978
  %v3980 = vpop.xlane.xlu0 %3979
  %v3981 = vsel %vm919, %v3962, 0.0
  %3982 = vadd.xlane.f32.xlu0 %v3981
  %v3983 = vpop.xlane.xlu0 %3982
  %v3984 = vsel %vm919, %v3964, 0.0
  %3985 = vadd.xlane.f32.xlu0 %v3984
  %v3986 = vpop.xlane.xlu0 %3985
  %v3987 = vsel %vm919, %v3966, 0.0
  %3988 = vadd.xlane.f32.xlu0 %v3987
  %v3989 = vpop.xlane.xlu0 %3988
  %v3990 = vsel %vm919, %v3968, 0.0
  %3991 = vadd.xlane.f32.xlu0 %v3990
  %v3992 = vpop.xlane.xlu0 %3991
  %v3993 = vrcp.pop %v3971
  %v3994 = vrcp.pop %v3974
  %v3995 = vrcp.pop %v3977
  %v3996 = vrcp.pop %v3980
  %v3997 = vrcp.pop %v3983
  %v3998 = vrcp.pop %v3986
  %v3999 = vrcp.pop %v3989
  %v4000 = vrcp.pop %v3992
  %v4001 = vmul.f32 %v3954, %v3993
  %v4002 = vmul.f32 %v3956, %v3994
  %v4003 = vmul.f32 %v3958, %v3995
  %v4004 = vmul.f32 %v3960, %v3996
  %v4005 = vmul.f32 %v3962, %v3997
  %v4006 = vmul.f32 %v3964, %v3998
  %v4007 = vmul.f32 %v3966, %v3999
  %v4008 = vmul.f32 %v3968, %v4000
  %v4009 = vmul.f32 %v3567, %v1060
  %v4010 = vmul.f32 %v3572, %v1060
  %v4011 = vmul.f32 %v3577, %v1060
  %v4012 = vmul.f32 %v3567, %v1064
  %v4013 = vmul.f32 %v3572, %v1064
  %v4014 = vmul.f32 %v3577, %v1064
  %v4015 = vmul.f32 %v3567, %v1068
  %v4016 = vmul.f32 %v3572, %v1068
  %v4017 = vmul.f32 %v3577, %v1068
  %v4018 = vmul.f32 %v3567, %v1072
  %v4019 = vmul.f32 %v3572, %v1072
  %v4020 = vmul.f32 %v3577, %v1072
  %v4022 = vsel %vm919, %v4001, 0
  %v4025 = vsel %vm919, %v4002, 0
  %v4028 = vsel %vm165, %v4011, 0
  %4030 = vmatprep.subr.mxu0 0.0
  %4031 = vmatpush1.msra.mxu0 %v4009
  %4032 = vmatprep.subr.mxu0 0.0
  %4033 = vmatpush1.msra.mxu0 %v4010
  %4034 = vmatprep.subr.mxu0 0.0
  %4035 = vmatpush1.msra.mxu0 %v4028
  %4036 = vmatprep.subr.mxu0 0.0
  %4037 = vmatpush1.msra.mxu0 0.0
  %4038 = vmatprep.subr.mxu0 0.0
  %4039 = vmatpush1.msra.mxu0 0.0
  %4040 = vmatprep.subr.mxu0 0.0
  %4041 = vmatpush1.msra.mxu0 0.0
  %4042 = vmatprep.subr.mxu0 0.0
  %4043 = vmatpush1.msra.mxu0 0.0
  %4044 = vmatprep.subr.mxu0 0.0
  %4045 = vmatpush1.msra.mxu0 0.0
  %4046 = vmatprep.subr.mxu0 0.0
  %4047 = vmatpush1.msra.mxu0 0.0
  %4048 = vmatprep.subr.mxu0 0.0
  %4049 = vmatpush1.msra.mxu0 0.0
  %4050 = vmatprep.subr.mxu0 0.0
  %4051 = vmatpush1.msra.mxu0 0.0
  %4052 = vmatprep.subr.mxu0 0.0
  %4053 = vmatpush1.msra.mxu0 0.0
  %4054 = vmatprep.subr.mxu0 0.0
  %4055 = vmatpush1.msra.mxu0 0.0
  %4056 = vmatprep.subr.mxu0 0.0
  %4057 = vmatpush1.msra.mxu0 0.0
  %4058 = vmatprep.subr.mxu0 0.0
  %4059 = vmatpush1.msra.mxu0 0.0
  %4060 = vmatprep.subr.mxu0 0.0
  %4061 = vmatpush1.msra.mxu0 0.0
  %4062 = vmatprep.subr.mxu0 0.0
  %4063 = vmatpush1.msra.mxu0 0.0
  %4064 = vmatprep.subr.mxu0 0.0
  %4065 = vmatpush1.msra.mxu0 0.0
  %4066 = vmatprep.subr.mxu0 0.0
  %4067 = vmatpush1.msra.mxu0 0.0
  %4068 = vmatprep.subr.mxu0 0.0
  %4069 = vmatpush1.msra.mxu0 0.0
  %4070 = vmatprep.subr.mxu0 0.0
  %4071 = vmatpush1.msra.mxu0 0.0
  %4072 = vmatprep.subr.mxu0 0.0
  %4073 = vmatpush1.msra.mxu0 0.0
  %4074 = vmatprep.subr.mxu0 0.0
  %4075 = vmatpush1.msra.mxu0 0.0
  %4076 = vmatprep.subr.mxu0 0.0
  %4077 = vmatpush1.msra.mxu0 0.0
  %4078 = vmatprep.subr.mxu0 0.0
  %4079 = vmatpush1.msra.mxu0 0.0
  %4080 = vmatprep.subr.mxu0 0.0
  %4081 = vmatpush1.msra.mxu0 0.0
  %4082 = vmatprep.subr.mxu0 0.0
  %4083 = vmatpush1.msra.mxu0 0.0
  %4084 = vmatprep.subr.mxu0 0.0
  %4085 = vmatpush1.msra.mxu0 0.0
  %4086 = vmatprep.subr.mxu0 0.0
  %4087 = vmatpush1.msra.mxu0 0.0
  %4088 = vmatprep.subr.mxu0 0.0
  %4089 = vmatpush1.msra.mxu0 0.0
  %4090 = vmatprep.subr.mxu0 0.0
  %4091 = vmatpush1.msra.mxu0 0.0
  %4092 = vmatprep.subr.mxu0 0.0
  %4093 = vmatpush1.msra.mxu0 0.0
  %4094 = vmatprep.mubr.f32.mxu0 0.0
  %4095 = vmatmul.mubr.f32.gmra.mrb[0].mxu0 %v4022
  %v4096 = vpop.f32.mrb[0].mxu0
  %v4097 = vadd.f32 0.0, %v4096
  %v4098 = vpop.f32.mrb[0].mxu0
  %4099 = vmatprep.mubr.f32.mxu0 0.0
  %4100 = vmatmul.mubr.f32.gmra.mrb[0].mxu0 %v4025
  %v4101 = vpop.f32.mrb[0].mxu0
  %v4102 = vadd.f32 0.0, %v4101
  %v4103 = vpop.f32.mrb[0].mxu0
  %4104 = vdwg.mxu0
  %v4106 = vsel %vm919, %v4003, 0
  %v4109 = vsel %vm919, %v4004, 0
  %v4112 = vsel %vm165, %v4014, 0
  %4114 = vmatprep.subr.mxu0 0.0
  %4115 = vmatpush1.msra.mxu0 %v4012
  %4116 = vmatprep.subr.mxu0 0.0
  %4117 = vmatpush1.msra.mxu0 %v4013
  %4118 = vmatprep.subr.mxu0 0.0
  %4119 = vmatpush1.msra.mxu0 %v4112
  %4120 = vmatprep.subr.mxu0 0.0
  %4121 = vmatpush1.msra.mxu0 0.0
  %4122 = vmatprep.subr.mxu0 0.0
  %4123 = vmatpush1.msra.mxu0 0.0
  %4124 = vmatprep.subr.mxu0 0.0
  %4125 = vmatpush1.msra.mxu0 0.0
  %4126 = vmatprep.subr.mxu0 0.0
  %4127 = vmatpush1.msra.mxu0 0.0
  %4128 = vmatprep.subr.mxu0 0.0
  %4129 = vmatpush1.msra.mxu0 0.0
  %4130 = vmatprep.subr.mxu0 0.0
  %4131 = vmatpush1.msra.mxu0 0.0
  %4132 = vmatprep.subr.mxu0 0.0
  %4133 = vmatpush1.msra.mxu0 0.0
  %4134 = vmatprep.subr.mxu0 0.0
  %4135 = vmatpush1.msra.mxu0 0.0
  %4136 = vmatprep.subr.mxu0 0.0
  %4137 = vmatpush1.msra.mxu0 0.0
  %4138 = vmatprep.subr.mxu0 0.0
  %4139 = vmatpush1.msra.mxu0 0.0
  %4140 = vmatprep.subr.mxu0 0.0
  %4141 = vmatpush1.msra.mxu0 0.0
  %4142 = vmatprep.subr.mxu0 0.0
  %4143 = vmatpush1.msra.mxu0 0.0
  %4144 = vmatprep.subr.mxu0 0.0
  %4145 = vmatpush1.msra.mxu0 0.0
  %4146 = vmatprep.subr.mxu0 0.0
  %4147 = vmatpush1.msra.mxu0 0.0
  %4148 = vmatprep.subr.mxu0 0.0
  %4149 = vmatpush1.msra.mxu0 0.0
  %4150 = vmatprep.subr.mxu0 0.0
  %4151 = vmatpush1.msra.mxu0 0.0
  %4152 = vmatprep.subr.mxu0 0.0
  %4153 = vmatpush1.msra.mxu0 0.0
  %4154 = vmatprep.subr.mxu0 0.0
  %4155 = vmatpush1.msra.mxu0 0.0
  %4156 = vmatprep.subr.mxu0 0.0
  %4157 = vmatpush1.msra.mxu0 0.0
  %4158 = vmatprep.subr.mxu0 0.0
  %4159 = vmatpush1.msra.mxu0 0.0
  %4160 = vmatprep.subr.mxu0 0.0
  %4161 = vmatpush1.msra.mxu0 0.0
  %4162 = vmatprep.subr.mxu0 0.0
  %4163 = vmatpush1.msra.mxu0 0.0
  %4164 = vmatprep.subr.mxu0 0.0
  %4165 = vmatpush1.msra.mxu0 0.0
  %4166 = vmatprep.subr.mxu0 0.0
  %4167 = vmatpush1.msra.mxu0 0.0
  %4168 = vmatprep.subr.mxu0 0.0
  %4169 = vmatpush1.msra.mxu0 0.0
  %4170 = vmatprep.subr.mxu0 0.0
  %4171 = vmatpush1.msra.mxu0 0.0
  %4172 = vmatprep.subr.mxu0 0.0
  %4173 = vmatpush1.msra.mxu0 0.0
  %4174 = vmatprep.subr.mxu0 0.0
  %4175 = vmatpush1.msra.mxu0 0.0
  %4176 = vmatprep.subr.mxu0 0.0
  %4177 = vmatpush1.msra.mxu0 0.0
  %4178 = vmatprep.mubr.f32.mxu0 0.0
  %4179 = vmatmul.mubr.f32.gmra.mrb[0].mxu0 %v4106
  %v4180 = vpop.f32.mrb[0].mxu0
  %v4181 = vadd.f32 0.0, %v4180
  %v4182 = vpop.f32.mrb[0].mxu0
  %4183 = vmatprep.mubr.f32.mxu0 0.0
  %4184 = vmatmul.mubr.f32.gmra.mrb[0].mxu0 %v4109
  %v4185 = vpop.f32.mrb[0].mxu0
  %v4186 = vadd.f32 0.0, %v4185
  %v4187 = vpop.f32.mrb[0].mxu0
  %4188 = vdwg.mxu0
  %v4190 = vsel %vm919, %v4005, 0
  %v4193 = vsel %vm919, %v4006, 0
  %v4196 = vsel %vm165, %v4017, 0
  %4198 = vmatprep.subr.mxu0 0.0
  %4199 = vmatpush1.msra.mxu0 %v4015
  %4200 = vmatprep.subr.mxu0 0.0
  %4201 = vmatpush1.msra.mxu0 %v4016
  %4202 = vmatprep.subr.mxu0 0.0
  %4203 = vmatpush1.msra.mxu0 %v4196
  %4204 = vmatprep.subr.mxu0 0.0
  %4205 = vmatpush1.msra.mxu0 0.0
  %4206 = vmatprep.subr.mxu0 0.0
  %4207 = vmatpush1.msra.mxu0 0.0
  %4208 = vmatprep.subr.mxu0 0.0
  %4209 = vmatpush1.msra.mxu0 0.0
  %4210 = vmatprep.subr.mxu0 0.0
  %4211 = vmatpush1.msra.mxu0 0.0
  %4212 = vmatprep.subr.mxu0 0.0
  %4213 = vmatpush1.msra.mxu0 0.0
  %4214 = vmatprep.subr.mxu0 0.0
  %4215 = vmatpush1.msra.mxu0 0.0
  %4216 = vmatprep.subr.mxu0 0.0
  %4217 = vmatpush1.msra.mxu0 0.0
  %4218 = vmatprep.subr.mxu0 0.0
  %4219 = vmatpush1.msra.mxu0 0.0
  %4220 = vmatprep.subr.mxu0 0.0
  %4221 = vmatpush1.msra.mxu0 0.0
  %4222 = vmatprep.subr.mxu0 0.0
  %4223 = vmatpush1.msra.mxu0 0.0
  %4224 = vmatprep.subr.mxu0 0.0
  %4225 = vmatpush1.msra.mxu0 0.0
  %4226 = vmatprep.subr.mxu0 0.0
  %4227 = vmatpush1.msra.mxu0 0.0
  %4228 = vmatprep.subr.mxu0 0.0
  %4229 = vmatpush1.msra.mxu0 0.0
  %4230 = vmatprep.subr.mxu0 0.0
  %4231 = vmatpush1.msra.mxu0 0.0
  %4232 = vmatprep.subr.mxu0 0.0
  %4233 = vmatpush1.msra.mxu0 0.0
  %4234 = vmatprep.subr.mxu0 0.0
  %4235 = vmatpush1.msra.mxu0 0.0
  %4236 = vmatprep.subr.mxu0 0.0
  %4237 = vmatpush1.msra.mxu0 0.0
  %4238 = vmatprep.subr.mxu0 0.0
  %4239 = vmatpush1.msra.mxu0 0.0
  %4240 = vmatprep.subr.mxu0 0.0
  %4241 = vmatpush1.msra.mxu0 0.0
  %4242 = vmatprep.subr.mxu0 0.0
  %4243 = vmatpush1.msra.mxu0 0.0
  %4244 = vmatprep.subr.mxu0 0.0
  %4245 = vmatpush1.msra.mxu0 0.0
  %4246 = vmatprep.subr.mxu0 0.0
  %4247 = vmatpush1.msra.mxu0 0.0
  %4248 = vmatprep.subr.mxu0 0.0
  %4249 = vmatpush1.msra.mxu0 0.0
  %4250 = vmatprep.subr.mxu0 0.0
  %4251 = vmatpush1.msra.mxu0 0.0
  %4252 = vmatprep.subr.mxu0 0.0
  %4253 = vmatpush1.msra.mxu0 0.0
  %4254 = vmatprep.subr.mxu0 0.0
  %4255 = vmatpush1.msra.mxu0 0.0
  %4256 = vmatprep.subr.mxu0 0.0
  %4257 = vmatpush1.msra.mxu0 0.0
  %4258 = vmatprep.subr.mxu0 0.0
  %4259 = vmatpush1.msra.mxu0 0.0
  %4260 = vmatprep.subr.mxu0 0.0
  %4261 = vmatpush1.msra.mxu0 0.0
  %4262 = vmatprep.mubr.f32.mxu0 0.0
  %4263 = vmatmul.mubr.f32.gmra.mrb[0].mxu0 %v4190
  %v4264 = vpop.f32.mrb[0].mxu0
  %v4265 = vadd.f32 0.0, %v4264
  %v4266 = vpop.f32.mrb[0].mxu0
  %4267 = vmatprep.mubr.f32.mxu0 0.0
  %4268 = vmatmul.mubr.f32.gmra.mrb[0].mxu0 %v4193
  %v4269 = vpop.f32.mrb[0].mxu0
  %v4270 = vadd.f32 0.0, %v4269
  %v4271 = vpop.f32.mrb[0].mxu0
  %4272 = vdwg.mxu0
  %v4274 = vsel %vm919, %v4007, 0
  %v4277 = vsel %vm919, %v4008, 0
  %v4280 = vsel %vm165, %v4020, 0
  %4282 = vmatprep.subr.mxu0 0.0
  %4283 = vmatpush1.msra.mxu0 %v4018
  %4284 = vmatprep.subr.mxu0 0.0
  %4285 = vmatpush1.msra.mxu0 %v4019
  %4286 = vmatprep.subr.mxu0 0.0
  %4287 = vmatpush1.msra.mxu0 %v4280
  %4288 = vmatprep.subr.mxu0 0.0
  %4289 = vmatpush1.msra.mxu0 0.0
  %4290 = vmatprep.subr.mxu0 0.0
  %4291 = vmatpush1.msra.mxu0 0.0
  %4292 = vmatprep.subr.mxu0 0.0
  %4293 = vmatpush1.msra.mxu0 0.0
  %4294 = vmatprep.subr.mxu0 0.0
  %4295 = vmatpush1.msra.mxu0 0.0
  %4296 = vmatprep.subr.mxu0 0.0
  %4297 = vmatpush1.msra.mxu0 0.0
  %4298 = vmatprep.subr.mxu0 0.0
  %4299 = vmatpush1.msra.mxu0 0.0
  %4300 = vmatprep.subr.mxu0 0.0
  %4301 = vmatpush1.msra.mxu0 0.0
  %4302 = vmatprep.subr.mxu0 0.0
  %4303 = vmatpush1.msra.mxu0 0.0
  %4304 = vmatprep.subr.mxu0 0.0
  %4305 = vmatpush1.msra.mxu0 0.0
  %4306 = vmatprep.subr.mxu0 0.0
  %4307 = vmatpush1.msra.mxu0 0.0
  %4308 = vmatprep.subr.mxu0 0.0
  %4309 = vmatpush1.msra.mxu0 0.0
  %4310 = vmatprep.subr.mxu0 0.0
  %4311 = vmatpush1.msra.mxu0 0.0
  %4312 = vmatprep.subr.mxu0 0.0
  %4313 = vmatpush1.msra.mxu0 0.0
  %4314 = vmatprep.subr.mxu0 0.0
  %4315 = vmatpush1.msra.mxu0 0.0
  %4316 = vmatprep.subr.mxu0 0.0
  %4317 = vmatpush1.msra.mxu0 0.0
  %4318 = vmatprep.subr.mxu0 0.0
  %4319 = vmatpush1.msra.mxu0 0.0
  %4320 = vmatprep.subr.mxu0 0.0
  %4321 = vmatpush1.msra.mxu0 0.0
  %4322 = vmatprep.subr.mxu0 0.0
  %4323 = vmatpush1.msra.mxu0 0.0
  %4324 = vmatprep.subr.mxu0 0.0
  %4325 = vmatpush1.msra.mxu0 0.0
  %4326 = vmatprep.subr.mxu0 0.0
  %4327 = vmatpush1.msra.mxu0 0.0
  %4328 = vmatprep.subr.mxu0 0.0
  %4329 = vmatpush1.msra.mxu0 0.0
  %4330 = vmatprep.subr.mxu0 0.0
  %4331 = vmatpush1.msra.mxu0 0.0
  %4332 = vmatprep.subr.mxu0 0.0
  %4333 = vmatpush1.msra.mxu0 0.0
  %4334 = vmatprep.subr.mxu0 0.0
  %4335 = vmatpush1.msra.mxu0 0.0
  %4336 = vmatprep.subr.mxu0 0.0
  %4337 = vmatpush1.msra.mxu0 0.0
  %4338 = vmatprep.subr.mxu0 0.0
  %4339 = vmatpush1.msra.mxu0 0.0
  %4340 = vmatprep.subr.mxu0 0.0
  %4341 = vmatpush1.msra.mxu0 0.0
  %4342 = vmatprep.subr.mxu0 0.0
  %4343 = vmatpush1.msra.mxu0 0.0
  %4344 = vmatprep.subr.mxu0 0.0
  %4345 = vmatpush1.msra.mxu0 0.0
  %4346 = vmatprep.mubr.f32.mxu0 0.0
  %4347 = vmatmul.mubr.f32.gmra.mrb[0].mxu0 %v4274
  %v4348 = vpop.f32.mrb[0].mxu0
  %v4349 = vadd.f32 0.0, %v4348
  %v4350 = vpop.f32.mrb[0].mxu0
  %4351 = vmatprep.mubr.f32.mxu0 0.0
  %4352 = vmatmul.mubr.f32.gmra.mrb[0].mxu0 %v4277
  %v4353 = vpop.f32.mrb[0].mxu0
  %v4354 = vadd.f32 0.0, %v4353
  %v4355 = vpop.f32.mrb[0].mxu0
  %4356 = vdwg.mxu0
  %v4357 = vsel %vm258, %v4097, 0.0
  %v4358 = vsel %vm258, %v4181, 0.0
  %v4359 = vadd.f32 %v4357, %v4358
  %v4360 = vsel %vm258, %v4265, 0.0
  %v4361 = vadd.f32 %v4359, %v4360
  %v4362 = vsel %vm258, %v4349, 0.0
  %v4363 = vadd.f32 %v4361, %v4362
  %v4364 = vsel %vm258, %v4102, 0.0
  %v4365 = vsel %vm258, %v4186, 0.0
  %v4366 = vadd.f32 %v4364, %v4365
  %v4367 = vsel %vm258, %v4270, 0.0
  %v4368 = vadd.f32 %v4366, %v4367
  %v4369 = vsel %vm258, %v4354, 0.0
  %v4370 = vadd.f32 %v4368, %v4369
  %v4371 = vld [vmem:[%s8 + $0x98] sm:$0xff]
  %v4372 = vld [vmem:[%s8 + $0x140] sm:$0xff]
  %v4373 = vld [vmem:[%s8 + $0x1e8] sm:$0xff]
  %v4374 = vld [vmem:[%s8 + $0x290] sm:$0xff]
  %v4375 = vld [vmem:[%s10 + $0x67] ss:$0 sm:$0xff]
  %v4377 = vsel %vm258, %v4363, 0
  %v4380 = vsel %vm258, %v4370, 0
  %4382 = vmatprep.subr.mxu0 0.0
  %4383 = vmatpush1.msra.mxu0 %v4371
  %4384 = vmatprep.subr.mxu0 0.0
  %4385 = vmatpush1.msra.mxu0 %v4372
  %4386 = vmatprep.subr.mxu0 0.0
  %4387 = vmatpush1.msra.mxu0 %v4373
  %4388 = vmatprep.subr.mxu0 0.0
  %4389 = vmatpush1.msra.mxu0 %v4374
  %4390 = vmatprep.subr.mxu0 0.0
  %4391 = vmatpush1.msra.mxu0 0.0
  %4392 = vmatprep.subr.mxu0 0.0
  %4393 = vmatpush1.msra.mxu0 0.0
  %4394 = vmatprep.subr.mxu0 0.0
  %4395 = vmatpush1.msra.mxu0 0.0
  %4396 = vmatprep.subr.mxu0 0.0
  %4397 = vmatpush1.msra.mxu0 0.0
  %4398 = vmatprep.subr.mxu0 0.0
  %4399 = vmatpush1.msra.mxu0 0.0
  %4400 = vmatprep.subr.mxu0 0.0
  %4401 = vmatpush1.msra.mxu0 0.0
  %4402 = vmatprep.subr.mxu0 0.0
  %4403 = vmatpush1.msra.mxu0 0.0
  %4404 = vmatprep.subr.mxu0 0.0
  %4405 = vmatpush1.msra.mxu0 0.0
  %4406 = vmatprep.subr.mxu0 0.0
  %4407 = vmatpush1.msra.mxu0 0.0
  %4408 = vmatprep.subr.mxu0 0.0
  %4409 = vmatpush1.msra.mxu0 0.0
  %4410 = vmatprep.subr.mxu0 0.0
  %4411 = vmatpush1.msra.mxu0 0.0
  %4412 = vmatprep.subr.mxu0 0.0
  %4413 = vmatpush1.msra.mxu0 0.0
  %4414 = vmatprep.subr.mxu0 0.0
  %4415 = vmatpush1.msra.mxu0 0.0
  %4416 = vmatprep.subr.mxu0 0.0
  %4417 = vmatpush1.msra.mxu0 0.0
  %4418 = vmatprep.subr.mxu0 0.0
  %4419 = vmatpush1.msra.mxu0 0.0
  %4420 = vmatprep.subr.mxu0 0.0
  %4421 = vmatpush1.msra.mxu0 0.0
  %4422 = vmatprep.subr.mxu0 0.0
  %4423 = vmatpush1.msra.mxu0 0.0
  %4424 = vmatprep.subr.mxu0 0.0
  %4425 = vmatpush1.msra.mxu0 0.0
  %4426 = vmatprep.subr.mxu0 0.0
  %4427 = vmatpush1.msra.mxu0 0.0
  %4428 = vmatprep.subr.mxu0 0.0
  %4429 = vmatpush1.msra.mxu0 0.0
  %4430 = vmatprep.subr.mxu0 0.0
  %4431 = vmatpush1.msra.mxu0 0.0
  %4432 = vmatprep.subr.mxu0 0.0
  %4433 = vmatpush1.msra.mxu0 0.0
  %4434 = vmatprep.subr.mxu0 0.0
  %4435 = vmatpush1.msra.mxu0 0.0
  %4436 = vmatprep.subr.mxu0 0.0
  %4437 = vmatpush1.msra.mxu0 0.0
  %4438 = vmatprep.subr.mxu0 0.0
  %4439 = vmatpush1.msra.mxu0 0.0
  %4440 = vmatprep.subr.mxu0 0.0
  %4441 = vmatpush1.msra.mxu0 0.0
  %4442 = vmatprep.subr.mxu0 0.0
  %4443 = vmatpush1.msra.mxu0 0.0
  %4444 = vmatprep.subr.mxu0 0.0
  %4445 = vmatpush1.msra.mxu0 0.0
  %4446 = vmatprep.mubr.f32.mxu0 0.0
  %4447 = vmatmul.mubr.f32.gmra.mrb[0].mxu0 %v4377
  %v4448 = vpop.f32.mrb[0].mxu0
  %v4449 = vadd.f32 %v4375, %v4448
  %v4450 = vpop.f32.mrb[0].mxu0
  %4451 = vmatprep.mubr.f32.mxu0 0.0
  %4452 = vmatmul.mubr.f32.gmra.mrb[0].mxu0 %v4380
  %v4453 = vpop.f32.mrb[0].mxu0
  %v4454 = vadd.f32 %v4375, %v4453
  %v4455 = vpop.f32.mrb[0].mxu0
  %4456 = vdwg.mxu0
  %v4457 = vadd.f32 %v3311, %v4449
  %v4458 = vadd.f32 %v3312, %v4454
  %v4459 = vsel %vm258, %v4457, 0.0
  %4460 = vadd.xlane.f32.xlu0 %v4459
  %v4461 = vpop.xlane.xlu0 %4460
  %v4462 = vsel %vm258, %v4458, 0.0
  %4463 = vadd.xlane.f32.xlu0 %v4462
  %v4464 = vpop.xlane.xlu0 %4463
  %v4465 = vmul.f32 %v4461, %v1585
  %v4466 = vmul.f32 %v4464, %v1585
  %v4467 = vsub.f32 %v4457, %v4465
  %v4468 = vsub.f32 %v4458, %v4466
  %v4469 = vmul.f32 %v4467, %v4467
  %v4470 = vmul.f32 %v4468, %v4468
  %v4471 = vsel %vm258, %v4469, 0.0
  %4472 = vadd.xlane.f32.xlu0 %v4471
  %v4473 = vpop.xlane.xlu0 %4472
  %v4474 = vsel %vm258, %v4470, 0.0
  %4475 = vadd.xlane.f32.xlu0 %v4474
  %v4476 = vpop.xlane.xlu0 %4475
  %v4477 = vmul.f32 %v4473, %v1585
  %v4478 = vmul.f32 %v4476, %v1585
  %v4479 = vadd.f32 %v4477, 1e-05
  %v4480 = vadd.f32 %v4478, 1e-05
  %v4481 = vrsqrt.pop %v4479
  %v4482 = vrsqrt.pop %v4480
  %v4483 = vmul.f32 %v4467, %v4481
  %v4484 = vmul.f32 %v4468, %v4482
  %v4485 = vld [vmem:[%s10 + $0x46] ss:$0 sm:$0xff]
  %v4486 = vmul.f32 %v4483, %v4485
  %v4487 = vmul.f32 %v4484, %v4485
  %v4488 = vld [vmem:[%s10 + $0x47] ss:$0 sm:$0xff]
  %v4489 = vadd.f32 %v4486, %v4488
  %v4490 = vadd.f32 %v4487, %v4488
  %v4491 = vld [vmem:[%s8 + $0x60] sm:$0xff]
  %v4492 = vld [vmem:[%s8 + $0x68] sm:$0xff]
  %v4493 = vld [vmem:[%s8 + $0x70] sm:$0xff]
  %v4494 = vld [vmem:[%s8 + $0x78] sm:$0xff]
  %v4495 = vld [vmem:[%s8 + $0x108] sm:$0xff]
  %v4496 = vld [vmem:[%s8 + $0x110] sm:$0xff]
  %v4497 = vld [vmem:[%s8 + $0x118] sm:$0xff]
  %v4498 = vld [vmem:[%s8 + $0x120] sm:$0xff]
  %v4499 = vld [vmem:[%s8 + $0x1b0] sm:$0xff]
  %v4500 = vld [vmem:[%s8 + $0x1b8] sm:$0xff]
  %v4501 = vld [vmem:[%s8 + $0x1c0] sm:$0xff]
  %v4502 = vld [vmem:[%s8 + $0x1c8] sm:$0xff]
  %v4503 = vld [vmem:[%s8 + $0x258] sm:$0xff]
  %v4504 = vld [vmem:[%s8 + $0x260] sm:$0xff]
  %v4505 = vld [vmem:[%s8 + $0x268] sm:$0xff]
  %v4506 = vld [vmem:[%s8 + $0x270] sm:$0xff]
  %s4507 = scalar_lea.vmem %s10, 66
  %v4508 = vld [vmem:[%s4507] ss:$8 sm:$0xf]
  %v4510 = vlaneseq
  %v4511 = vshrl.u32 %v4510, 7
  %v4512 = vsub.s32 0, %v4511
  %v4513 = vrot.slane %v4508, %v4512
  %v4514 = vlaneseq
  %v4515 = vshrl.u32 %v4514, 7
  %v4516 = vsub.s32 1, %v4515
  %v4517 = vrot.slane %v4508, %v4516
  %v4518 = vlaneseq
  %v4519 = vshrl.u32 %v4518, 7
  %v4520 = vsub.s32 2, %v4519
  %v4521 = vrot.slane %v4508, %v4520
  %v4522 = vlaneseq
  %v4523 = vshrl.u32 %v4522, 7
  %v4524 = vsub.s32 3, %v4523
  %v4525 = vrot.slane %v4508, %v4524
  %v4531 = vsel %vm258, %v4489, 0
  %v4534 = vsel %vm258, %v4490, 0
  %4536 = vmatprep.subr.mxu0 %v4492
  %4537 = vmatpush1.msra.mxu0 %v4491
  %4538 = vmatprep.subr.mxu0 %v4496
  %4539 = vmatpush1.msra.mxu0 %v4495
  %4540 = vmatprep.subr.mxu0 %v4500
  %4541 = vmatpush1.msra.mxu0 %v4499
  %4542 = vmatprep.subr.mxu0 %v4504
  %4543 = vmatpush1.msra.mxu0 %v4503
  %4544 = vmatprep.subr.mxu0 0.0
  %4545 = vmatpush1.msra.mxu0 0.0
  %4546 = vmatprep.subr.mxu0 0.0
  %4547 = vmatpush1.msra.mxu0 0.0
  %4548 = vmatprep.subr.mxu0 0.0
  %4549 = vmatpush1.msra.mxu0 0.0
  %4550 = vmatprep.subr.mxu0 0.0
  %4551 = vmatpush1.msra.mxu0 0.0
  %4552 = vmatprep.subr.mxu0 0.0
  %4553 = vmatpush1.msra.mxu0 0.0
  %4554 = vmatprep.subr.mxu0 0.0
  %4555 = vmatpush1.msra.mxu0 0.0
  %4556 = vmatprep.subr.mxu0 0.0
  %4557 = vmatpush1.msra.mxu0 0.0
  %4558 = vmatprep.subr.mxu0 0.0
  %4559 = vmatpush1.msra.mxu0 0.0
  %4560 = vmatprep.subr.mxu0 0.0
  %4561 = vmatpush1.msra.mxu0 0.0
  %4562 = vmatprep.subr.mxu0 0.0
  %4563 = vmatpush1.msra.mxu0 0.0
  %4564 = vmatprep.subr.mxu0 0.0
  %4565 = vmatpush1.msra.mxu0 0.0
  %4566 = vmatprep.subr.mxu0 0.0
  %4567 = vmatpush1.msra.mxu0 0.0
  %4568 = vmatprep.subr.mxu0 0.0
  %4569 = vmatpush1.msra.mxu0 0.0
  %4570 = vmatprep.subr.mxu0 0.0
  %4571 = vmatpush1.msra.mxu0 0.0
  %4572 = vmatprep.subr.mxu0 0.0
  %4573 = vmatpush1.msra.mxu0 0.0
  %4574 = vmatprep.subr.mxu0 0.0
  %4575 = vmatpush1.msra.mxu0 0.0
  %4576 = vmatprep.subr.mxu0 0.0
  %4577 = vmatpush1.msra.mxu0 0.0
  %4578 = vmatprep.subr.mxu0 0.0
  %4579 = vmatpush1.msra.mxu0 0.0
  %4580 = vmatprep.subr.mxu0 0.0
  %4581 = vmatpush1.msra.mxu0 0.0
  %4582 = vmatprep.subr.mxu0 0.0
  %4583 = vmatpush1.msra.mxu0 0.0
  %4584 = vmatprep.subr.mxu0 0.0
  %4585 = vmatpush1.msra.mxu0 0.0
  %4586 = vmatprep.subr.mxu0 0.0
  %4587 = vmatpush1.msra.mxu0 0.0
  %4588 = vmatprep.subr.mxu0 0.0
  %4589 = vmatpush1.msra.mxu0 0.0
  %4590 = vmatprep.subr.mxu0 0.0
  %4591 = vmatpush1.msra.mxu0 0.0
  %4592 = vmatprep.subr.mxu0 0.0
  %4593 = vmatpush1.msra.mxu0 0.0
  %4594 = vmatprep.subr.mxu0 0.0
  %4595 = vmatpush1.msra.mxu0 0.0
  %4596 = vmatprep.subr.mxu0 0.0
  %4597 = vmatpush1.msra.mxu0 0.0
  %4598 = vmatprep.subr.mxu0 0.0
  %4599 = vmatpush1.msra.mxu0 0.0
  %4600 = vmatprep.mubr.f32.mxu0 0.0
  %4601 = vmatmul.mubr.f32.gmra.mrb[0].mxu0 %v4531
  %v4602 = vpop.f32.mrb[0].mxu0
  %v4603 = vadd.f32 %v4513, %v4602
  %v4604 = vpop.f32.mrb[0].mxu0
  %v4605 = vadd.f32 %v4517, %v4604
  %4606 = vmatprep.mubr.f32.mxu0 0.0
  %4607 = vmatmul.mubr.f32.gmra.mrb[0].mxu0 %v4534
  %v4608 = vpop.f32.mrb[0].mxu0
  %v4609 = vadd.f32 %v4513, %v4608
  %v4610 = vpop.f32.mrb[0].mxu0
  %v4611 = vadd.f32 %v4517, %v4610
  %4612 = vdwg.mxu0
  %4613 = vmatprep.subr.mxu0 %v4494
  %4614 = vmatpush1.msra.mxu0 %v4493
  %4615 = vmatprep.subr.mxu0 %v4498
  %4616 = vmatpush1.msra.mxu0 %v4497
  %4617 = vmatprep.subr.mxu0 %v4502
  %4618 = vmatpush1.msra.mxu0 %v4501
  %4619 = vmatprep.subr.mxu0 %v4506
  %4620 = vmatpush1.msra.mxu0 %v4505
  %4621 = vmatprep.subr.mxu0 0.0
  %4622 = vmatpush1.msra.mxu0 0.0
  %4623 = vmatprep.subr.mxu0 0.0
  %4624 = vmatpush1.msra.mxu0 0.0
  %4625 = vmatprep.subr.mxu0 0.0
  %4626 = vmatpush1.msra.mxu0 0.0
  %4627 = vmatprep.subr.mxu0 0.0
  %4628 = vmatpush1.msra.mxu0 0.0
  %4629 = vmatprep.subr.mxu0 0.0
  %4630 = vmatpush1.msra.mxu0 0.0
  %4631 = vmatprep.subr.mxu0 0.0
  %4632 = vmatpush1.msra.mxu0 0.0
  %4633 = vmatprep.subr.mxu0 0.0
  %4634 = vmatpush1.msra.mxu0 0.0
  %4635 = vmatprep.subr.mxu0 0.0
  %4636 = vmatpush1.msra.mxu0 0.0
  %4637 = vmatprep.subr.mxu0 0.0
  %4638 = vmatpush1.msra.mxu0 0.0
  %4639 = vmatprep.subr.mxu0 0.0
  %4640 = vmatpush1.msra.mxu0 0.0
  %4641 = vmatprep.subr.mxu0 0.0
  %4642 = vmatpush1.msra.mxu0 0.0
  %4643 = vmatprep.subr.mxu0 0.0
  %4644 = vmatpush1.msra.mxu0 0.0
  %4645 = vmatprep.subr.mxu0 0.0
  %4646 = vmatpush1.msra.mxu0 0.0
  %4647 = vmatprep.subr.mxu0 0.0
  %4648 = vmatpush1.msra.mxu0 0.0
  %4649 = vmatprep.subr.mxu0 0.0
  %4650 = vmatpush1.msra.mxu0 0.0
  %4651 = vmatprep.subr.mxu0 0.0
  %4652 = vmatpush1.msra.mxu0 0.0
  %4653 = vmatprep.subr.mxu0 0.0
  %4654 = vmatpush1.msra.mxu0 0.0
  %4655 = vmatprep.subr.mxu0 0.0
  %4656 = vmatpush1.msra.mxu0 0.0
  %4657 = vmatprep.subr.mxu0 0.0
  %4658 = vmatpush1.msra.mxu0 0.0
  %4659 = vmatprep.subr.mxu0 0.0
  %4660 = vmatpush1.msra.mxu0 0.0
  %4661 = vmatprep.subr.mxu0 0.0
  %4662 = vmatpush1.msra.mxu0 0.0
  %4663 = vmatprep.subr.mxu0 0.0
  %4664 = vmatpush1.msra.mxu0 0.0
  %4665 = vmatprep.subr.mxu0 0.0
  %4666 = vmatpush1.msra.mxu0 0.0
  %4667 = vmatprep.subr.mxu0 0.0
  %4668 = vmatpush1.msra.mxu0 0.0
  %4669 = vmatprep.subr.mxu0 0.0
  %4670 = vmatpush1.msra.mxu0 0.0
  %4671 = vmatprep.subr.mxu0 0.0
  %4672 = vmatpush1.msra.mxu0 0.0
  %4673 = vmatprep.subr.mxu0 0.0
  %4674 = vmatpush1.msra.mxu0 0.0
  %4675 = vmatprep.subr.mxu0 0.0
  %4676 = vmatpush1.msra.mxu0 0.0
  %4677 = vmatprep.mubr.f32.mxu0 0.0
  %4678 = vmatmul.mubr.f32.gmra.mrb[0].mxu0 %v4531
  %v4679 = vpop.f32.mrb[0].mxu0
  %v4680 = vadd.f32 %v4521, %v4679
  %v4681 = vpop.f32.mrb[0].mxu0
  %v4682 = vadd.f32 %v4525, %v4681
  %4683 = vmatprep.mubr.f32.mxu0 0.0
  %4684 = vmatmul.mubr.f32.gmra.mrb[0].mxu0 %v4534
  %v4685 = vpop.f32.mrb[0].mxu0
  %v4686 = vadd.f32 %v4521, %v4685
  %v4687 = vpop.f32.mrb[0].mxu0
  %v4688 = vadd.f32 %v4525, %v4687
  %4689 = vdwg.mxu0
  %v4690 = vmax.f32 %v4603, 0.0
  %v4691 = vmax.f32 %v4605, 0.0
  %v4692 = vmax.f32 %v4680, 0.0
  %v4693 = vmax.f32 %v4682, 0.0
  %v4694 = vmax.f32 %v4609, 0.0
  %v4695 = vmax.f32 %v4611, 0.0
  %v4696 = vmax.f32 %v4686, 0.0
  %v4697 = vmax.f32 %v4688, 0.0
  %v4698 = vld [vmem:[%s9 + $0x210] sm:$0xff]
  %v4699 = vld [vmem:[%s9 + $0x218] sm:$0xff]
  %v4700 = vld [vmem:[%s9 + $0x220] sm:$0xff]
  %v4701 = vld [vmem:[%s9 + $0x228] sm:$0xff]
  %v4702 = vld [vmem:[%s9 + $0x230] sm:$0xff]
  %v4703 = vld [vmem:[%s9 + $0x238] sm:$0xff]
  %v4704 = vld [vmem:[%s9 + $0x240] sm:$0xff]
  %v4705 = vld [vmem:[%s9 + $0x248] sm:$0xff]
  %v4706 = vld [vmem:[%s9 + $0x250] sm:$0xff]
  %v4707 = vld [vmem:[%s9 + $0x258] sm:$0xff]
  %v4708 = vld [vmem:[%s9 + $0x260] sm:$0xff]
  %v4709 = vld [vmem:[%s9 + $0x268] sm:$0xff]
  %v4710 = vld [vmem:[%s9 + $0x270] sm:$0xff]
  %v4711 = vld [vmem:[%s9 + $0x278] sm:$0xff]
  %v4712 = vld [vmem:[%s9 + $0x280] sm:$0xff]
  %v4713 = vld [vmem:[%s9 + $0x288] sm:$0xff]
  %v4714 = vld [vmem:[%s9 + $0x290] sm:$0xff]
  %v4715 = vld [vmem:[%s9 + $0x298] sm:$0xff]
  %v4716 = vld [vmem:[%s9 + $0x2a0] sm:$0xff]
  %v4717 = vld [vmem:[%s9 + $0x2a8] sm:$0xff]
  %v4718 = vld [vmem:[%s9 + $0x2b0] sm:$0xff]
  %v4719 = vld [vmem:[%s9 + $0x2b8] sm:$0xff]
  %v4720 = vld [vmem:[%s9 + $0x2c0] sm:$0xff]
  %v4721 = vld [vmem:[%s9 + $0x2c8] sm:$0xff]
  %v4722 = vld [vmem:[%s9 + $0x2d0] sm:$0xff]
  %v4723 = vld [vmem:[%s9 + $0x2d8] sm:$0xff]
  %v4724 = vld [vmem:[%s9 + $0x2e0] sm:$0xff]
  %v4725 = vld [vmem:[%s9 + $0x2e8] sm:$0xff]
  %v4726 = vld [vmem:[%s9 + $0x2f0] sm:$0xff]
  %v4727 = vld [vmem:[%s9 + $0x2f8] sm:$0xff]
  %v4728 = vld [vmem:[%s9 + $0x300] sm:$0xff]
  %v4729 = vld [vmem:[%s9 + $0x308] sm:$0xff]
  %v4730 = vld [vmem:[%s9 + $0x310] sm:$0xff]
  %v4731 = vld [vmem:[%s9 + $0x318] sm:$0xff]
  %v4732 = vld [vmem:[%s9 + $0x320] sm:$0xff]
  %v4733 = vld [vmem:[%s9 + $0x328] sm:$0xff]
  %v4734 = vld [vmem:[%s9 + $0x330] sm:$0xff]
  %v4735 = vld [vmem:[%s9 + $0x338] sm:$0xff]
  %v4736 = vld [vmem:[%s9 + $0x340] sm:$0xff]
  %v4737 = vld [vmem:[%s9 + $0x348] sm:$0xff]
  %v4738 = vld [vmem:[%s9 + $0x350] sm:$0xff]
  %v4739 = vld [vmem:[%s9 + $0x358] sm:$0xff]
  %v4740 = vld [vmem:[%s9 + $0x360] sm:$0xff]
  %v4741 = vld [vmem:[%s9 + $0x368] sm:$0xff]
  %v4742 = vld [vmem:[%s9 + $0x370] sm:$0xff]
  %v4743 = vld [vmem:[%s9 + $0x378] sm:$0xff]
  %v4744 = vld [vmem:[%s9 + $0x380] sm:$0xff]
  %v4745 = vld [vmem:[%s9 + $0x388] sm:$0xff]
  %v4746 = vld [vmem:[%s9 + $0x390] sm:$0xff]
  %v4747 = vld [vmem:[%s9 + $0x398] sm:$0xff]
  %v4748 = vld [vmem:[%s9 + $0x3a0] sm:$0xff]
  %v4749 = vld [vmem:[%s9 + $0x3a8] sm:$0xff]
  %v4750 = vld [vmem:[%s9 + $0x3b0] sm:$0xff]
  %v4751 = vld [vmem:[%s9 + $0x3b8] sm:$0xff]
  %v4752 = vld [vmem:[%s9 + $0x3c0] sm:$0xff]
  %v4753 = vld [vmem:[%s9 + $0x3c8] sm:$0xff]
  %v4754 = vld [vmem:[%s9 + $0x3d0] sm:$0xff]
  %v4755 = vld [vmem:[%s9 + $0x3d8] sm:$0xff]
  %v4756 = vld [vmem:[%s9 + $0x3e0] sm:$0xff]
  %v4757 = vld [vmem:[%s9 + $0x3e8] sm:$0xff]
  %v4758 = vld [vmem:[%s9 + $0x3f0] sm:$0xff]
  %v4759 = vld [vmem:[%s9 + $0x3f8] sm:$0xff]
  %v4760 = vld [vmem:[%s9 + $0x400] sm:$0xff]
  %v4761 = vld [vmem:[%s9 + $0x408] sm:$0xff]
  %v4762 = vld [vmem:[%s10 + $0x43] ss:$0 sm:$0xff]
  %4763 = vmatprep.subr.mxu0 0.0
  %4764 = vmatpush1.msra.mxu0 %v4698
  %4765 = vmatprep.subr.mxu0 0.0
  %4766 = vmatpush1.msra.mxu0 %v4699
  %4767 = vmatprep.subr.mxu0 0.0
  %4768 = vmatpush1.msra.mxu0 %v4700
  %4769 = vmatprep.subr.mxu0 0.0
  %4770 = vmatpush1.msra.mxu0 %v4701
  %4771 = vmatprep.subr.mxu0 0.0
  %4772 = vmatpush1.msra.mxu0 %v4702
  %4773 = vmatprep.subr.mxu0 0.0
  %4774 = vmatpush1.msra.mxu0 %v4703
  %4775 = vmatprep.subr.mxu0 0.0
  %4776 = vmatpush1.msra.mxu0 %v4704
  %4777 = vmatprep.subr.mxu0 0.0
  %4778 = vmatpush1.msra.mxu0 %v4705
  %4779 = vmatprep.subr.mxu0 0.0
  %4780 = vmatpush1.msra.mxu0 %v4706
  %4781 = vmatprep.subr.mxu0 0.0
  %4782 = vmatpush1.msra.mxu0 %v4707
  %4783 = vmatprep.subr.mxu0 0.0
  %4784 = vmatpush1.msra.mxu0 %v4708
  %4785 = vmatprep.subr.mxu0 0.0
  %4786 = vmatpush1.msra.mxu0 %v4709
  %4787 = vmatprep.subr.mxu0 0.0
  %4788 = vmatpush1.msra.mxu0 %v4710
  %4789 = vmatprep.subr.mxu0 0.0
  %4790 = vmatpush1.msra.mxu0 %v4711
  %4791 = vmatprep.subr.mxu0 0.0
  %4792 = vmatpush1.msra.mxu0 %v4712
  %4793 = vmatprep.subr.mxu0 0.0
  %4794 = vmatpush1.msra.mxu0 %v4713
  %4795 = vmatprep.subr.mxu0 0.0
  %4796 = vmatpush1.msra.mxu0 %v4714
  %4797 = vmatprep.subr.mxu0 0.0
  %4798 = vmatpush1.msra.mxu0 %v4715
  %4799 = vmatprep.subr.mxu0 0.0
  %4800 = vmatpush1.msra.mxu0 %v4716
  %4801 = vmatprep.subr.mxu0 0.0
  %4802 = vmatpush1.msra.mxu0 %v4717
  %4803 = vmatprep.subr.mxu0 0.0
  %4804 = vmatpush1.msra.mxu0 %v4718
  %4805 = vmatprep.subr.mxu0 0.0
  %4806 = vmatpush1.msra.mxu0 %v4719
  %4807 = vmatprep.subr.mxu0 0.0
  %4808 = vmatpush1.msra.mxu0 %v4720
  %4809 = vmatprep.subr.mxu0 0.0
  %4810 = vmatpush1.msra.mxu0 %v4721
  %4811 = vmatprep.subr.mxu0 0.0
  %4812 = vmatpush1.msra.mxu0 %v4722
  %4813 = vmatprep.subr.mxu0 0.0
  %4814 = vmatpush1.msra.mxu0 %v4723
  %4815 = vmatprep.subr.mxu0 0.0
  %4816 = vmatpush1.msra.mxu0 %v4724
  %4817 = vmatprep.subr.mxu0 0.0
  %4818 = vmatpush1.msra.mxu0 %v4725
  %4819 = vmatprep.subr.mxu0 0.0
  %4820 = vmatpush1.msra.mxu0 %v4726
  %4821 = vmatprep.subr.mxu0 0.0
  %4822 = vmatpush1.msra.mxu0 %v4727
  %4823 = vmatprep.subr.mxu0 0.0
  %4824 = vmatpush1.msra.mxu0 %v4728
  %4825 = vmatprep.subr.mxu0 0.0
  %4826 = vmatpush1.msra.mxu0 %v4729
  %4827 = vmatprep.mubr.f32.mxu0 %v4691
  %4828 = vmatmul.mubr.f32.gmra.mrb[0].mxu0 %v4690
  %v4829 = vpop.f32.mrb[0].mxu0
  %v4830 = vadd.f32 %v4762, %v4829
  %v4831 = vpop.f32.mrb[0].mxu0
  %4832 = vmatprep.mubr.f32.mxu0 %v4695
  %4833 = vmatmul.mubr.f32.gmra.mrb[0].mxu0 %v4694
  %v4834 = vpop.f32.mrb[0].mxu0
  %v4835 = vadd.f32 %v4762, %v4834
  %v4836 = vpop.f32.mrb[0].mxu0
  %4837 = vdwg.mxu0
  %4838 = vmatprep.subr.mxu0 0.0
  %4839 = vmatpush1.msra.mxu0 %v4730
  %4840 = vmatprep.subr.mxu0 0.0
  %4841 = vmatpush1.msra.mxu0 %v4731
  %4842 = vmatprep.subr.mxu0 0.0
  %4843 = vmatpush1.msra.mxu0 %v4732
  %4844 = vmatprep.subr.mxu0 0.0
  %4845 = vmatpush1.msra.mxu0 %v4733
  %4846 = vmatprep.subr.mxu0 0.0
  %4847 = vmatpush1.msra.mxu0 %v4734
  %4848 = vmatprep.subr.mxu0 0.0
  %4849 = vmatpush1.msra.mxu0 %v4735
  %4850 = vmatprep.subr.mxu0 0.0
  %4851 = vmatpush1.msra.mxu0 %v4736
  %4852 = vmatprep.subr.mxu0 0.0
  %4853 = vmatpush1.msra.mxu0 %v4737
  %4854 = vmatprep.subr.mxu0 0.0
  %4855 = vmatpush1.msra.mxu0 %v4738
  %4856 = vmatprep.subr.mxu0 0.0
  %4857 = vmatpush1.msra.mxu0 %v4739
  %4858 = vmatprep.subr.mxu0 0.0
  %4859 = vmatpush1.msra.mxu0 %v4740
  %4860 = vmatprep.subr.mxu0 0.0
  %4861 = vmatpush1.msra.mxu0 %v4741
  %4862 = vmatprep.subr.mxu0 0.0
  %4863 = vmatpush1.msra.mxu0 %v4742
  %4864 = vmatprep.subr.mxu0 0.0
  %4865 = vmatpush1.msra.mxu0 %v4743
  %4866 = vmatprep.subr.mxu0 0.0
  %4867 = vmatpush1.msra.mxu0 %v4744
  %4868 = vmatprep.subr.mxu0 0.0
  %4869 = vmatpush1.msra.mxu0 %v4745
  %4870 = vmatprep.subr.mxu0 0.0
  %4871 = vmatpush1.msra.mxu0 %v4746
  %4872 = vmatprep.subr.mxu0 0.0
  %4873 = vmatpush1.msra.mxu0 %v4747
  %4874 = vmatprep.subr.mxu0 0.0
  %4875 = vmatpush1.msra.mxu0 %v4748
  %4876 = vmatprep.subr.mxu0 0.0
  %4877 = vmatpush1.msra.mxu0 %v4749
  %4878 = vmatprep.subr.mxu0 0.0
  %4879 = vmatpush1.msra.mxu0 %v4750
  %4880 = vmatprep.subr.mxu0 0.0
  %4881 = vmatpush1.msra.mxu0 %v4751
  %4882 = vmatprep.subr.mxu0 0.0
  %4883 = vmatpush1.msra.mxu0 %v4752
  %4884 = vmatprep.subr.mxu0 0.0
  %4885 = vmatpush1.msra.mxu0 %v4753
  %4886 = vmatprep.subr.mxu0 0.0
  %4887 = vmatpush1.msra.mxu0 %v4754
  %4888 = vmatprep.subr.mxu0 0.0
  %4889 = vmatpush1.msra.mxu0 %v4755
  %4890 = vmatprep.subr.mxu0 0.0
  %4891 = vmatpush1.msra.mxu0 %v4756
  %4892 = vmatprep.subr.mxu0 0.0
  %4893 = vmatpush1.msra.mxu0 %v4757
  %4894 = vmatprep.subr.mxu0 0.0
  %4895 = vmatpush1.msra.mxu0 %v4758
  %4896 = vmatprep.subr.mxu0 0.0
  %4897 = vmatpush1.msra.mxu0 %v4759
  %4898 = vmatprep.subr.mxu0 0.0
  %4899 = vmatpush1.msra.mxu0 %v4760
  %4900 = vmatprep.subr.mxu0 0.0
  %4901 = vmatpush1.msra.mxu0 %v4761
  %4902 = vmatprep.mubr.f32.mxu0 %v4693
  %4903 = vmatmul.mubr.f32.gmra.mrb[0].mxu0 %v4692
  %v4904 = vpop.f32.mrb[0].mxu0
  %v4905 = vadd.f32 %v4830, %v4904
  %v4906 = vpop.f32.mrb[0].mxu0
  %4907 = vmatprep.mubr.f32.mxu0 %v4697
  %4908 = vmatmul.mubr.f32.gmra.mrb[0].mxu0 %v4696
  %v4909 = vpop.f32.mrb[0].mxu0
  %v4910 = vadd.f32 %v4835, %v4909
  %v4911 = vpop.f32.mrb[0].mxu0
  %4912 = vdwg.mxu0
  %v4913 = vadd.f32 %v4489, %v4905
  %v4914 = vadd.f32 %v4490, %v4910
  %v4915 = vsel %vm258, %v4913, 0.0
  %4916 = vadd.xlane.f32.xlu0 %v4915
  %v4917 = vpop.xlane.xlu0 %4916
  %v4918 = vsel %vm258, %v4914, 0.0
  %4919 = vadd.xlane.f32.xlu0 %v4918
  %v4920 = vpop.xlane.xlu0 %4919
  %v4921 = vmul.f32 %v4917, %v1585
  %v4922 = vmul.f32 %v4920, %v1585
  %v4923 = vsub.f32 %v4913, %v4921
  %v4924 = vsub.f32 %v4914, %v4922
  %v4925 = vmul.f32 %v4923, %v4923
  %v4926 = vmul.f32 %v4924, %v4924
  %v4927 = vsel %vm258, %v4925, 0.0
  %4928 = vadd.xlane.f32.xlu0 %v4927
  %v4929 = vpop.xlane.xlu0 %4928
  %v4930 = vsel %vm258, %v4926, 0.0
  %4931 = vadd.xlane.f32.xlu0 %v4930
  %v4932 = vpop.xlane.xlu0 %4931
  %v4933 = vmul.f32 %v4929, %v1585
  %v4934 = vmul.f32 %v4932, %v1585
  %v4935 = vadd.f32 %v4933, 1e-05
  %v4936 = vadd.f32 %v4934, 1e-05
  %v4937 = vrsqrt.pop %v4935
  %v4938 = vrsqrt.pop %v4936
  %v4939 = vmul.f32 %v4923, %v4937
  %v4940 = vmul.f32 %v4924, %v4938
  %v4941 = vld [vmem:[%s10 + $0x60] ss:$0 sm:$0xff]
  %v4942 = vmul.f32 %v4939, %v4941
  %v4943 = vmul.f32 %v4940, %v4941
  %v4944 = vld [vmem:[%s10 + $0x61] ss:$0 sm:$0xff]
  %v4945 = vadd.f32 %v4942, %v4944
  %v4946 = vadd.f32 %v4943, %v4944
  %v4947 = vsel %vm258, %v4945, 0.0
  %4948 = vadd.xlane.f32.xlu0 %v4947
  %v4949 = vpop.xlane.xlu0 %4948
  %v4950 = vsel %vm258, %v4946, 0.0
  %4951 = vadd.xlane.f32.xlu0 %v4950
  %v4952 = vpop.xlane.xlu0 %4951
  %v4953 = vmul.f32 %v4949, %v1585
  %v4954 = vmul.f32 %v4952, %v1585
  %v4955 = vsub.f32 %v4945, %v4953
  %v4956 = vsub.f32 %v4946, %v4954
  %v4957 = vmul.f32 %v4955, %v4955
  %v4958 = vmul.f32 %v4956, %v4956
  %v4959 = vsel %vm258, %v4957, 0.0
  %4960 = vadd.xlane.f32.xlu0 %v4959
  %v4961 = vpop.xlane.xlu0 %4960
  %v4962 = vsel %vm258, %v4958, 0.0
  %4963 = vadd.xlane.f32.xlu0 %v4962
  %v4964 = vpop.xlane.xlu0 %4963
  %v4965 = vmul.f32 %v4961, %v1585
  %v4966 = vmul.f32 %v4964, %v1585
  %v4967 = vadd.f32 %v4965, 1e-05
  %v4968 = vadd.f32 %v4966, 1e-05
  %v4969 = vrsqrt.pop %v4967
  %v4970 = vrsqrt.pop %v4968
  %v4971 = vmul.f32 %v4955, %v4969
  %v4972 = vmul.f32 %v4956, %v4970
  %v4973 = vld [vmem:[%s10 + $0x62] ss:$0 sm:$0xff]
  %v4974 = vmul.f32 %v4971, %v4973
  %v4975 = vmul.f32 %v4972, %v4973
  %v4976 = vld [vmem:[%s10 + $0x63] ss:$0 sm:$0xff]
  %v4977 = vadd.f32 %v4974, %v4976
  %v4978 = vadd.f32 %v4975, %v4976
  %v4979 = vld [vmem:[%s8 + $0xa0] sm:$0xff]
  %v4980 = vld [vmem:[%s8 + $0x148] sm:$0xff]
  %v4981 = vld [vmem:[%s8 + $0x1f0] sm:$0xff]
  %v4982 = vld [vmem:[%s8 + $0x298] sm:$0xff]
  %v4983 = vld [vmem:[%s10 + $0x80] ss:$0 sm:$0xff]
  %v4985 = vsel %vm258, %v4977, 0
  %v4988 = vsel %vm258, %v4978, 0
  %4990 = vmatprep.subr.mxu0 0.0
  %4991 = vmatpush1.msra.mxu0 %v4979
  %4992 = vmatprep.subr.mxu0 0.0
  %4993 = vmatpush1.msra.mxu0 %v4980
  %4994 = vmatprep.subr.mxu0 0.0
  %4995 = vmatpush1.msra.mxu0 %v4981
  %4996 = vmatprep.subr.mxu0 0.0
  %4997 = vmatpush1.msra.mxu0 %v4982
  %4998 = vmatprep.subr.mxu0 0.0
  %4999 = vmatpush1.msra.mxu0 0.0
  %5000 = vmatprep.subr.mxu0 0.0
  %5001 = vmatpush1.msra.mxu0 0.0
  %5002 = vmatprep.subr.mxu0 0.0
  %5003 = vmatpush1.msra.mxu0 0.0
  %5004 = vmatprep.subr.mxu0 0.0
  %5005 = vmatpush1.msra.mxu0 0.0
  %5006 = vmatprep.subr.mxu0 0.0
  %5007 = vmatpush1.msra.mxu0 0.0
  %5008 = vmatprep.subr.mxu0 0.0
  %5009 = vmatpush1.msra.mxu0 0.0
  %5010 = vmatprep.subr.mxu0 0.0
  %5011 = vmatpush1.msra.mxu0 0.0
  %5012 = vmatprep.subr.mxu0 0.0
  %5013 = vmatpush1.msra.mxu0 0.0
  %5014 = vmatprep.subr.mxu0 0.0
  %5015 = vmatpush1.msra.mxu0 0.0
  %5016 = vmatprep.subr.mxu0 0.0
  %5017 = vmatpush1.msra.mxu0 0.0
  %5018 = vmatprep.subr.mxu0 0.0
  %5019 = vmatpush1.msra.mxu0 0.0
  %5020 = vmatprep.subr.mxu0 0.0
  %5021 = vmatpush1.msra.mxu0 0.0
  %5022 = vmatprep.subr.mxu0 0.0
  %5023 = vmatpush1.msra.mxu0 0.0
  %5024 = vmatprep.subr.mxu0 0.0
  %5025 = vmatpush1.msra.mxu0 0.0
  %5026 = vmatprep.subr.mxu0 0.0
  %5027 = vmatpush1.msra.mxu0 0.0
  %5028 = vmatprep.subr.mxu0 0.0
  %5029 = vmatpush1.msra.mxu0 0.0
  %5030 = vmatprep.subr.mxu0 0.0
  %5031 = vmatpush1.msra.mxu0 0.0
  %5032 = vmatprep.subr.mxu0 0.0
  %5033 = vmatpush1.msra.mxu0 0.0
  %5034 = vmatprep.subr.mxu0 0.0
  %5035 = vmatpush1.msra.mxu0 0.0
  %5036 = vmatprep.subr.mxu0 0.0
  %5037 = vmatpush1.msra.mxu0 0.0
  %5038 = vmatprep.subr.mxu0 0.0
  %5039 = vmatpush1.msra.mxu0 0.0
  %5040 = vmatprep.subr.mxu0 0.0
  %5041 = vmatpush1.msra.mxu0 0.0
  %5042 = vmatprep.subr.mxu0 0.0
  %5043 = vmatpush1.msra.mxu0 0.0
  %5044 = vmatprep.subr.mxu0 0.0
  %5045 = vmatpush1.msra.mxu0 0.0
  %5046 = vmatprep.subr.mxu0 0.0
  %5047 = vmatpush1.msra.mxu0 0.0
  %5048 = vmatprep.subr.mxu0 0.0
  %5049 = vmatpush1.msra.mxu0 0.0
  %5050 = vmatprep.subr.mxu0 0.0
  %5051 = vmatpush1.msra.mxu0 0.0
  %5052 = vmatprep.subr.mxu0 0.0
  %5053 = vmatpush1.msra.mxu0 0.0
  %5054 = vmatprep.mubr.f32.mxu0 0.0
  %5055 = vmatmul.mubr.f32.gmra.mrb[0].mxu0 %v4985
  %v5056 = vpop.f32.mrb[0].mxu0
  %v5057 = vadd.f32 %v4983, %v5056
  %v5058 = vpop.f32.mrb[0].mxu0
  %5059 = vmatprep.mubr.f32.mxu0 0.0
  %5060 = vmatmul.mubr.f32.gmra.mrb[0].mxu0 %v4988
  %v5061 = vpop.f32.mrb[0].mxu0
  %v5062 = vadd.f32 %v4983, %v5061
  %v5063 = vpop.f32.mrb[0].mxu0
  %5064 = vdwg.mxu0
  %5065 = vst.msk [vmem:[%s11] sm:$0xff] %vm158, %v5057
  %5066 = vst.msk [vmem:[%s11 + $0x8] sm:$0xff] %vm158, %v5062
  // Predicated region
  $region46: #{tpu_custom_call.1} parent=0 // pred_check
    _
  $region47: #{tpu_custom_call.1} parent=0 // pred_check_branch
    %5068 = sbr.rel (0) target = $region49
  $region48: #{tpu_custom_call.1} parent=0 // pred_region
    _
  $region49: #{tpu_custom_call.1} parent=0 // pred_fallthru
    _
  // Predicated region
  $region50: #{tpu_custom_call.1} parent=0 // pred_check
    _
  $region51: #{tpu_custom_call.1} parent=0 // pred_check_branch
    %5070 = sbr.rel (0) target = $region53
  $region52: #{tpu_custom_call.1} parent=0 // pred_region
    _
  $region53: #{tpu_custom_call.1} parent=0 // pred_fallthru
    _

</llo_original>
